<compile_context>
chip_gen: v5e
topology: v5e:2x2
jax: 0.10.0
libtpu: 0.0.40
codegen_flags: <defaults>
</compile_context>

<pallas_src>
import functools

import jax
import jax.numpy as jnp
from jax.experimental import pallas as pl
from jax.experimental.pallas import tpu as pltpu

IN_FEATURES = 1792          # 14 * 128 -> already lane-aligned
OUT_FEATURES = 1000
OUT_PADDED = 1024           # next multiple of 128 -> unmasked lane-dense stores


def _num_tensorcores_per_chip() -> int:
    """v7x has 2 TensorCores per chip; v5e/v6e have 1."""
    try:
        kind = jax.devices()[0].device_kind.lower()
    except Exception:  # pragma: no cover - defensive, e.g. no devices yet
        return 1
    return 2 if "v7" in kind else 1


def _linear_kernel(x_ref, w_ref, b_ref, o_ref):
    # x_ref: [B, K] f32      (dropout in eval mode == identity)
    # w_ref: [K, TILE_N] bf16 (canonical [K, N] MXU feed layout, no transpose)
    # b_ref: [1, TILE_N] f32
    # o_ref: [B, TILE_N] f32
    x = x_ref[...].astype(jnp.bfloat16)   # tiny in-kernel cast, hidden by DMA
    acc = jnp.dot(x, w_ref[...], preferred_element_type=jnp.float32)
    o_ref[...] = (acc + b_ref[...]).astype(o_ref.dtype)


def prepare_params(weight, bias):
    """One-time parameter prep (init-time, NOT per call).

    weight: [out, in] torch Linear layout, f32.
    Returns ([K, N_padded] bf16 weight, [1, N_padded] f32 bias).
    """
    w_kn = jnp.zeros((IN_FEATURES, OUT_PADDED), dtype=jnp.bfloat16)
    w_kn = w_kn.at[:, :OUT_FEATURES].set(weight.astype(jnp.bfloat16).T)
    b_pad = jnp.zeros((1, OUT_PADDED), dtype=jnp.float32)
    b_pad = b_pad.at[:, :OUT_FEATURES].set(bias.astype(jnp.float32))
    return w_kn, b_pad


@functools.partial(jax.jit, static_argnames=("tile_n",))
def _forward(x_nchw, w_kn, b_pad, *, tile_n):
    B = x_nchw.shape[0]
    x = x_nchw.reshape(B, IN_FEATURES)            # metadata-only flatten (f32)

    grid = (OUT_PADDED // tile_n,)
    cost = pl.CostEstimate(
        flops=2 * B * IN_FEATURES * OUT_PADDED,
        transcendentals=0,
        bytes_accessed=(IN_FEATURES * OUT_PADDED * 2      # bf16 weight
                        + B * IN_FEATURES * 4              # f32 x
                        + B * OUT_PADDED * 4                # f32 out
                        + OUT_PADDED * 4))                  # f32 bias

    out_padded = pl.pallas_call(
        _linear_kernel,
        out_shape=jax.ShapeDtypeStruct((B, OUT_PADDED), jnp.float32),
        grid=grid,
        in_specs=[
            pl.BlockSpec((B, IN_FEATURES), lambda j: (0, 0)),        # x resident
            pl.BlockSpec((IN_FEATURES, tile_n), lambda j: (0, j)),   # weight tile
            pl.BlockSpec((1, tile_n), lambda j: (0, j)),             # bias tile
        ],
        out_specs=pl.BlockSpec((B, tile_n), lambda j: (0, j)),
        compiler_params=pltpu.CompilerParams(
            dimension_semantics=("parallel",)),   # shards tiles across TCs on v7x
        cost_estimate=cost,
    )(x, w_kn, b_pad)
    return out_padded[:, :OUT_FEATURES]


def flatten_dropout_linear(x_nchw, w_kn, b_pad):
    """x_nchw: [B, 1792, 1, 1] f32. Returns [B, 1000] f32."""
    # Single-TC chips (v5e/v6e): one big weight DMA, grid=1 (no per-step
    # overhead). Dual-TC (v7x): two 512-wide tiles, one per TensorCore.
    tile_n = OUT_PADDED // 2 if _num_tensorcores_per_chip() == 2 else OUT_PADDED
    return _forward(x_nchw, w_kn, b_pad, tile_n=tile_n)


if __name__ == "__main__":
    key = jax.random.PRNGKey(0)
    kx, kw, kb = jax.random.split(key, 3)

    # Input matching the module's forward: [1, 1792, 1, 1]
    x499 = jax.random.normal(kx, (1, IN_FEATURES, 1, 1), dtype=jnp.float32)

    # Deterministic synthetic parameters (torch Linear layout: [out, in], [out]).
    bound = 1.0 / (IN_FEATURES ** 0.5)
    weight = jax.random.uniform(
        kw, (OUT_FEATURES, IN_FEATURES), minval=-bound, maxval=bound,
        dtype=jnp.float32)
    bias = jax.random.uniform(
        kb, (OUT_FEATURES,), minval=-bound, maxval=bound, dtype=jnp.float32)

    w_kn, b_pad = prepare_params(weight, bias)          # once, at init

    out = flatten_dropout_linear(x499, w_kn, b_pad)
    jax.block_until_ready(out)
    assert out.shape == (1, OUT_FEATURES)

    # Reference at matching precision (bf16 operands, f32 accumulation).
    x_flat = x499.reshape(1, -1)
    ref_bf16 = (x_flat.astype(jnp.bfloat16).astype(jnp.float32)
                @ weight.astype(jnp.bfloat16).astype(jnp.float32).T) + bias
    assert jnp.allclose(out, ref_bf16, atol=1e-3, rtol=1e-3)

    # Looser check against full-f32 math (bf16 weight quantization error).
    ref_f32 = x_flat @ weight.T + bias
    assert jnp.allclose(out, ref_f32, atol=5e-2, rtol=5e-2)

    print("KERNEL_OK")
</pallas_src>

<mosaic_0001>
module attributes {stable_mosaic.version = 11 : i64} {
  func.func @_linear_kernel(%arg0: i32, %arg1: memref<1x1792xf32, #tpu.memory_space<vmem>>, %arg2: memref<1792x1024xbf16, #tpu.memory_space<vmem>>, %arg3: memref<1x1024xf32, #tpu.memory_space<vmem>>, %arg4: memref<1x1024xf32, #tpu.memory_space<vmem>>) attributes {dimension_semantics = [#tpu.dimension_semantics<parallel>], iteration_bounds = array<i64: 1>, scalar_prefetch = 0 : i64, scratch_operands = 0 : i64, tpu.core_type = #tpu.core_type<tc>, window_params = [{pipeline_mode = #tpu.pipeline_mode<synchronous>, transform_indices = @transform_0, window_bounds = array<i64: 1, 1792>}, {transform_indices = @transform_1, window_bounds = array<i64: 1792, 1024>}, {transform_indices = @transform_2, window_bounds = array<i64: 1, 1024>}, {transform_indices = @transform_3, window_bounds = array<i64: 1, 1024>}]} {
    %c0 = arith.constant 0 : index
    %c0_0 = arith.constant 0 : index
    %0 = vector.load %arg1[%c0, %c0_0] : memref<1x1792xf32, #tpu.memory_space<vmem>>, vector<1x1792xf32>
    %1 = arith.truncf %0 : vector<1x1792xf32> to vector<1x1792xbf16>
    %c0_1 = arith.constant 0 : index
    %c0_2 = arith.constant 0 : index
    %2 = vector.load %arg2[%c0_1, %c0_2] : memref<1792x1024xbf16, #tpu.memory_space<vmem>>, vector<1792x1024xbf16>
    %cst = arith.constant dense<0.000000e+00> : vector<1x1024xf32>
    %3 = tpu.matmul %1, %2, %cst {dimension_numbers = #tpu.dot_dimension_numbers<[1], [0], [0], [1], [0, 0, 1, 1], [], []>} : vector<1x1792xbf16>, vector<1792x1024xbf16>, vector<1x1024xf32> -> vector<1x1024xf32>
    %c0_3 = arith.constant 0 : index
    %c0_4 = arith.constant 0 : index
    %4 = vector.load %arg3[%c0_3, %c0_4] : memref<1x1024xf32, #tpu.memory_space<vmem>>, vector<1x1024xf32>
    %5 = arith.addf %3, %4 : vector<1x1024xf32>
    %c0_5 = arith.constant 0 : index
    %c0_6 = arith.constant 0 : index
    %6 = vector.load %arg4[%c0_5, %c0_6] : memref<1x1024xf32, #tpu.memory_space<vmem>>, vector<1x1024xf32>
    tpu.vector_store %arg4[%c0_5, %c0_6], %5 {strides = array<i32>} : memref<1x1024xf32, #tpu.memory_space<vmem>>, vector<1x1024xf32>,
    return
  }
  func.func @transform_0(%arg0: i32) -> (i32, i32) {
    %c0_i32 = arith.constant 0 : i32
    %c0_i32_0 = arith.constant 0 : i32
    %c0_i32_1 = arith.constant 0 : i32
    return %c0_i32, %c0_i32_0 : i32, i32
  }
  func.func @transform_1(%arg0: i32) -> (i32, i32) {
    %c0_i32 = arith.constant 0 : i32
    %c0_i32_0 = arith.constant 0 : i32
    return %c0_i32, %arg0 : i32, i32
  }
  func.func @transform_2(%arg0: i32) -> (i32, i32) {
    %c0_i32 = arith.constant 0 : i32
    %c0_i32_0 = arith.constant 0 : i32
    return %c0_i32, %arg0 : i32, i32
  }
  func.func @transform_3(%arg0: i32) -> (i32, i32) {
    %c0_i32 = arith.constant 0 : i32
    %c0_i32_0 = arith.constant 0 : i32
    return %c0_i32, %arg0 : i32, i32
  }
}

</mosaic_0001>

<llo_original>
// kernel: _forward.1
$region0: #{_forward.1}
  #allocation0 [shape = 'u32[]', space=smem, size = 0x4, offset = 0x4, fixed_abs, tag = 'smem constant byte address 0x4 - core index']
  #allocation1 [shape = 'u32[72,128]{1,0:T(1,128)}', space=vmem, size = 0x9000, scoped, tag = 'internal scratch']
  %s0 = inlined_call_operand.hbm [shape: f32[1,1792], index: 0, kind: input, shape index: {}]
  %s1 = inlined_call_operand.hbm [shape: bf16[1792,1024], index: 1, kind: input, shape index: {}]
  %s2 = inlined_call_operand.hbm [shape: f32[1,1024], index: 2, kind: input, shape index: {}]
  %s3 = inlined_call_operand.hbm [shape: f32[1,1024], index: 3, kind: output, shape index: {}]
  %s4 = sld [smem:[#allocation0]]
  $region34: #{_forward.1} parent=0
    _
  %s6 = ssub.s32 1, %s4
  %s7 = scalar_select 0, %s6, %s4
  $region1: #{_forward.1} parent=0
    #allocation2 [shape = 'u8[7168]{0}', space=vmem, size = 0x1c00, scoped, tag = 'input window, operand 0, single buffered']
    #allocation3 [shape = 's32[1]{0}', space=sflag, size = 0x4, scoped, tag = 'scoped memory for _forward.1']
    #allocation4 [shape = 's32[1]{0}', space=sflag, size = 0x4, scoped, tag = 'scoped memory for _forward.1']
    #allocation5 [shape = 'u8[3670016]{0}', space=vmem, size = 0x380000, scoped, tag = 'input window, operand 1, single buffered']
    #allocation6 [shape = 's32[1]{0}', space=sflag, size = 0x4, scoped, tag = 'scoped memory for _forward.1']
    #allocation7 [shape = 'u8[4096]{0}', space=vmem, size = 0x1000, scoped, tag = 'input window, operand 2, single buffered']
    #allocation8 [shape = 'u8[4096]{0}', space=vmem, size = 0x1000, scoped, tag = 'output window, operand 0, single buffered']
    %8 = vsyncpa [#allocation3], 0
    %9 = vsyncpa [#allocation6], 0
    %10 = vsyncpa [#allocation4], 0
    // Predicated region
    $region2: #{_forward.1} parent=1 // pred_check
      _
    $region3: #{_forward.1} parent=1 // pred_check_branch
      %12 = sbr.rel (0) target = $region5
    $region4: #{_forward.1} parent=1 // pred_region
      %14 = vsyncadd [#allocation3], 0
      %s16 = sshll.u32 %s0, 4
      %s17 = int_to_ptr.hbm [resolvable:$true] %s16
      %s18 = sshll.u32 [#allocation2], 4
      %s19 = int_to_ptr.vmem [resolvable:$true] %s18
      %21 = dma.hbm_to_vmem [thread:$0]  %s17, 224, %s19, [#allocation3]
    $region5: #{_forward.1} parent=1 // pred_fallthru
      _
    // Predicated region
    $region6: #{_forward.1} parent=1 // pred_check
      _
    $region7: #{_forward.1} parent=1 // pred_check_branch
      %23 = sbr.rel (0) target = $region9
    $region8: #{_forward.1} parent=1 // pred_region
      %25 = vsyncadd [#allocation6], 0
      %s26 = sshll.u32 %s1, 4
      %s27 = int_to_ptr.hbm [resolvable:$true] %s26
      %s28 = sshll.u32 [#allocation5], 4
      %s29 = int_to_ptr.vmem [resolvable:$true] %s28
      %34 = dma.hbm_to_vmem [thread:$0]  %s27, 114688, %s29, [#allocation6], 512, 512, 32
    $region9: #{_forward.1} parent=1 // pred_fallthru
      _
    // Predicated region
    $region10: #{_forward.1} parent=1 // pred_check
      _
    $region11: #{_forward.1} parent=1 // pred_check_branch
      %36 = sbr.rel (0) target = $region13
    $region12: #{_forward.1} parent=1 // pred_region
      %38 = vsyncadd [#allocation6], 0
      %s40 = sshll.u32 %s2, 4
      %s41 = int_to_ptr.hbm [resolvable:$true] %s40
      %s42 = sshll.u32 [#allocation7], 4
      %s43 = int_to_ptr.vmem [resolvable:$true] %s42
      %45 = dma.hbm_to_vmem [thread:$0]  %s41, 128, %s43, [#allocation6]
    $region13: #{_forward.1} parent=1 // pred_fallthru
      _
    // Predicated region
    $region14: #{_forward.1} parent=1 // pred_check
      _
    $region15: #{_forward.1} parent=1 // pred_check_branch
      %47 = sbr.rel (0) target = $region17
    $region16: #{_forward.1} parent=1 // pred_region
      %49 = dma.done [#allocation3], 224
    $region17: #{_forward.1} parent=1 // pred_fallthru
      _
    // Predicated region
    $region18: #{_forward.1} parent=1 // pred_check
      _
    $region19: #{_forward.1} parent=1 // pred_check_branch
      %51 = sbr.rel (0) target = $region21
    $region20: #{_forward.1} parent=1 // pred_region
      %53 = dma.done [#allocation6], 114688
    $region21: #{_forward.1} parent=1 // pred_fallthru
      _
    // Predicated region
    $region22: #{_forward.1} parent=1 // pred_check
      _
    $region23: #{_forward.1} parent=1 // pred_check_branch
      %55 = sbr.rel (0) target = $region25
    $region24: #{_forward.1} parent=1 // pred_region
      %57 = dma.done [#allocation6], 128
    $region25: #{_forward.1} parent=1 // pred_fallthru
      _
    %v58 = vld [vmem:[#allocation2] sm:$0xff]
    %v59 = vld [vmem:[#allocation2 + $0x8] sm:$0x3f]
    %v62 = vperm.slane %v58, 0
    %v63 = vperm.slane %v58, 1
    %v64 = vperm.slane %v58, 2
    %v65 = vperm.slane %v58, 3
    %v66 = vperm.slane %v58, 4
    %v67 = vperm.slane %v58, 5
    %v68 = vperm.slane %v58, 6
    %v69 = vperm.slane %v58, 7
    %v70 = vperm.slane %v59, 0
    %v71 = vperm.slane %v59, 1
    %v72 = vperm.slane %v59, 2
    %v73 = vperm.slane %v59, 3
    %v74 = vperm.slane %v59, 4
    %v75 = vperm.slane %v59, 5
    %v90 = vpack.c.bf16 %v62, %v62
    %v91 = vpack.c.bf16 %v63, %v63
    %v92 = vpack.c.bf16 %v64, %v64
    %v93 = vpack.c.bf16 %v65, %v65
    %v94 = vpack.c.bf16 %v66, %v66
    %v95 = vpack.c.bf16 %v67, %v67
    %v96 = vpack.c.bf16 %v68, %v68
    %v97 = vpack.c.bf16 %v69, %v69
    %v98 = vpack.c.bf16 %v70, %v70
    %v99 = vpack.c.bf16 %v71, %v71
    %v100 = vpack.c.bf16 %v72, %v72
    %v101 = vpack.c.bf16 %v73, %v73
    %v102 = vpack.c.bf16 %v74, %v74
    %v103 = vpack.c.bf16 %v75, %v75
    %v104 = vld [vmem:[#allocation5] sm:$0xff]
    %v105 = vld [vmem:[#allocation5 + $0x8] sm:$0xff]
    %v106 = vld [vmem:[#allocation5 + $0x10] sm:$0xff]
    %v107 = vld [vmem:[#allocation5 + $0x18] sm:$0xff]
    %v108 = vld [vmem:[#allocation5 + $0x20] sm:$0xff]
    %v109 = vld [vmem:[#allocation5 + $0x28] sm:$0xff]
    %v110 = vld [vmem:[#allocation5 + $0x30] sm:$0xff]
    %v111 = vld [vmem:[#allocation5 + $0x38] sm:$0xff]
    %v112 = vld [vmem:[#allocation5 + $0x40] sm:$0xff]
    %v113 = vld [vmem:[#allocation5 + $0x48] sm:$0xff]
    %v114 = vld [vmem:[#allocation5 + $0x50] sm:$0xff]
    %v115 = vld [vmem:[#allocation5 + $0x58] sm:$0xff]
    %v116 = vld [vmem:[#allocation5 + $0x60] sm:$0xff]
    %v117 = vld [vmem:[#allocation5 + $0x68] sm:$0xff]
    %v118 = vld [vmem:[#allocation5 + $0x70] sm:$0xff]
    %v119 = vld [vmem:[#allocation5 + $0x78] sm:$0xff]
    %v120 = vld [vmem:[#allocation5 + $0x80] sm:$0xff]
    %v121 = vld [vmem:[#allocation5 + $0x88] sm:$0xff]
    %v122 = vld [vmem:[#allocation5 + $0x90] sm:$0xff]
    %v123 = vld [vmem:[#allocation5 + $0x98] sm:$0xff]
    %v124 = vld [vmem:[#allocation5 + $0xa0] sm:$0xff]
    %v125 = vld [vmem:[#allocation5 + $0xa8] sm:$0xff]
    %v126 = vld [vmem:[#allocation5 + $0xb0] sm:$0xff]
    %v127 = vld [vmem:[#allocation5 + $0xb8] sm:$0xff]
    %v128 = vld [vmem:[#allocation5 + $0xc0] sm:$0xff]
    %v129 = vld [vmem:[#allocation5 + $0xc8] sm:$0xff]
    %v130 = vld [vmem:[#allocation5 + $0xd0] sm:$0xff]
    %v131 = vld [vmem:[#allocation5 + $0xd8] sm:$0xff]
    %v132 = vld [vmem:[#allocation5 + $0xe0] sm:$0xff]
    %v133 = vld [vmem:[#allocation5 + $0xe8] sm:$0xff]
    %v134 = vld [vmem:[#allocation5 + $0xf0] sm:$0xff]
    %v135 = vld [vmem:[#allocation5 + $0xf8] sm:$0xff]
    %v136 = vld [vmem:[#allocation5 + $0x100] sm:$0xff]
    %v137 = vld [vmem:[#allocation5 + $0x108] sm:$0xff]
    %v138 = vld [vmem:[#allocation5 + $0x110] sm:$0xff]
    %v139 = vld [vmem:[#allocation5 + $0x118] sm:$0xff]
    %v140 = vld [vmem:[#allocation5 + $0x120] sm:$0xff]
    %v141 = vld [vmem:[#allocation5 + $0x128] sm:$0xff]
    %v142 = vld [vmem:[#allocation5 + $0x130] sm:$0xff]
    %v143 = vld [vmem:[#allocation5 + $0x138] sm:$0xff]
    %v144 = vld [vmem:[#allocation5 + $0x140] sm:$0xff]
    %v145 = vld [vmem:[#allocation5 + $0x148] sm:$0xff]
    %v146 = vld [vmem:[#allocation5 + $0x150] sm:$0xff]
    %v147 = vld [vmem:[#allocation5 + $0x158] sm:$0xff]
    %v148 = vld [vmem:[#allocation5 + $0x160] sm:$0xff]
    %v149 = vld [vmem:[#allocation5 + $0x168] sm:$0xff]
    %v150 = vld [vmem:[#allocation5 + $0x170] sm:$0xff]
    %v151 = vld [vmem:[#allocation5 + $0x178] sm:$0xff]
    %v152 = vld [vmem:[#allocation5 + $0x180] sm:$0xff]
    %v153 = vld [vmem:[#allocation5 + $0x188] sm:$0xff]
    %v154 = vld [vmem:[#allocation5 + $0x190] sm:$0xff]
    %v155 = vld [vmem:[#allocation5 + $0x198] sm:$0xff]
    %v156 = vld [vmem:[#allocation5 + $0x1a0] sm:$0xff]
    %v157 = vld [vmem:[#allocation5 + $0x1a8] sm:$0xff]
    %v158 = vld [vmem:[#allocation5 + $0x1b0] sm:$0xff]
    %v159 = vld [vmem:[#allocation5 + $0x1b8] sm:$0xff]
    %v160 = vld [vmem:[#allocation5 + $0x1c0] sm:$0xff]
    %v161 = vld [vmem:[#allocation5 + $0x1c8] sm:$0xff]
    %v162 = vld [vmem:[#allocation5 + $0x1d0] sm:$0xff]
    %v163 = vld [vmem:[#allocation5 + $0x1d8] sm:$0xff]
    %v164 = vld [vmem:[#allocation5 + $0x1e0] sm:$0xff]
    %v165 = vld [vmem:[#allocation5 + $0x1e8] sm:$0xff]
    %v166 = vld [vmem:[#allocation5 + $0x1f0] sm:$0xff]
    %v167 = vld [vmem:[#allocation5 + $0x1f8] sm:$0xff]
    %v168 = vld [vmem:[#allocation5 + $0x200] sm:$0xff]
    %v169 = vld [vmem:[#allocation5 + $0x208] sm:$0xff]
    %v170 = vld [vmem:[#allocation5 + $0x210] sm:$0xff]
    %v171 = vld [vmem:[#allocation5 + $0x218] sm:$0xff]
    %v172 = vld [vmem:[#allocation5 + $0x220] sm:$0xff]
    %v173 = vld [vmem:[#allocation5 + $0x228] sm:$0xff]
    %v174 = vld [vmem:[#allocation5 + $0x230] sm:$0xff]
    %v175 = vld [vmem:[#allocation5 + $0x238] sm:$0xff]
    %v176 = vld [vmem:[#allocation5 + $0x240] sm:$0xff]
    %v177 = vld [vmem:[#allocation5 + $0x248] sm:$0xff]
    %v178 = vld [vmem:[#allocation5 + $0x250] sm:$0xff]
    %v179 = vld [vmem:[#allocation5 + $0x258] sm:$0xff]
    %v180 = vld [vmem:[#allocation5 + $0x260] sm:$0xff]
    %v181 = vld [vmem:[#allocation5 + $0x268] sm:$0xff]
    %v182 = vld [vmem:[#allocation5 + $0x270] sm:$0xff]
    %v183 = vld [vmem:[#allocation5 + $0x278] sm:$0xff]
    %v184 = vld [vmem:[#allocation5 + $0x280] sm:$0xff]
    %v185 = vld [vmem:[#allocation5 + $0x288] sm:$0xff]
    %v186 = vld [vmem:[#allocation5 + $0x290] sm:$0xff]
    %v187 = vld [vmem:[#allocation5 + $0x298] sm:$0xff]
    %v188 = vld [vmem:[#allocation5 + $0x2a0] sm:$0xff]
    %v189 = vld [vmem:[#allocation5 + $0x2a8] sm:$0xff]
    %v190 = vld [vmem:[#allocation5 + $0x2b0] sm:$0xff]
    %v191 = vld [vmem:[#allocation5 + $0x2b8] sm:$0xff]
    %v192 = vld [vmem:[#allocation5 + $0x2c0] sm:$0xff]
    %v193 = vld [vmem:[#allocation5 + $0x2c8] sm:$0xff]
    %v194 = vld [vmem:[#allocation5 + $0x2d0] sm:$0xff]
    %v195 = vld [vmem:[#allocation5 + $0x2d8] sm:$0xff]
    %v196 = vld [vmem:[#allocation5 + $0x2e0] sm:$0xff]
    %v197 = vld [vmem:[#allocation5 + $0x2e8] sm:$0xff]
    %v198 = vld [vmem:[#allocation5 + $0x2f0] sm:$0xff]
    %v199 = vld [vmem:[#allocation5 + $0x2f8] sm:$0xff]
    %v200 = vld [vmem:[#allocation5 + $0x300] sm:$0xff]
    %v201 = vld [vmem:[#allocation5 + $0x308] sm:$0xff]
    %v202 = vld [vmem:[#allocation5 + $0x310] sm:$0xff]
    %v203 = vld [vmem:[#allocation5 + $0x318] sm:$0xff]
    %v204 = vld [vmem:[#allocation5 + $0x320] sm:$0xff]
    %v205 = vld [vmem:[#allocation5 + $0x328] sm:$0xff]
    %v206 = vld [vmem:[#allocation5 + $0x330] sm:$0xff]
    %v207 = vld [vmem:[#allocation5 + $0x338] sm:$0xff]
    %v208 = vld [vmem:[#allocation5 + $0x340] sm:$0xff]
    %v209 = vld [vmem:[#allocation5 + $0x348] sm:$0xff]
    %v210 = vld [vmem:[#allocation5 + $0x350] sm:$0xff]
    %v211 = vld [vmem:[#allocation5 + $0x358] sm:$0xff]
    %v212 = vld [vmem:[#allocation5 + $0x360] sm:$0xff]
    %v213 = vld [vmem:[#allocation5 + $0x368] sm:$0xff]
    %v214 = vld [vmem:[#allocation5 + $0x370] sm:$0xff]
    %v215 = vld [vmem:[#allocation5 + $0x378] sm:$0xff]
    %v216 = vld [vmem:[#allocation5 + $0x380] sm:$0xff]
    %v217 = vld [vmem:[#allocation5 + $0x388] sm:$0xff]
    %v218 = vld [vmem:[#allocation5 + $0x390] sm:$0xff]
    %v219 = vld [vmem:[#allocation5 + $0x398] sm:$0xff]
    %v220 = vld [vmem:[#allocation5 + $0x3a0] sm:$0xff]
    %v221 = vld [vmem:[#allocation5 + $0x3a8] sm:$0xff]
    %v222 = vld [vmem:[#allocation5 + $0x3b0] sm:$0xff]
    %v223 = vld [vmem:[#allocation5 + $0x3b8] sm:$0xff]
    %v224 = vld [vmem:[#allocation5 + $0x3c0] sm:$0xff]
    %v225 = vld [vmem:[#allocation5 + $0x3c8] sm:$0xff]
    %v226 = vld [vmem:[#allocation5 + $0x3d0] sm:$0xff]
    %v227 = vld [vmem:[#allocation5 + $0x3d8] sm:$0xff]
    %v228 = vld [vmem:[#allocation5 + $0x3e0] sm:$0xff]
    %v229 = vld [vmem:[#allocation5 + $0x3e8] sm:$0xff]
    %v230 = vld [vmem:[#allocation5 + $0x3f0] sm:$0xff]
    %v231 = vld [vmem:[#allocation5 + $0x3f8] sm:$0xff]
    %v232 = vld [vmem:[#allocation5 + $0x400] sm:$0xff]
    %v233 = vld [vmem:[#allocation5 + $0x408] sm:$0xff]
    %v234 = vld [vmem:[#allocation5 + $0x410] sm:$0xff]
    %v235 = vld [vmem:[#allocation5 + $0x418] sm:$0xff]
    %v236 = vld [vmem:[#allocation5 + $0x420] sm:$0xff]
    %v237 = vld [vmem:[#allocation5 + $0x428] sm:$0xff]
    %v238 = vld [vmem:[#allocation5 + $0x430] sm:$0xff]
    %v239 = vld [vmem:[#allocation5 + $0x438] sm:$0xff]
    %v240 = vld [vmem:[#allocation5 + $0x440] sm:$0xff]
    %v241 = vld [vmem:[#allocation5 + $0x448] sm:$0xff]
    %v242 = vld [vmem:[#allocation5 + $0x450] sm:$0xff]
    %v243 = vld [vmem:[#allocation5 + $0x458] sm:$0xff]
    %v244 = vld [vmem:[#allocation5 + $0x460] sm:$0xff]
    %v245 = vld [vmem:[#allocation5 + $0x468] sm:$0xff]
    %v246 = vld [vmem:[#allocation5 + $0x470] sm:$0xff]
    %v247 = vld [vmem:[#allocation5 + $0x478] sm:$0xff]
    %v248 = vld [vmem:[#allocation5 + $0x480] sm:$0xff]
    %v249 = vld [vmem:[#allocation5 + $0x488] sm:$0xff]
    %v250 = vld [vmem:[#allocation5 + $0x490] sm:$0xff]
    %v251 = vld [vmem:[#allocation5 + $0x498] sm:$0xff]
    %v252 = vld [vmem:[#allocation5 + $0x4a0] sm:$0xff]
    %v253 = vld [vmem:[#allocation5 + $0x4a8] sm:$0xff]
    %v254 = vld [vmem:[#allocation5 + $0x4b0] sm:$0xff]
    %v255 = vld [vmem:[#allocation5 + $0x4b8] sm:$0xff]
    %v256 = vld [vmem:[#allocation5 + $0x4c0] sm:$0xff]
    %v257 = vld [vmem:[#allocation5 + $0x4c8] sm:$0xff]
    %v258 = vld [vmem:[#allocation5 + $0x4d0] sm:$0xff]
    %v259 = vld [vmem:[#allocation5 + $0x4d8] sm:$0xff]
    %v260 = vld [vmem:[#allocation5 + $0x4e0] sm:$0xff]
    %v261 = vld [vmem:[#allocation5 + $0x4e8] sm:$0xff]
    %v262 = vld [vmem:[#allocation5 + $0x4f0] sm:$0xff]
    %v263 = vld [vmem:[#allocation5 + $0x4f8] sm:$0xff]
    %v264 = vld [vmem:[#allocation5 + $0x500] sm:$0xff]
    %v265 = vld [vmem:[#allocation5 + $0x508] sm:$0xff]
    %v266 = vld [vmem:[#allocation5 + $0x510] sm:$0xff]
    %v267 = vld [vmem:[#allocation5 + $0x518] sm:$0xff]
    %v268 = vld [vmem:[#allocation5 + $0x520] sm:$0xff]
    %v269 = vld [vmem:[#allocation5 + $0x528] sm:$0xff]
    %v270 = vld [vmem:[#allocation5 + $0x530] sm:$0xff]
    %v271 = vld [vmem:[#allocation5 + $0x538] sm:$0xff]
    %v272 = vld [vmem:[#allocation5 + $0x540] sm:$0xff]
    %v273 = vld [vmem:[#allocation5 + $0x548] sm:$0xff]
    %v274 = vld [vmem:[#allocation5 + $0x550] sm:$0xff]
    %v275 = vld [vmem:[#allocation5 + $0x558] sm:$0xff]
    %v276 = vld [vmem:[#allocation5 + $0x560] sm:$0xff]
    %v277 = vld [vmem:[#allocation5 + $0x568] sm:$0xff]
    %v278 = vld [vmem:[#allocation5 + $0x570] sm:$0xff]
    %v279 = vld [vmem:[#allocation5 + $0x578] sm:$0xff]
    %v280 = vld [vmem:[#allocation5 + $0x580] sm:$0xff]
    %v281 = vld [vmem:[#allocation5 + $0x588] sm:$0xff]
    %v282 = vld [vmem:[#allocation5 + $0x590] sm:$0xff]
    %v283 = vld [vmem:[#allocation5 + $0x598] sm:$0xff]
    %v284 = vld [vmem:[#allocation5 + $0x5a0] sm:$0xff]
    %v285 = vld [vmem:[#allocation5 + $0x5a8] sm:$0xff]
    %v286 = vld [vmem:[#allocation5 + $0x5b0] sm:$0xff]
    %v287 = vld [vmem:[#allocation5 + $0x5b8] sm:$0xff]
    %v288 = vld [vmem:[#allocation5 + $0x5c0] sm:$0xff]
    %v289 = vld [vmem:[#allocation5 + $0x5c8] sm:$0xff]
    %v290 = vld [vmem:[#allocation5 + $0x5d0] sm:$0xff]
    %v291 = vld [vmem:[#allocation5 + $0x5d8] sm:$0xff]
    %v292 = vld [vmem:[#allocation5 + $0x5e0] sm:$0xff]
    %v293 = vld [vmem:[#allocation5 + $0x5e8] sm:$0xff]
    %v294 = vld [vmem:[#allocation5 + $0x5f0] sm:$0xff]
    %v295 = vld [vmem:[#allocation5 + $0x5f8] sm:$0xff]
    %v296 = vld [vmem:[#allocation5 + $0x600] sm:$0xff]
    %v297 = vld [vmem:[#allocation5 + $0x608] sm:$0xff]
    %v298 = vld [vmem:[#allocation5 + $0x610] sm:$0xff]
    %v299 = vld [vmem:[#allocation5 + $0x618] sm:$0xff]
    %v300 = vld [vmem:[#allocation5 + $0x620] sm:$0xff]
    %v301 = vld [vmem:[#allocation5 + $0x628] sm:$0xff]
    %v302 = vld [vmem:[#allocation5 + $0x630] sm:$0xff]
    %v303 = vld [vmem:[#allocation5 + $0x638] sm:$0xff]
    %v304 = vld [vmem:[#allocation5 + $0x640] sm:$0xff]
    %v305 = vld [vmem:[#allocation5 + $0x648] sm:$0xff]
    %v306 = vld [vmem:[#allocation5 + $0x650] sm:$0xff]
    %v307 = vld [vmem:[#allocation5 + $0x658] sm:$0xff]
    %v308 = vld [vmem:[#allocation5 + $0x660] sm:$0xff]
    %v309 = vld [vmem:[#allocation5 + $0x668] sm:$0xff]
    %v310 = vld [vmem:[#allocation5 + $0x670] sm:$0xff]
    %v311 = vld [vmem:[#allocation5 + $0x678] sm:$0xff]
    %v312 = vld [vmem:[#allocation5 + $0x680] sm:$0xff]
    %v313 = vld [vmem:[#allocation5 + $0x688] sm:$0xff]
    %v314 = vld [vmem:[#allocation5 + $0x690] sm:$0xff]
    %v315 = vld [vmem:[#allocation5 + $0x698] sm:$0xff]
    %v316 = vld [vmem:[#allocation5 + $0x6a0] sm:$0xff]
    %v317 = vld [vmem:[#allocation5 + $0x6a8] sm:$0xff]
    %v318 = vld [vmem:[#allocation5 + $0x6b0] sm:$0xff]
    %v319 = vld [vmem:[#allocation5 + $0x6b8] sm:$0xff]
    %v320 = vld [vmem:[#allocation5 + $0x6c0] sm:$0xff]
    %v321 = vld [vmem:[#allocation5 + $0x6c8] sm:$0xff]
    %v322 = vld [vmem:[#allocation5 + $0x6d0] sm:$0xff]
    %v323 = vld [vmem:[#allocation5 + $0x6d8] sm:$0xff]
    %v324 = vld [vmem:[#allocation5 + $0x6e0] sm:$0xff]
    %v325 = vld [vmem:[#allocation5 + $0x6e8] sm:$0xff]
    %v326 = vld [vmem:[#allocation5 + $0x6f0] sm:$0xff]
    %v327 = vld [vmem:[#allocation5 + $0x6f8] sm:$0xff]
    %v328 = vld [vmem:[#allocation5 + $0x700] sm:$0xff]
    %v329 = vld [vmem:[#allocation5 + $0x708] sm:$0xff]
    %v330 = vld [vmem:[#allocation5 + $0x710] sm:$0xff]
    %v331 = vld [vmem:[#allocation5 + $0x718] sm:$0xff]
    %v332 = vld [vmem:[#allocation5 + $0x720] sm:$0xff]
    %v333 = vld [vmem:[#allocation5 + $0x728] sm:$0xff]
    %v334 = vld [vmem:[#allocation5 + $0x730] sm:$0xff]
    %v335 = vld [vmem:[#allocation5 + $0x738] sm:$0xff]
    %v336 = vld [vmem:[#allocation5 + $0x740] sm:$0xff]
    %v337 = vld [vmem:[#allocation5 + $0x748] sm:$0xff]
    %v338 = vld [vmem:[#allocation5 + $0x750] sm:$0xff]
    %v339 = vld [vmem:[#allocation5 + $0x758] sm:$0xff]
    %v340 = vld [vmem:[#allocation5 + $0x760] sm:$0xff]
    %v341 = vld [vmem:[#allocation5 + $0x768] sm:$0xff]
    %v342 = vld [vmem:[#allocation5 + $0x770] sm:$0xff]
    %v343 = vld [vmem:[#allocation5 + $0x778] sm:$0xff]
    %v344 = vld [vmem:[#allocation5 + $0x780] sm:$0xff]
    %v345 = vld [vmem:[#allocation5 + $0x788] sm:$0xff]
    %v346 = vld [vmem:[#allocation5 + $0x790] sm:$0xff]
    %v347 = vld [vmem:[#allocation5 + $0x798] sm:$0xff]
    %v348 = vld [vmem:[#allocation5 + $0x7a0] sm:$0xff]
    %v349 = vld [vmem:[#allocation5 + $0x7a8] sm:$0xff]
    %v350 = vld [vmem:[#allocation5 + $0x7b0] sm:$0xff]
    %v351 = vld [vmem:[#allocation5 + $0x7b8] sm:$0xff]
    %v352 = vld [vmem:[#allocation5 + $0x7c0] sm:$0xff]
    %v353 = vld [vmem:[#allocation5 + $0x7c8] sm:$0xff]
    %v354 = vld [vmem:[#allocation5 + $0x7d0] sm:$0xff]
    %v355 = vld [vmem:[#allocation5 + $0x7d8] sm:$0xff]
    %v356 = vld [vmem:[#allocation5 + $0x7e0] sm:$0xff]
    %v357 = vld [vmem:[#allocation5 + $0x7e8] sm:$0xff]
    %v358 = vld [vmem:[#allocation5 + $0x7f0] sm:$0xff]
    %v359 = vld [vmem:[#allocation5 + $0x7f8] sm:$0xff]
    %v360 = vld [vmem:[#allocation5 + $0x800] sm:$0xff]
    %v361 = vld [vmem:[#allocation5 + $0x808] sm:$0xff]
    %v362 = vld [vmem:[#allocation5 + $0x810] sm:$0xff]
    %v363 = vld [vmem:[#allocation5 + $0x818] sm:$0xff]
    %v364 = vld [vmem:[#allocation5 + $0x820] sm:$0xff]
    %v365 = vld [vmem:[#allocation5 + $0x828] sm:$0xff]
    %v366 = vld [vmem:[#allocation5 + $0x830] sm:$0xff]
    %v367 = vld [vmem:[#allocation5 + $0x838] sm:$0xff]
    %v368 = vld [vmem:[#allocation5 + $0x840] sm:$0xff]
    %v369 = vld [vmem:[#allocation5 + $0x848] sm:$0xff]
    %v370 = vld [vmem:[#allocation5 + $0x850] sm:$0xff]
    %v371 = vld [vmem:[#allocation5 + $0x858] sm:$0xff]
    %v372 = vld [vmem:[#allocation5 + $0x860] sm:$0xff]
    %v373 = vld [vmem:[#allocation5 + $0x868] sm:$0xff]
    %v374 = vld [vmem:[#allocation5 + $0x870] sm:$0xff]
    %v375 = vld [vmem:[#allocation5 + $0x878] sm:$0xff]
    %v376 = vld [vmem:[#allocation5 + $0x880] sm:$0xff]
    %v377 = vld [vmem:[#allocation5 + $0x888] sm:$0xff]
    %v378 = vld [vmem:[#allocation5 + $0x890] sm:$0xff]
    %v379 = vld [vmem:[#allocation5 + $0x898] sm:$0xff]
    %v380 = vld [vmem:[#allocation5 + $0x8a0] sm:$0xff]
    %v381 = vld [vmem:[#allocation5 + $0x8a8] sm:$0xff]
    %v382 = vld [vmem:[#allocation5 + $0x8b0] sm:$0xff]
    %v383 = vld [vmem:[#allocation5 + $0x8b8] sm:$0xff]
    %v384 = vld [vmem:[#allocation5 + $0x8c0] sm:$0xff]
    %v385 = vld [vmem:[#allocation5 + $0x8c8] sm:$0xff]
    %v386 = vld [vmem:[#allocation5 + $0x8d0] sm:$0xff]
    %v387 = vld [vmem:[#allocation5 + $0x8d8] sm:$0xff]
    %v388 = vld [vmem:[#allocation5 + $0x8e0] sm:$0xff]
    %v389 = vld [vmem:[#allocation5 + $0x8e8] sm:$0xff]
    %v390 = vld [vmem:[#allocation5 + $0x8f0] sm:$0xff]
    %v391 = vld [vmem:[#allocation5 + $0x8f8] sm:$0xff]
    %v392 = vld [vmem:[#allocation5 + $0x900] sm:$0xff]
    %v393 = vld [vmem:[#allocation5 + $0x908] sm:$0xff]
    %v394 = vld [vmem:[#allocation5 + $0x910] sm:$0xff]
    %v395 = vld [vmem:[#allocation5 + $0x918] sm:$0xff]
    %v396 = vld [vmem:[#allocation5 + $0x920] sm:$0xff]
    %v397 = vld [vmem:[#allocation5 + $0x928] sm:$0xff]
    %v398 = vld [vmem:[#allocation5 + $0x930] sm:$0xff]
    %v399 = vld [vmem:[#allocation5 + $0x938] sm:$0xff]
    %v400 = vld [vmem:[#allocation5 + $0x940] sm:$0xff]
    %v401 = vld [vmem:[#allocation5 + $0x948] sm:$0xff]
    %v402 = vld [vmem:[#allocation5 + $0x950] sm:$0xff]
    %v403 = vld [vmem:[#allocation5 + $0x958] sm:$0xff]
    %v404 = vld [vmem:[#allocation5 + $0x960] sm:$0xff]
    %v405 = vld [vmem:[#allocation5 + $0x968] sm:$0xff]
    %v406 = vld [vmem:[#allocation5 + $0x970] sm:$0xff]
    %v407 = vld [vmem:[#allocation5 + $0x978] sm:$0xff]
    %v408 = vld [vmem:[#allocation5 + $0x980] sm:$0xff]
    %v409 = vld [vmem:[#allocation5 + $0x988] sm:$0xff]
    %v410 = vld [vmem:[#allocation5 + $0x990] sm:$0xff]
    %v411 = vld [vmem:[#allocation5 + $0x998] sm:$0xff]
    %v412 = vld [vmem:[#allocation5 + $0x9a0] sm:$0xff]
    %v413 = vld [vmem:[#allocation5 + $0x9a8] sm:$0xff]
    %v414 = vld [vmem:[#allocation5 + $0x9b0] sm:$0xff]
    %v415 = vld [vmem:[#allocation5 + $0x9b8] sm:$0xff]
    %v416 = vld [vmem:[#allocation5 + $0x9c0] sm:$0xff]
    %v417 = vld [vmem:[#allocation5 + $0x9c8] sm:$0xff]
    %v418 = vld [vmem:[#allocation5 + $0x9d0] sm:$0xff]
    %v419 = vld [vmem:[#allocation5 + $0x9d8] sm:$0xff]
    %v420 = vld [vmem:[#allocation5 + $0x9e0] sm:$0xff]
    %v421 = vld [vmem:[#allocation5 + $0x9e8] sm:$0xff]
    %v422 = vld [vmem:[#allocation5 + $0x9f0] sm:$0xff]
    %v423 = vld [vmem:[#allocation5 + $0x9f8] sm:$0xff]
    %v424 = vld [vmem:[#allocation5 + $0xa00] sm:$0xff]
    %v425 = vld [vmem:[#allocation5 + $0xa08] sm:$0xff]
    %v426 = vld [vmem:[#allocation5 + $0xa10] sm:$0xff]
    %v427 = vld [vmem:[#allocation5 + $0xa18] sm:$0xff]
    %v428 = vld [vmem:[#allocation5 + $0xa20] sm:$0xff]
    %v429 = vld [vmem:[#allocation5 + $0xa28] sm:$0xff]
    %v430 = vld [vmem:[#allocation5 + $0xa30] sm:$0xff]
    %v431 = vld [vmem:[#allocation5 + $0xa38] sm:$0xff]
    %v432 = vld [vmem:[#allocation5 + $0xa40] sm:$0xff]
    %v433 = vld [vmem:[#allocation5 + $0xa48] sm:$0xff]
    %v434 = vld [vmem:[#allocation5 + $0xa50] sm:$0xff]
    %v435 = vld [vmem:[#allocation5 + $0xa58] sm:$0xff]
    %v436 = vld [vmem:[#allocation5 + $0xa60] sm:$0xff]
    %v437 = vld [vmem:[#allocation5 + $0xa68] sm:$0xff]
    %v438 = vld [vmem:[#allocation5 + $0xa70] sm:$0xff]
    %v439 = vld [vmem:[#allocation5 + $0xa78] sm:$0xff]
    %v440 = vld [vmem:[#allocation5 + $0xa80] sm:$0xff]
    %v441 = vld [vmem:[#allocation5 + $0xa88] sm:$0xff]
    %v442 = vld [vmem:[#allocation5 + $0xa90] sm:$0xff]
    %v443 = vld [vmem:[#allocation5 + $0xa98] sm:$0xff]
    %v444 = vld [vmem:[#allocation5 + $0xaa0] sm:$0xff]
    %v445 = vld [vmem:[#allocation5 + $0xaa8] sm:$0xff]
    %v446 = vld [vmem:[#allocation5 + $0xab0] sm:$0xff]
    %v447 = vld [vmem:[#allocation5 + $0xab8] sm:$0xff]
    %v448 = vld [vmem:[#allocation5 + $0xac0] sm:$0xff]
    %v449 = vld [vmem:[#allocation5 + $0xac8] sm:$0xff]
    %v450 = vld [vmem:[#allocation5 + $0xad0] sm:$0xff]
    %v451 = vld [vmem:[#allocation5 + $0xad8] sm:$0xff]
    %v452 = vld [vmem:[#allocation5 + $0xae0] sm:$0xff]
    %v453 = vld [vmem:[#allocation5 + $0xae8] sm:$0xff]
    %v454 = vld [vmem:[#allocation5 + $0xaf0] sm:$0xff]
    %v455 = vld [vmem:[#allocation5 + $0xaf8] sm:$0xff]
    %v456 = vld [vmem:[#allocation5 + $0xb00] sm:$0xff]
    %v457 = vld [vmem:[#allocation5 + $0xb08] sm:$0xff]
    %v458 = vld [vmem:[#allocation5 + $0xb10] sm:$0xff]
    %v459 = vld [vmem:[#allocation5 + $0xb18] sm:$0xff]
    %v460 = vld [vmem:[#allocation5 + $0xb20] sm:$0xff]
    %v461 = vld [vmem:[#allocation5 + $0xb28] sm:$0xff]
    %v462 = vld [vmem:[#allocation5 + $0xb30] sm:$0xff]
    %v463 = vld [vmem:[#allocation5 + $0xb38] sm:$0xff]
    %v464 = vld [vmem:[#allocation5 + $0xb40] sm:$0xff]
    %v465 = vld [vmem:[#allocation5 + $0xb48] sm:$0xff]
    %v466 = vld [vmem:[#allocation5 + $0xb50] sm:$0xff]
    %v467 = vld [vmem:[#allocation5 + $0xb58] sm:$0xff]
    %v468 = vld [vmem:[#allocation5 + $0xb60] sm:$0xff]
    %v469 = vld [vmem:[#allocation5 + $0xb68] sm:$0xff]
    %v470 = vld [vmem:[#allocation5 + $0xb70] sm:$0xff]
    %v471 = vld [vmem:[#allocation5 + $0xb78] sm:$0xff]
    %v472 = vld [vmem:[#allocation5 + $0xb80] sm:$0xff]
    %v473 = vld [vmem:[#allocation5 + $0xb88] sm:$0xff]
    %v474 = vld [vmem:[#allocation5 + $0xb90] sm:$0xff]
    %v475 = vld [vmem:[#allocation5 + $0xb98] sm:$0xff]
    %v476 = vld [vmem:[#allocation5 + $0xba0] sm:$0xff]
    %v477 = vld [vmem:[#allocation5 + $0xba8] sm:$0xff]
    %v478 = vld [vmem:[#allocation5 + $0xbb0] sm:$0xff]
    %v479 = vld [vmem:[#allocation5 + $0xbb8] sm:$0xff]
    %v480 = vld [vmem:[#allocation5 + $0xbc0] sm:$0xff]
    %v481 = vld [vmem:[#allocation5 + $0xbc8] sm:$0xff]
    %v482 = vld [vmem:[#allocation5 + $0xbd0] sm:$0xff]
    %v483 = vld [vmem:[#allocation5 + $0xbd8] sm:$0xff]
    %v484 = vld [vmem:[#allocation5 + $0xbe0] sm:$0xff]
    %v485 = vld [vmem:[#allocation5 + $0xbe8] sm:$0xff]
    %v486 = vld [vmem:[#allocation5 + $0xbf0] sm:$0xff]
    %v487 = vld [vmem:[#allocation5 + $0xbf8] sm:$0xff]
    %v488 = vld [vmem:[#allocation5 + $0xc00] sm:$0xff]
    %v489 = vld [vmem:[#allocation5 + $0xc08] sm:$0xff]
    %v490 = vld [vmem:[#allocation5 + $0xc10] sm:$0xff]
    %v491 = vld [vmem:[#allocation5 + $0xc18] sm:$0xff]
    %v492 = vld [vmem:[#allocation5 + $0xc20] sm:$0xff]
    %v493 = vld [vmem:[#allocation5 + $0xc28] sm:$0xff]
    %v494 = vld [vmem:[#allocation5 + $0xc30] sm:$0xff]
    %v495 = vld [vmem:[#allocation5 + $0xc38] sm:$0xff]
    %v496 = vld [vmem:[#allocation5 + $0xc40] sm:$0xff]
    %v497 = vld [vmem:[#allocation5 + $0xc48] sm:$0xff]
    %v498 = vld [vmem:[#allocation5 + $0xc50] sm:$0xff]
    %v499 = vld [vmem:[#allocation5 + $0xc58] sm:$0xff]
    %v500 = vld [vmem:[#allocation5 + $0xc60] sm:$0xff]
    %v501 = vld [vmem:[#allocation5 + $0xc68] sm:$0xff]
    %v502 = vld [vmem:[#allocation5 + $0xc70] sm:$0xff]
    %v503 = vld [vmem:[#allocation5 + $0xc78] sm:$0xff]
    %v504 = vld [vmem:[#allocation5 + $0xc80] sm:$0xff]
    %v505 = vld [vmem:[#allocation5 + $0xc88] sm:$0xff]
    %v506 = vld [vmem:[#allocation5 + $0xc90] sm:$0xff]
    %v507 = vld [vmem:[#allocation5 + $0xc98] sm:$0xff]
    %v508 = vld [vmem:[#allocation5 + $0xca0] sm:$0xff]
    %v509 = vld [vmem:[#allocation5 + $0xca8] sm:$0xff]
    %v510 = vld [vmem:[#allocation5 + $0xcb0] sm:$0xff]
    %v511 = vld [vmem:[#allocation5 + $0xcb8] sm:$0xff]
    %v512 = vld [vmem:[#allocation5 + $0xcc0] sm:$0xff]
    %v513 = vld [vmem:[#allocation5 + $0xcc8] sm:$0xff]
    %v514 = vld [vmem:[#allocation5 + $0xcd0] sm:$0xff]
    %v515 = vld [vmem:[#allocation5 + $0xcd8] sm:$0xff]
    %v516 = vld [vmem:[#allocation5 + $0xce0] sm:$0xff]
    %v517 = vld [vmem:[#allocation5 + $0xce8] sm:$0xff]
    %v518 = vld [vmem:[#allocation5 + $0xcf0] sm:$0xff]
    %v519 = vld [vmem:[#allocation5 + $0xcf8] sm:$0xff]
    %v520 = vld [vmem:[#allocation5 + $0xd00] sm:$0xff]
    %v521 = vld [vmem:[#allocation5 + $0xd08] sm:$0xff]
    %v522 = vld [vmem:[#allocation5 + $0xd10] sm:$0xff]
    %v523 = vld [vmem:[#allocation5 + $0xd18] sm:$0xff]
    %v524 = vld [vmem:[#allocation5 + $0xd20] sm:$0xff]
    %v525 = vld [vmem:[#allocation5 + $0xd28] sm:$0xff]
    %v526 = vld [vmem:[#allocation5 + $0xd30] sm:$0xff]
    %v527 = vld [vmem:[#allocation5 + $0xd38] sm:$0xff]
    %v528 = vld [vmem:[#allocation5 + $0xd40] sm:$0xff]
    %v529 = vld [vmem:[#allocation5 + $0xd48] sm:$0xff]
    %v530 = vld [vmem:[#allocation5 + $0xd50] sm:$0xff]
    %v531 = vld [vmem:[#allocation5 + $0xd58] sm:$0xff]
    %v532 = vld [vmem:[#allocation5 + $0xd60] sm:$0xff]
    %v533 = vld [vmem:[#allocation5 + $0xd68] sm:$0xff]
    %v534 = vld [vmem:[#allocation5 + $0xd70] sm:$0xff]
    %v535 = vld [vmem:[#allocation5 + $0xd78] sm:$0xff]
    %v536 = vld [vmem:[#allocation5 + $0xd80] sm:$0xff]
    %v537 = vld [vmem:[#allocation5 + $0xd88] sm:$0xff]
    %v538 = vld [vmem:[#allocation5 + $0xd90] sm:$0xff]
    %v539 = vld [vmem:[#allocation5 + $0xd98] sm:$0xff]
    %v540 = vld [vmem:[#allocation5 + $0xda0] sm:$0xff]
    %v541 = vld [vmem:[#allocation5 + $0xda8] sm:$0xff]
    %v542 = vld [vmem:[#allocation5 + $0xdb0] sm:$0xff]
    %v543 = vld [vmem:[#allocation5 + $0xdb8] sm:$0xff]
    %v544 = vld [vmem:[#allocation5 + $0xdc0] sm:$0xff]
    %v545 = vld [vmem:[#allocation5 + $0xdc8] sm:$0xff]
    %v546 = vld [vmem:[#allocation5 + $0xdd0] sm:$0xff]
    %v547 = vld [vmem:[#allocation5 + $0xdd8] sm:$0xff]
    %v548 = vld [vmem:[#allocation5 + $0xde0] sm:$0xff]
    %v549 = vld [vmem:[#allocation5 + $0xde8] sm:$0xff]
    %v550 = vld [vmem:[#allocation5 + $0xdf0] sm:$0xff]
    %v551 = vld [vmem:[#allocation5 + $0xdf8] sm:$0xff]
    %v552 = vld [vmem:[#allocation5 + $0xe00] sm:$0xff]
    %v553 = vld [vmem:[#allocation5 + $0xe08] sm:$0xff]
    %v554 = vld [vmem:[#allocation5 + $0xe10] sm:$0xff]
    %v555 = vld [vmem:[#allocation5 + $0xe18] sm:$0xff]
    %v556 = vld [vmem:[#allocation5 + $0xe20] sm:$0xff]
    %v557 = vld [vmem:[#allocation5 + $0xe28] sm:$0xff]
    %v558 = vld [vmem:[#allocation5 + $0xe30] sm:$0xff]
    %v559 = vld [vmem:[#allocation5 + $0xe38] sm:$0xff]
    %v560 = vld [vmem:[#allocation5 + $0xe40] sm:$0xff]
    %v561 = vld [vmem:[#allocation5 + $0xe48] sm:$0xff]
    %v562 = vld [vmem:[#allocation5 + $0xe50] sm:$0xff]
    %v563 = vld [vmem:[#allocation5 + $0xe58] sm:$0xff]
    %v564 = vld [vmem:[#allocation5 + $0xe60] sm:$0xff]
    %v565 = vld [vmem:[#allocation5 + $0xe68] sm:$0xff]
    %v566 = vld [vmem:[#allocation5 + $0xe70] sm:$0xff]
    %v567 = vld [vmem:[#allocation5 + $0xe78] sm:$0xff]
    %v568 = vld [vmem:[#allocation5 + $0xe80] sm:$0xff]
    %v569 = vld [vmem:[#allocation5 + $0xe88] sm:$0xff]
    %v570 = vld [vmem:[#allocation5 + $0xe90] sm:$0xff]
    %v571 = vld [vmem:[#allocation5 + $0xe98] sm:$0xff]
    %v572 = vld [vmem:[#allocation5 + $0xea0] sm:$0xff]
    %v573 = vld [vmem:[#allocation5 + $0xea8] sm:$0xff]
    %v574 = vld [vmem:[#allocation5 + $0xeb0] sm:$0xff]
    %v575 = vld [vmem:[#allocation5 + $0xeb8] sm:$0xff]
    %v576 = vld [vmem:[#allocation5 + $0xec0] sm:$0xff]
    %v577 = vld [vmem:[#allocation5 + $0xec8] sm:$0xff]
    %v578 = vld [vmem:[#allocation5 + $0xed0] sm:$0xff]
    %v579 = vld [vmem:[#allocation5 + $0xed8] sm:$0xff]
    %v580 = vld [vmem:[#allocation5 + $0xee0] sm:$0xff]
    %v581 = vld [vmem:[#allocation5 + $0xee8] sm:$0xff]
    %v582 = vld [vmem:[#allocation5 + $0xef0] sm:$0xff]
    %v583 = vld [vmem:[#allocation5 + $0xef8] sm:$0xff]
    %v584 = vld [vmem:[#allocation5 + $0xf00] sm:$0xff]
    %v585 = vld [vmem:[#allocation5 + $0xf08] sm:$0xff]
    %v586 = vld [vmem:[#allocation5 + $0xf10] sm:$0xff]
    %v587 = vld [vmem:[#allocation5 + $0xf18] sm:$0xff]
    %v588 = vld [vmem:[#allocation5 + $0xf20] sm:$0xff]
    %v589 = vld [vmem:[#allocation5 + $0xf28] sm:$0xff]
    %v590 = vld [vmem:[#allocation5 + $0xf30] sm:$0xff]
    %v591 = vld [vmem:[#allocation5 + $0xf38] sm:$0xff]
    %v592 = vld [vmem:[#allocation5 + $0xf40] sm:$0xff]
    %v593 = vld [vmem:[#allocation5 + $0xf48] sm:$0xff]
    %v594 = vld [vmem:[#allocation5 + $0xf50] sm:$0xff]
    %v595 = vld [vmem:[#allocation5 + $0xf58] sm:$0xff]
    %v596 = vld [vmem:[#allocation5 + $0xf60] sm:$0xff]
    %v597 = vld [vmem:[#allocation5 + $0xf68] sm:$0xff]
    %v598 = vld [vmem:[#allocation5 + $0xf70] sm:$0xff]
    %v599 = vld [vmem:[#allocation5 + $0xf78] sm:$0xff]
    %v600 = vld [vmem:[#allocation5 + $0xf80] sm:$0xff]
    %v601 = vld [vmem:[#allocation5 + $0xf88] sm:$0xff]
    %v602 = vld [vmem:[#allocation5 + $0xf90] sm:$0xff]
    %v603 = vld [vmem:[#allocation5 + $0xf98] sm:$0xff]
    %v604 = vld [vmem:[#allocation5 + $0xfa0] sm:$0xff]
    %v605 = vld [vmem:[#allocation5 + $0xfa8] sm:$0xff]
    %v606 = vld [vmem:[#allocation5 + $0xfb0] sm:$0xff]
    %v607 = vld [vmem:[#allocation5 + $0xfb8] sm:$0xff]
    %v608 = vld [vmem:[#allocation5 + $0xfc0] sm:$0xff]
    %v609 = vld [vmem:[#allocation5 + $0xfc8] sm:$0xff]
    %v610 = vld [vmem:[#allocation5 + $0xfd0] sm:$0xff]
    %v611 = vld [vmem:[#allocation5 + $0xfd8] sm:$0xff]
    %v612 = vld [vmem:[#allocation5 + $0xfe0] sm:$0xff]
    %v613 = vld [vmem:[#allocation5 + $0xfe8] sm:$0xff]
    %v614 = vld [vmem:[#allocation5 + $0xff0] sm:$0xff]
    %v615 = vld [vmem:[#allocation5 + $0xff8] sm:$0xff]
    %v616 = vld [vmem:[#allocation5 + $0x1000] sm:$0xff]
    %v617 = vld [vmem:[#allocation5 + $0x1008] sm:$0xff]
    %v618 = vld [vmem:[#allocation5 + $0x1010] sm:$0xff]
    %v619 = vld [vmem:[#allocation5 + $0x1018] sm:$0xff]
    %v620 = vld [vmem:[#allocation5 + $0x1020] sm:$0xff]
    %v621 = vld [vmem:[#allocation5 + $0x1028] sm:$0xff]
    %v622 = vld [vmem:[#allocation5 + $0x1030] sm:$0xff]
    %v623 = vld [vmem:[#allocation5 + $0x1038] sm:$0xff]
    %v624 = vld [vmem:[#allocation5 + $0x1040] sm:$0xff]
    %v625 = vld [vmem:[#allocation5 + $0x1048] sm:$0xff]
    %v626 = vld [vmem:[#allocation5 + $0x1050] sm:$0xff]
    %v627 = vld [vmem:[#allocation5 + $0x1058] sm:$0xff]
    %v628 = vld [vmem:[#allocation5 + $0x1060] sm:$0xff]
    %v629 = vld [vmem:[#allocation5 + $0x1068] sm:$0xff]
    %v630 = vld [vmem:[#allocation5 + $0x1070] sm:$0xff]
    %v631 = vld [vmem:[#allocation5 + $0x1078] sm:$0xff]
    %v632 = vld [vmem:[#allocation5 + $0x1080] sm:$0xff]
    %v633 = vld [vmem:[#allocation5 + $0x1088] sm:$0xff]
    %v634 = vld [vmem:[#allocation5 + $0x1090] sm:$0xff]
    %v635 = vld [vmem:[#allocation5 + $0x1098] sm:$0xff]
    %v636 = vld [vmem:[#allocation5 + $0x10a0] sm:$0xff]
    %v637 = vld [vmem:[#allocation5 + $0x10a8] sm:$0xff]
    %v638 = vld [vmem:[#allocation5 + $0x10b0] sm:$0xff]
    %v639 = vld [vmem:[#allocation5 + $0x10b8] sm:$0xff]
    %v640 = vld [vmem:[#allocation5 + $0x10c0] sm:$0xff]
    %v641 = vld [vmem:[#allocation5 + $0x10c8] sm:$0xff]
    %v642 = vld [vmem:[#allocation5 + $0x10d0] sm:$0xff]
    %v643 = vld [vmem:[#allocation5 + $0x10d8] sm:$0xff]
    %v644 = vld [vmem:[#allocation5 + $0x10e0] sm:$0xff]
    %v645 = vld [vmem:[#allocation5 + $0x10e8] sm:$0xff]
    %v646 = vld [vmem:[#allocation5 + $0x10f0] sm:$0xff]
    %v647 = vld [vmem:[#allocation5 + $0x10f8] sm:$0xff]
    %v648 = vld [vmem:[#allocation5 + $0x1100] sm:$0xff]
    %v649 = vld [vmem:[#allocation5 + $0x1108] sm:$0xff]
    %v650 = vld [vmem:[#allocation5 + $0x1110] sm:$0xff]
    %v651 = vld [vmem:[#allocation5 + $0x1118] sm:$0xff]
    %v652 = vld [vmem:[#allocation5 + $0x1120] sm:$0xff]
    %v653 = vld [vmem:[#allocation5 + $0x1128] sm:$0xff]
    %v654 = vld [vmem:[#allocation5 + $0x1130] sm:$0xff]
    %v655 = vld [vmem:[#allocation5 + $0x1138] sm:$0xff]
    %v656 = vld [vmem:[#allocation5 + $0x1140] sm:$0xff]
    %v657 = vld [vmem:[#allocation5 + $0x1148] sm:$0xff]
    %v658 = vld [vmem:[#allocation5 + $0x1150] sm:$0xff]
    %v659 = vld [vmem:[#allocation5 + $0x1158] sm:$0xff]
    %v660 = vld [vmem:[#allocation5 + $0x1160] sm:$0xff]
    %v661 = vld [vmem:[#allocation5 + $0x1168] sm:$0xff]
    %v662 = vld [vmem:[#allocation5 + $0x1170] sm:$0xff]
    %v663 = vld [vmem:[#allocation5 + $0x1178] sm:$0xff]
    %v664 = vld [vmem:[#allocation5 + $0x1180] sm:$0xff]
    %v665 = vld [vmem:[#allocation5 + $0x1188] sm:$0xff]
    %v666 = vld [vmem:[#allocation5 + $0x1190] sm:$0xff]
    %v667 = vld [vmem:[#allocation5 + $0x1198] sm:$0xff]
    %v668 = vld [vmem:[#allocation5 + $0x11a0] sm:$0xff]
    %v669 = vld [vmem:[#allocation5 + $0x11a8] sm:$0xff]
    %v670 = vld [vmem:[#allocation5 + $0x11b0] sm:$0xff]
    %v671 = vld [vmem:[#allocation5 + $0x11b8] sm:$0xff]
    %v672 = vld [vmem:[#allocation5 + $0x11c0] sm:$0xff]
    %v673 = vld [vmem:[#allocation5 + $0x11c8] sm:$0xff]
    %v674 = vld [vmem:[#allocation5 + $0x11d0] sm:$0xff]
    %v675 = vld [vmem:[#allocation5 + $0x11d8] sm:$0xff]
    %v676 = vld [vmem:[#allocation5 + $0x11e0] sm:$0xff]
    %v677 = vld [vmem:[#allocation5 + $0x11e8] sm:$0xff]
    %v678 = vld [vmem:[#allocation5 + $0x11f0] sm:$0xff]
    %v679 = vld [vmem:[#allocation5 + $0x11f8] sm:$0xff]
    %v680 = vld [vmem:[#allocation5 + $0x1200] sm:$0xff]
    %v681 = vld [vmem:[#allocation5 + $0x1208] sm:$0xff]
    %v682 = vld [vmem:[#allocation5 + $0x1210] sm:$0xff]
    %v683 = vld [vmem:[#allocation5 + $0x1218] sm:$0xff]
    %v684 = vld [vmem:[#allocation5 + $0x1220] sm:$0xff]
    %v685 = vld [vmem:[#allocation5 + $0x1228] sm:$0xff]
    %v686 = vld [vmem:[#allocation5 + $0x1230] sm:$0xff]
    %v687 = vld [vmem:[#allocation5 + $0x1238] sm:$0xff]
    %v688 = vld [vmem:[#allocation5 + $0x1240] sm:$0xff]
    %v689 = vld [vmem:[#allocation5 + $0x1248] sm:$0xff]
    %v690 = vld [vmem:[#allocation5 + $0x1250] sm:$0xff]
    %v691 = vld [vmem:[#allocation5 + $0x1258] sm:$0xff]
    %v692 = vld [vmem:[#allocation5 + $0x1260] sm:$0xff]
    %v693 = vld [vmem:[#allocation5 + $0x1268] sm:$0xff]
    %v694 = vld [vmem:[#allocation5 + $0x1270] sm:$0xff]
    %v695 = vld [vmem:[#allocation5 + $0x1278] sm:$0xff]
    %v696 = vld [vmem:[#allocation5 + $0x1280] sm:$0xff]
    %v697 = vld [vmem:[#allocation5 + $0x1288] sm:$0xff]
    %v698 = vld [vmem:[#allocation5 + $0x1290] sm:$0xff]
    %v699 = vld [vmem:[#allocation5 + $0x1298] sm:$0xff]
    %v700 = vld [vmem:[#allocation5 + $0x12a0] sm:$0xff]
    %v701 = vld [vmem:[#allocation5 + $0x12a8] sm:$0xff]
    %v702 = vld [vmem:[#allocation5 + $0x12b0] sm:$0xff]
    %v703 = vld [vmem:[#allocation5 + $0x12b8] sm:$0xff]
    %v704 = vld [vmem:[#allocation5 + $0x12c0] sm:$0xff]
    %v705 = vld [vmem:[#allocation5 + $0x12c8] sm:$0xff]
    %v706 = vld [vmem:[#allocation5 + $0x12d0] sm:$0xff]
    %v707 = vld [vmem:[#allocation5 + $0x12d8] sm:$0xff]
    %v708 = vld [vmem:[#allocation5 + $0x12e0] sm:$0xff]
    %v709 = vld [vmem:[#allocation5 + $0x12e8] sm:$0xff]
    %v710 = vld [vmem:[#allocation5 + $0x12f0] sm:$0xff]
    %v711 = vld [vmem:[#allocation5 + $0x12f8] sm:$0xff]
    %v712 = vld [vmem:[#allocation5 + $0x1300] sm:$0xff]
    %v713 = vld [vmem:[#allocation5 + $0x1308] sm:$0xff]
    %v714 = vld [vmem:[#allocation5 + $0x1310] sm:$0xff]
    %v715 = vld [vmem:[#allocation5 + $0x1318] sm:$0xff]
    %v716 = vld [vmem:[#allocation5 + $0x1320] sm:$0xff]
    %v717 = vld [vmem:[#allocation5 + $0x1328] sm:$0xff]
    %v718 = vld [vmem:[#allocation5 + $0x1330] sm:$0xff]
    %v719 = vld [vmem:[#allocation5 + $0x1338] sm:$0xff]
    %v720 = vld [vmem:[#allocation5 + $0x1340] sm:$0xff]
    %v721 = vld [vmem:[#allocation5 + $0x1348] sm:$0xff]
    %v722 = vld [vmem:[#allocation5 + $0x1350] sm:$0xff]
    %v723 = vld [vmem:[#allocation5 + $0x1358] sm:$0xff]
    %v724 = vld [vmem:[#allocation5 + $0x1360] sm:$0xff]
    %v725 = vld [vmem:[#allocation5 + $0x1368] sm:$0xff]
    %v726 = vld [vmem:[#allocation5 + $0x1370] sm:$0xff]
    %v727 = vld [vmem:[#allocation5 + $0x1378] sm:$0xff]
    %v728 = vld [vmem:[#allocation5 + $0x1380] sm:$0xff]
    %v729 = vld [vmem:[#allocation5 + $0x1388] sm:$0xff]
    %v730 = vld [vmem:[#allocation5 + $0x1390] sm:$0xff]
    %v731 = vld [vmem:[#allocation5 + $0x1398] sm:$0xff]
    %v732 = vld [vmem:[#allocation5 + $0x13a0] sm:$0xff]
    %v733 = vld [vmem:[#allocation5 + $0x13a8] sm:$0xff]
    %v734 = vld [vmem:[#allocation5 + $0x13b0] sm:$0xff]
    %v735 = vld [vmem:[#allocation5 + $0x13b8] sm:$0xff]
    %v736 = vld [vmem:[#allocation5 + $0x13c0] sm:$0xff]
    %v737 = vld [vmem:[#allocation5 + $0x13c8] sm:$0xff]
    %v738 = vld [vmem:[#allocation5 + $0x13d0] sm:$0xff]
    %v739 = vld [vmem:[#allocation5 + $0x13d8] sm:$0xff]
    %v740 = vld [vmem:[#allocation5 + $0x13e0] sm:$0xff]
    %v741 = vld [vmem:[#allocation5 + $0x13e8] sm:$0xff]
    %v742 = vld [vmem:[#allocation5 + $0x13f0] sm:$0xff]
    %v743 = vld [vmem:[#allocation5 + $0x13f8] sm:$0xff]
    %v744 = vld [vmem:[#allocation5 + $0x1400] sm:$0xff]
    %v745 = vld [vmem:[#allocation5 + $0x1408] sm:$0xff]
    %v746 = vld [vmem:[#allocation5 + $0x1410] sm:$0xff]
    %v747 = vld [vmem:[#allocation5 + $0x1418] sm:$0xff]
    %v748 = vld [vmem:[#allocation5 + $0x1420] sm:$0xff]
    %v749 = vld [vmem:[#allocation5 + $0x1428] sm:$0xff]
    %v750 = vld [vmem:[#allocation5 + $0x1430] sm:$0xff]
    %v751 = vld [vmem:[#allocation5 + $0x1438] sm:$0xff]
    %v752 = vld [vmem:[#allocation5 + $0x1440] sm:$0xff]
    %v753 = vld [vmem:[#allocation5 + $0x1448] sm:$0xff]
    %v754 = vld [vmem:[#allocation5 + $0x1450] sm:$0xff]
    %v755 = vld [vmem:[#allocation5 + $0x1458] sm:$0xff]
    %v756 = vld [vmem:[#allocation5 + $0x1460] sm:$0xff]
    %v757 = vld [vmem:[#allocation5 + $0x1468] sm:$0xff]
    %v758 = vld [vmem:[#allocation5 + $0x1470] sm:$0xff]
    %v759 = vld [vmem:[#allocation5 + $0x1478] sm:$0xff]
    %v760 = vld [vmem:[#allocation5 + $0x1480] sm:$0xff]
    %v761 = vld [vmem:[#allocation5 + $0x1488] sm:$0xff]
    %v762 = vld [vmem:[#allocation5 + $0x1490] sm:$0xff]
    %v763 = vld [vmem:[#allocation5 + $0x1498] sm:$0xff]
    %v764 = vld [vmem:[#allocation5 + $0x14a0] sm:$0xff]
    %v765 = vld [vmem:[#allocation5 + $0x14a8] sm:$0xff]
    %v766 = vld [vmem:[#allocation5 + $0x14b0] sm:$0xff]
    %v767 = vld [vmem:[#allocation5 + $0x14b8] sm:$0xff]
    %v768 = vld [vmem:[#allocation5 + $0x14c0] sm:$0xff]
    %v769 = vld [vmem:[#allocation5 + $0x14c8] sm:$0xff]
    %v770 = vld [vmem:[#allocation5 + $0x14d0] sm:$0xff]
    %v771 = vld [vmem:[#allocation5 + $0x14d8] sm:$0xff]
    %v772 = vld [vmem:[#allocation5 + $0x14e0] sm:$0xff]
    %v773 = vld [vmem:[#allocation5 + $0x14e8] sm:$0xff]
    %v774 = vld [vmem:[#allocation5 + $0x14f0] sm:$0xff]
    %v775 = vld [vmem:[#allocation5 + $0x14f8] sm:$0xff]
    %v776 = vld [vmem:[#allocation5 + $0x1500] sm:$0xff]
    %v777 = vld [vmem:[#allocation5 + $0x1508] sm:$0xff]
    %v778 = vld [vmem:[#allocation5 + $0x1510] sm:$0xff]
    %v779 = vld [vmem:[#allocation5 + $0x1518] sm:$0xff]
    %v780 = vld [vmem:[#allocation5 + $0x1520] sm:$0xff]
    %v781 = vld [vmem:[#allocation5 + $0x1528] sm:$0xff]
    %v782 = vld [vmem:[#allocation5 + $0x1530] sm:$0xff]
    %v783 = vld [vmem:[#allocation5 + $0x1538] sm:$0xff]
    %v784 = vld [vmem:[#allocation5 + $0x1540] sm:$0xff]
    %v785 = vld [vmem:[#allocation5 + $0x1548] sm:$0xff]
    %v786 = vld [vmem:[#allocation5 + $0x1550] sm:$0xff]
    %v787 = vld [vmem:[#allocation5 + $0x1558] sm:$0xff]
    %v788 = vld [vmem:[#allocation5 + $0x1560] sm:$0xff]
    %v789 = vld [vmem:[#allocation5 + $0x1568] sm:$0xff]
    %v790 = vld [vmem:[#allocation5 + $0x1570] sm:$0xff]
    %v791 = vld [vmem:[#allocation5 + $0x1578] sm:$0xff]
    %v792 = vld [vmem:[#allocation5 + $0x1580] sm:$0xff]
    %v793 = vld [vmem:[#allocation5 + $0x1588] sm:$0xff]
    %v794 = vld [vmem:[#allocation5 + $0x1590] sm:$0xff]
    %v795 = vld [vmem:[#allocation5 + $0x1598] sm:$0xff]
    %v796 = vld [vmem:[#allocation5 + $0x15a0] sm:$0xff]
    %v797 = vld [vmem:[#allocation5 + $0x15a8] sm:$0xff]
    %v798 = vld [vmem:[#allocation5 + $0x15b0] sm:$0xff]
    %v799 = vld [vmem:[#allocation5 + $0x15b8] sm:$0xff]
    %v800 = vld [vmem:[#allocation5 + $0x15c0] sm:$0xff]
    %v801 = vld [vmem:[#allocation5 + $0x15c8] sm:$0xff]
    %v802 = vld [vmem:[#allocation5 + $0x15d0] sm:$0xff]
    %v803 = vld [vmem:[#allocation5 + $0x15d8] sm:$0xff]
    %v804 = vld [vmem:[#allocation5 + $0x15e0] sm:$0xff]
    %v805 = vld [vmem:[#allocation5 + $0x15e8] sm:$0xff]
    %v806 = vld [vmem:[#allocation5 + $0x15f0] sm:$0xff]
    %v807 = vld [vmem:[#allocation5 + $0x15f8] sm:$0xff]
    %v808 = vld [vmem:[#allocation5 + $0x1600] sm:$0xff]
    %v809 = vld [vmem:[#allocation5 + $0x1608] sm:$0xff]
    %v810 = vld [vmem:[#allocation5 + $0x1610] sm:$0xff]
    %v811 = vld [vmem:[#allocation5 + $0x1618] sm:$0xff]
    %v812 = vld [vmem:[#allocation5 + $0x1620] sm:$0xff]
    %v813 = vld [vmem:[#allocation5 + $0x1628] sm:$0xff]
    %v814 = vld [vmem:[#allocation5 + $0x1630] sm:$0xff]
    %v815 = vld [vmem:[#allocation5 + $0x1638] sm:$0xff]
    %v816 = vld [vmem:[#allocation5 + $0x1640] sm:$0xff]
    %v817 = vld [vmem:[#allocation5 + $0x1648] sm:$0xff]
    %v818 = vld [vmem:[#allocation5 + $0x1650] sm:$0xff]
    %v819 = vld [vmem:[#allocation5 + $0x1658] sm:$0xff]
    %v820 = vld [vmem:[#allocation5 + $0x1660] sm:$0xff]
    %v821 = vld [vmem:[#allocation5 + $0x1668] sm:$0xff]
    %v822 = vld [vmem:[#allocation5 + $0x1670] sm:$0xff]
    %v823 = vld [vmem:[#allocation5 + $0x1678] sm:$0xff]
    %v824 = vld [vmem:[#allocation5 + $0x1680] sm:$0xff]
    %v825 = vld [vmem:[#allocation5 + $0x1688] sm:$0xff]
    %v826 = vld [vmem:[#allocation5 + $0x1690] sm:$0xff]
    %v827 = vld [vmem:[#allocation5 + $0x1698] sm:$0xff]
    %v828 = vld [vmem:[#allocation5 + $0x16a0] sm:$0xff]
    %v829 = vld [vmem:[#allocation5 + $0x16a8] sm:$0xff]
    %v830 = vld [vmem:[#allocation5 + $0x16b0] sm:$0xff]
    %v831 = vld [vmem:[#allocation5 + $0x16b8] sm:$0xff]
    %v832 = vld [vmem:[#allocation5 + $0x16c0] sm:$0xff]
    %v833 = vld [vmem:[#allocation5 + $0x16c8] sm:$0xff]
    %v834 = vld [vmem:[#allocation5 + $0x16d0] sm:$0xff]
    %v835 = vld [vmem:[#allocation5 + $0x16d8] sm:$0xff]
    %v836 = vld [vmem:[#allocation5 + $0x16e0] sm:$0xff]
    %v837 = vld [vmem:[#allocation5 + $0x16e8] sm:$0xff]
    %v838 = vld [vmem:[#allocation5 + $0x16f0] sm:$0xff]
    %v839 = vld [vmem:[#allocation5 + $0x16f8] sm:$0xff]
    %v840 = vld [vmem:[#allocation5 + $0x1700] sm:$0xff]
    %v841 = vld [vmem:[#allocation5 + $0x1708] sm:$0xff]
    %v842 = vld [vmem:[#allocation5 + $0x1710] sm:$0xff]
    %v843 = vld [vmem:[#allocation5 + $0x1718] sm:$0xff]
    %v844 = vld [vmem:[#allocation5 + $0x1720] sm:$0xff]
    %v845 = vld [vmem:[#allocation5 + $0x1728] sm:$0xff]
    %v846 = vld [vmem:[#allocation5 + $0x1730] sm:$0xff]
    %v847 = vld [vmem:[#allocation5 + $0x1738] sm:$0xff]
    %v848 = vld [vmem:[#allocation5 + $0x1740] sm:$0xff]
    %v849 = vld [vmem:[#allocation5 + $0x1748] sm:$0xff]
    %v850 = vld [vmem:[#allocation5 + $0x1750] sm:$0xff]
    %v851 = vld [vmem:[#allocation5 + $0x1758] sm:$0xff]
    %v852 = vld [vmem:[#allocation5 + $0x1760] sm:$0xff]
    %v853 = vld [vmem:[#allocation5 + $0x1768] sm:$0xff]
    %v854 = vld [vmem:[#allocation5 + $0x1770] sm:$0xff]
    %v855 = vld [vmem:[#allocation5 + $0x1778] sm:$0xff]
    %v856 = vld [vmem:[#allocation5 + $0x1780] sm:$0xff]
    %v857 = vld [vmem:[#allocation5 + $0x1788] sm:$0xff]
    %v858 = vld [vmem:[#allocation5 + $0x1790] sm:$0xff]
    %v859 = vld [vmem:[#allocation5 + $0x1798] sm:$0xff]
    %v860 = vld [vmem:[#allocation5 + $0x17a0] sm:$0xff]
    %v861 = vld [vmem:[#allocation5 + $0x17a8] sm:$0xff]
    %v862 = vld [vmem:[#allocation5 + $0x17b0] sm:$0xff]
    %v863 = vld [vmem:[#allocation5 + $0x17b8] sm:$0xff]
    %v864 = vld [vmem:[#allocation5 + $0x17c0] sm:$0xff]
    %v865 = vld [vmem:[#allocation5 + $0x17c8] sm:$0xff]
    %v866 = vld [vmem:[#allocation5 + $0x17d0] sm:$0xff]
    %v867 = vld [vmem:[#allocation5 + $0x17d8] sm:$0xff]
    %v868 = vld [vmem:[#allocation5 + $0x17e0] sm:$0xff]
    %v869 = vld [vmem:[#allocation5 + $0x17e8] sm:$0xff]
    %v870 = vld [vmem:[#allocation5 + $0x17f0] sm:$0xff]
    %v871 = vld [vmem:[#allocation5 + $0x17f8] sm:$0xff]
    %v872 = vld [vmem:[#allocation5 + $0x1800] sm:$0xff]
    %v873 = vld [vmem:[#allocation5 + $0x1808] sm:$0xff]
    %v874 = vld [vmem:[#allocation5 + $0x1810] sm:$0xff]
    %v875 = vld [vmem:[#allocation5 + $0x1818] sm:$0xff]
    %v876 = vld [vmem:[#allocation5 + $0x1820] sm:$0xff]
    %v877 = vld [vmem:[#allocation5 + $0x1828] sm:$0xff]
    %v878 = vld [vmem:[#allocation5 + $0x1830] sm:$0xff]
    %v879 = vld [vmem:[#allocation5 + $0x1838] sm:$0xff]
    %v880 = vld [vmem:[#allocation5 + $0x1840] sm:$0xff]
    %v881 = vld [vmem:[#allocation5 + $0x1848] sm:$0xff]
    %v882 = vld [vmem:[#allocation5 + $0x1850] sm:$0xff]
    %v883 = vld [vmem:[#allocation5 + $0x1858] sm:$0xff]
    %v884 = vld [vmem:[#allocation5 + $0x1860] sm:$0xff]
    %v885 = vld [vmem:[#allocation5 + $0x1868] sm:$0xff]
    %v886 = vld [vmem:[#allocation5 + $0x1870] sm:$0xff]
    %v887 = vld [vmem:[#allocation5 + $0x1878] sm:$0xff]
    %v888 = vld [vmem:[#allocation5 + $0x1880] sm:$0xff]
    %v889 = vld [vmem:[#allocation5 + $0x1888] sm:$0xff]
    %v890 = vld [vmem:[#allocation5 + $0x1890] sm:$0xff]
    %v891 = vld [vmem:[#allocation5 + $0x1898] sm:$0xff]
    %v892 = vld [vmem:[#allocation5 + $0x18a0] sm:$0xff]
    %v893 = vld [vmem:[#allocation5 + $0x18a8] sm:$0xff]
    %v894 = vld [vmem:[#allocation5 + $0x18b0] sm:$0xff]
    %v895 = vld [vmem:[#allocation5 + $0x18b8] sm:$0xff]
    %v896 = vld [vmem:[#allocation5 + $0x18c0] sm:$0xff]
    %v897 = vld [vmem:[#allocation5 + $0x18c8] sm:$0xff]
    %v898 = vld [vmem:[#allocation5 + $0x18d0] sm:$0xff]
    %v899 = vld [vmem:[#allocation5 + $0x18d8] sm:$0xff]
    %v900 = vld [vmem:[#allocation5 + $0x18e0] sm:$0xff]
    %v901 = vld [vmem:[#allocation5 + $0x18e8] sm:$0xff]
    %v902 = vld [vmem:[#allocation5 + $0x18f0] sm:$0xff]
    %v903 = vld [vmem:[#allocation5 + $0x18f8] sm:$0xff]
    %v904 = vld [vmem:[#allocation5 + $0x1900] sm:$0xff]
    %v905 = vld [vmem:[#allocation5 + $0x1908] sm:$0xff]
    %v906 = vld [vmem:[#allocation5 + $0x1910] sm:$0xff]
    %v907 = vld [vmem:[#allocation5 + $0x1918] sm:$0xff]
    %v908 = vld [vmem:[#allocation5 + $0x1920] sm:$0xff]
    %v909 = vld [vmem:[#allocation5 + $0x1928] sm:$0xff]
    %v910 = vld [vmem:[#allocation5 + $0x1930] sm:$0xff]
    %v911 = vld [vmem:[#allocation5 + $0x1938] sm:$0xff]
    %v912 = vld [vmem:[#allocation5 + $0x1940] sm:$0xff]
    %v913 = vld [vmem:[#allocation5 + $0x1948] sm:$0xff]
    %v914 = vld [vmem:[#allocation5 + $0x1950] sm:$0xff]
    %v915 = vld [vmem:[#allocation5 + $0x1958] sm:$0xff]
    %v916 = vld [vmem:[#allocation5 + $0x1960] sm:$0xff]
    %v917 = vld [vmem:[#allocation5 + $0x1968] sm:$0xff]
    %v918 = vld [vmem:[#allocation5 + $0x1970] sm:$0xff]
    %v919 = vld [vmem:[#allocation5 + $0x1978] sm:$0xff]
    %v920 = vld [vmem:[#allocation5 + $0x1980] sm:$0xff]
    %v921 = vld [vmem:[#allocation5 + $0x1988] sm:$0xff]
    %v922 = vld [vmem:[#allocation5 + $0x1990] sm:$0xff]
    %v923 = vld [vmem:[#allocation5 + $0x1998] sm:$0xff]
    %v924 = vld [vmem:[#allocation5 + $0x19a0] sm:$0xff]
    %v925 = vld [vmem:[#allocation5 + $0x19a8] sm:$0xff]
    %v926 = vld [vmem:[#allocation5 + $0x19b0] sm:$0xff]
    %v927 = vld [vmem:[#allocation5 + $0x19b8] sm:$0xff]
    %v928 = vld [vmem:[#allocation5 + $0x19c0] sm:$0xff]
    %v929 = vld [vmem:[#allocation5 + $0x19c8] sm:$0xff]
    %v930 = vld [vmem:[#allocation5 + $0x19d0] sm:$0xff]
    %v931 = vld [vmem:[#allocation5 + $0x19d8] sm:$0xff]
    %v932 = vld [vmem:[#allocation5 + $0x19e0] sm:$0xff]
    %v933 = vld [vmem:[#allocation5 + $0x19e8] sm:$0xff]
    %v934 = vld [vmem:[#allocation5 + $0x19f0] sm:$0xff]
    %v935 = vld [vmem:[#allocation5 + $0x19f8] sm:$0xff]
    %v936 = vld [vmem:[#allocation5 + $0x1a00] sm:$0xff]
    %v937 = vld [vmem:[#allocation5 + $0x1a08] sm:$0xff]
    %v938 = vld [vmem:[#allocation5 + $0x1a10] sm:$0xff]
    %v939 = vld [vmem:[#allocation5 + $0x1a18] sm:$0xff]
    %v940 = vld [vmem:[#allocation5 + $0x1a20] sm:$0xff]
    %v941 = vld [vmem:[#allocation5 + $0x1a28] sm:$0xff]
    %v942 = vld [vmem:[#allocation5 + $0x1a30] sm:$0xff]
    %v943 = vld [vmem:[#allocation5 + $0x1a38] sm:$0xff]
    %v944 = vld [vmem:[#allocation5 + $0x1a40] sm:$0xff]
    %v945 = vld [vmem:[#allocation5 + $0x1a48] sm:$0xff]
    %v946 = vld [vmem:[#allocation5 + $0x1a50] sm:$0xff]
    %v947 = vld [vmem:[#allocation5 + $0x1a58] sm:$0xff]
    %v948 = vld [vmem:[#allocation5 + $0x1a60] sm:$0xff]
    %v949 = vld [vmem:[#allocation5 + $0x1a68] sm:$0xff]
    %v950 = vld [vmem:[#allocation5 + $0x1a70] sm:$0xff]
    %v951 = vld [vmem:[#allocation5 + $0x1a78] sm:$0xff]
    %v952 = vld [vmem:[#allocation5 + $0x1a80] sm:$0xff]
    %v953 = vld [vmem:[#allocation5 + $0x1a88] sm:$0xff]
    %v954 = vld [vmem:[#allocation5 + $0x1a90] sm:$0xff]
    %v955 = vld [vmem:[#allocation5 + $0x1a98] sm:$0xff]
    %v956 = vld [vmem:[#allocation5 + $0x1aa0] sm:$0xff]
    %v957 = vld [vmem:[#allocation5 + $0x1aa8] sm:$0xff]
    %v958 = vld [vmem:[#allocation5 + $0x1ab0] sm:$0xff]
    %v959 = vld [vmem:[#allocation5 + $0x1ab8] sm:$0xff]
    %v960 = vld [vmem:[#allocation5 + $0x1ac0] sm:$0xff]
    %v961 = vld [vmem:[#allocation5 + $0x1ac8] sm:$0xff]
    %v962 = vld [vmem:[#allocation5 + $0x1ad0] sm:$0xff]
    %v963 = vld [vmem:[#allocation5 + $0x1ad8] sm:$0xff]
    %v964 = vld [vmem:[#allocation5 + $0x1ae0] sm:$0xff]
    %v965 = vld [vmem:[#allocation5 + $0x1ae8] sm:$0xff]
    %v966 = vld [vmem:[#allocation5 + $0x1af0] sm:$0xff]
    %v967 = vld [vmem:[#allocation5 + $0x1af8] sm:$0xff]
    %v968 = vld [vmem:[#allocation5 + $0x1b00] sm:$0xff]
    %v969 = vld [vmem:[#allocation5 + $0x1b08] sm:$0xff]
    %v970 = vld [vmem:[#allocation5 + $0x1b10] sm:$0xff]
    %v971 = vld [vmem:[#allocation5 + $0x1b18] sm:$0xff]
    %v972 = vld [vmem:[#allocation5 + $0x1b20] sm:$0xff]
    %v973 = vld [vmem:[#allocation5 + $0x1b28] sm:$0xff]
    %v974 = vld [vmem:[#allocation5 + $0x1b30] sm:$0xff]
    %v975 = vld [vmem:[#allocation5 + $0x1b38] sm:$0xff]
    %v976 = vld [vmem:[#allocation5 + $0x1b40] sm:$0xff]
    %v977 = vld [vmem:[#allocation5 + $0x1b48] sm:$0xff]
    %v978 = vld [vmem:[#allocation5 + $0x1b50] sm:$0xff]
    %v979 = vld [vmem:[#allocation5 + $0x1b58] sm:$0xff]
    %v980 = vld [vmem:[#allocation5 + $0x1b60] sm:$0xff]
    %v981 = vld [vmem:[#allocation5 + $0x1b68] sm:$0xff]
    %v982 = vld [vmem:[#allocation5 + $0x1b70] sm:$0xff]
    %v983 = vld [vmem:[#allocation5 + $0x1b78] sm:$0xff]
    %v984 = vld [vmem:[#allocation5 + $0x1b80] sm:$0xff]
    %v985 = vld [vmem:[#allocation5 + $0x1b88] sm:$0xff]
    %v986 = vld [vmem:[#allocation5 + $0x1b90] sm:$0xff]
    %v987 = vld [vmem:[#allocation5 + $0x1b98] sm:$0xff]
    %v988 = vld [vmem:[#allocation5 + $0x1ba0] sm:$0xff]
    %v989 = vld [vmem:[#allocation5 + $0x1ba8] sm:$0xff]
    %v990 = vld [vmem:[#allocation5 + $0x1bb0] sm:$0xff]
    %v991 = vld [vmem:[#allocation5 + $0x1bb8] sm:$0xff]
    %v992 = vld [vmem:[#allocation5 + $0x1bc0] sm:$0xff]
    %v993 = vld [vmem:[#allocation5 + $0x1bc8] sm:$0xff]
    %v994 = vld [vmem:[#allocation5 + $0x1bd0] sm:$0xff]
    %v995 = vld [vmem:[#allocation5 + $0x1bd8] sm:$0xff]
    %v996 = vld [vmem:[#allocation5 + $0x1be0] sm:$0xff]
    %v997 = vld [vmem:[#allocation5 + $0x1be8] sm:$0xff]
    %v998 = vld [vmem:[#allocation5 + $0x1bf0] sm:$0xff]
    %v999 = vld [vmem:[#allocation5 + $0x1bf8] sm:$0xff]
    %v1000 = vld [vmem:[#allocation7] sm:$0xff]
    %v1897 = vunpack.c.l.b16 %v104
    %v1898 = vunpack.c.h.b16 %v104
    %v1899 = vunpack.c.l.b16 %v105
    %v1900 = vunpack.c.h.b16 %v105
    %v1901 = vunpack.c.l.b16 %v106
    %v1902 = vunpack.c.h.b16 %v106
    %v1903 = vunpack.c.l.b16 %v107
    %v1904 = vunpack.c.h.b16 %v107
    %v1905 = vunpack.c.l.b16 %v108
    %v1906 = vunpack.c.h.b16 %v108
    %v1907 = vunpack.c.l.b16 %v109
    %v1908 = vunpack.c.h.b16 %v109
    %v1909 = vunpack.c.l.b16 %v110
    %v1910 = vunpack.c.h.b16 %v110
    %v1911 = vunpack.c.l.b16 %v111
    %v1912 = vunpack.c.h.b16 %v111
    %v1913 = vunpack.c.l.b16 %v112
    %v1914 = vunpack.c.h.b16 %v112
    %v1915 = vunpack.c.l.b16 %v113
    %v1916 = vunpack.c.h.b16 %v113
    %v1917 = vunpack.c.l.b16 %v114
    %v1918 = vunpack.c.h.b16 %v114
    %v1919 = vunpack.c.l.b16 %v115
    %v1920 = vunpack.c.h.b16 %v115
    %v1921 = vunpack.c.l.b16 %v116
    %v1922 = vunpack.c.h.b16 %v116
    %v1923 = vunpack.c.l.b16 %v117
    %v1924 = vunpack.c.h.b16 %v117
    %v1925 = vunpack.c.l.b16 %v118
    %v1926 = vunpack.c.h.b16 %v118
    %v1927 = vunpack.c.l.b16 %v119
    %v1928 = vunpack.c.h.b16 %v119
    %v1929 = vunpack.c.l.b16 %v120
    %v1930 = vunpack.c.h.b16 %v120
    %v1931 = vunpack.c.l.b16 %v121
    %v1932 = vunpack.c.h.b16 %v121
    %v1933 = vunpack.c.l.b16 %v122
    %v1934 = vunpack.c.h.b16 %v122
    %v1935 = vunpack.c.l.b16 %v123
    %v1936 = vunpack.c.h.b16 %v123
    %v1937 = vunpack.c.l.b16 %v124
    %v1938 = vunpack.c.h.b16 %v124
    %v1939 = vunpack.c.l.b16 %v125
    %v1940 = vunpack.c.h.b16 %v125
    %v1941 = vunpack.c.l.b16 %v126
    %v1942 = vunpack.c.h.b16 %v126
    %v1943 = vunpack.c.l.b16 %v127
    %v1944 = vunpack.c.h.b16 %v127
    %v1945 = vunpack.c.l.b16 %v128
    %v1946 = vunpack.c.h.b16 %v128
    %v1947 = vunpack.c.l.b16 %v129
    %v1948 = vunpack.c.h.b16 %v129
    %v1949 = vunpack.c.l.b16 %v130
    %v1950 = vunpack.c.h.b16 %v130
    %v1951 = vunpack.c.l.b16 %v131
    %v1952 = vunpack.c.h.b16 %v131
    %v1953 = vunpack.c.l.b16 %v132
    %v1954 = vunpack.c.h.b16 %v132
    %v1955 = vunpack.c.l.b16 %v133
    %v1956 = vunpack.c.h.b16 %v133
    %v1957 = vunpack.c.l.b16 %v134
    %v1958 = vunpack.c.h.b16 %v134
    %v1959 = vunpack.c.l.b16 %v135
    %v1960 = vunpack.c.h.b16 %v135
    %v1961 = vunpack.c.l.b16 %v136
    %v1962 = vunpack.c.h.b16 %v136
    %v1963 = vunpack.c.l.b16 %v137
    %v1964 = vunpack.c.h.b16 %v137
    %v1965 = vunpack.c.l.b16 %v138
    %v1966 = vunpack.c.h.b16 %v138
    %v1967 = vunpack.c.l.b16 %v139
    %v1968 = vunpack.c.h.b16 %v139
    %v1969 = vunpack.c.l.b16 %v140
    %v1970 = vunpack.c.h.b16 %v140
    %v1971 = vunpack.c.l.b16 %v141
    %v1972 = vunpack.c.h.b16 %v141
    %v1973 = vunpack.c.l.b16 %v142
    %v1974 = vunpack.c.h.b16 %v142
    %v1975 = vunpack.c.l.b16 %v143
    %v1976 = vunpack.c.h.b16 %v143
    %v1977 = vunpack.c.l.b16 %v144
    %v1978 = vunpack.c.h.b16 %v144
    %v1979 = vunpack.c.l.b16 %v145
    %v1980 = vunpack.c.h.b16 %v145
    %v1981 = vunpack.c.l.b16 %v146
    %v1982 = vunpack.c.h.b16 %v146
    %v1983 = vunpack.c.l.b16 %v147
    %v1984 = vunpack.c.h.b16 %v147
    %v1985 = vunpack.c.l.b16 %v148
    %v1986 = vunpack.c.h.b16 %v148
    %v1987 = vunpack.c.l.b16 %v149
    %v1988 = vunpack.c.h.b16 %v149
    %v1989 = vunpack.c.l.b16 %v150
    %v1990 = vunpack.c.h.b16 %v150
    %v1991 = vunpack.c.l.b16 %v151
    %v1992 = vunpack.c.h.b16 %v151
    %v1993 = vunpack.c.l.b16 %v152
    %v1994 = vunpack.c.h.b16 %v152
    %v1995 = vunpack.c.l.b16 %v153
    %v1996 = vunpack.c.h.b16 %v153
    %v1997 = vunpack.c.l.b16 %v154
    %v1998 = vunpack.c.h.b16 %v154
    %v1999 = vunpack.c.l.b16 %v155
    %v2000 = vunpack.c.h.b16 %v155
    %v2001 = vunpack.c.l.b16 %v156
    %v2002 = vunpack.c.h.b16 %v156
    %v2003 = vunpack.c.l.b16 %v157
    %v2004 = vunpack.c.h.b16 %v157
    %v2005 = vunpack.c.l.b16 %v158
    %v2006 = vunpack.c.h.b16 %v158
    %v2007 = vunpack.c.l.b16 %v159
    %v2008 = vunpack.c.h.b16 %v159
    %v2009 = vunpack.c.l.b16 %v160
    %v2010 = vunpack.c.h.b16 %v160
    %v2011 = vunpack.c.l.b16 %v161
    %v2012 = vunpack.c.h.b16 %v161
    %v2013 = vunpack.c.l.b16 %v162
    %v2014 = vunpack.c.h.b16 %v162
    %v2015 = vunpack.c.l.b16 %v163
    %v2016 = vunpack.c.h.b16 %v163
    %v2017 = vunpack.c.l.b16 %v164
    %v2018 = vunpack.c.h.b16 %v164
    %v2019 = vunpack.c.l.b16 %v165
    %v2020 = vunpack.c.h.b16 %v165
    %v2021 = vunpack.c.l.b16 %v166
    %v2022 = vunpack.c.h.b16 %v166
    %v2023 = vunpack.c.l.b16 %v167
    %v2024 = vunpack.c.h.b16 %v167
    %v2025 = vunpack.c.l.b16 %v168
    %v2026 = vunpack.c.h.b16 %v168
    %v2027 = vunpack.c.l.b16 %v169
    %v2028 = vunpack.c.h.b16 %v169
    %v2029 = vunpack.c.l.b16 %v170
    %v2030 = vunpack.c.h.b16 %v170
    %v2031 = vunpack.c.l.b16 %v171
    %v2032 = vunpack.c.h.b16 %v171
    %v2033 = vunpack.c.l.b16 %v172
    %v2034 = vunpack.c.h.b16 %v172
    %v2035 = vunpack.c.l.b16 %v173
    %v2036 = vunpack.c.h.b16 %v173
    %v2037 = vunpack.c.l.b16 %v174
    %v2038 = vunpack.c.h.b16 %v174
    %v2039 = vunpack.c.l.b16 %v175
    %v2040 = vunpack.c.h.b16 %v175
    %v2041 = vunpack.c.l.b16 %v176
    %v2042 = vunpack.c.h.b16 %v176
    %v2043 = vunpack.c.l.b16 %v177
    %v2044 = vunpack.c.h.b16 %v177
    %v2045 = vunpack.c.l.b16 %v178
    %v2046 = vunpack.c.h.b16 %v178
    %v2047 = vunpack.c.l.b16 %v179
    %v2048 = vunpack.c.h.b16 %v179
    %v2049 = vunpack.c.l.b16 %v180
    %v2050 = vunpack.c.h.b16 %v180
    %v2051 = vunpack.c.l.b16 %v181
    %v2052 = vunpack.c.h.b16 %v181
    %v2053 = vunpack.c.l.b16 %v182
    %v2054 = vunpack.c.h.b16 %v182
    %v2055 = vunpack.c.l.b16 %v183
    %v2056 = vunpack.c.h.b16 %v183
    %v2057 = vunpack.c.l.b16 %v184
    %v2058 = vunpack.c.h.b16 %v184
    %v2059 = vunpack.c.l.b16 %v185
    %v2060 = vunpack.c.h.b16 %v185
    %v2061 = vunpack.c.l.b16 %v186
    %v2062 = vunpack.c.h.b16 %v186
    %v2063 = vunpack.c.l.b16 %v187
    %v2064 = vunpack.c.h.b16 %v187
    %v2065 = vunpack.c.l.b16 %v188
    %v2066 = vunpack.c.h.b16 %v188
    %v2067 = vunpack.c.l.b16 %v189
    %v2068 = vunpack.c.h.b16 %v189
    %v2069 = vunpack.c.l.b16 %v190
    %v2070 = vunpack.c.h.b16 %v190
    %v2071 = vunpack.c.l.b16 %v191
    %v2072 = vunpack.c.h.b16 %v191
    %v2073 = vunpack.c.l.b16 %v192
    %v2074 = vunpack.c.h.b16 %v192
    %v2075 = vunpack.c.l.b16 %v193
    %v2076 = vunpack.c.h.b16 %v193
    %v2077 = vunpack.c.l.b16 %v194
    %v2078 = vunpack.c.h.b16 %v194
    %v2079 = vunpack.c.l.b16 %v195
    %v2080 = vunpack.c.h.b16 %v195
    %v2081 = vunpack.c.l.b16 %v196
    %v2082 = vunpack.c.h.b16 %v196
    %v2083 = vunpack.c.l.b16 %v197
    %v2084 = vunpack.c.h.b16 %v197
    %v2085 = vunpack.c.l.b16 %v198
    %v2086 = vunpack.c.h.b16 %v198
    %v2087 = vunpack.c.l.b16 %v199
    %v2088 = vunpack.c.h.b16 %v199
    %v2089 = vunpack.c.l.b16 %v200
    %v2090 = vunpack.c.h.b16 %v200
    %v2091 = vunpack.c.l.b16 %v201
    %v2092 = vunpack.c.h.b16 %v201
    %v2093 = vunpack.c.l.b16 %v202
    %v2094 = vunpack.c.h.b16 %v202
    %v2095 = vunpack.c.l.b16 %v203
    %v2096 = vunpack.c.h.b16 %v203
    %v2097 = vunpack.c.l.b16 %v204
    %v2098 = vunpack.c.h.b16 %v204
    %v2099 = vunpack.c.l.b16 %v205
    %v2100 = vunpack.c.h.b16 %v205
    %v2101 = vunpack.c.l.b16 %v206
    %v2102 = vunpack.c.h.b16 %v206
    %v2103 = vunpack.c.l.b16 %v207
    %v2104 = vunpack.c.h.b16 %v207
    %v2105 = vunpack.c.l.b16 %v208
    %v2106 = vunpack.c.h.b16 %v208
    %v2107 = vunpack.c.l.b16 %v209
    %v2108 = vunpack.c.h.b16 %v209
    %v2109 = vunpack.c.l.b16 %v210
    %v2110 = vunpack.c.h.b16 %v210
    %v2111 = vunpack.c.l.b16 %v211
    %v2112 = vunpack.c.h.b16 %v211
    %v2113 = vunpack.c.l.b16 %v212
    %v2114 = vunpack.c.h.b16 %v212
    %v2115 = vunpack.c.l.b16 %v213
    %v2116 = vunpack.c.h.b16 %v213
    %v2117 = vunpack.c.l.b16 %v214
    %v2118 = vunpack.c.h.b16 %v214
    %v2119 = vunpack.c.l.b16 %v215
    %v2120 = vunpack.c.h.b16 %v215
    %v2121 = vunpack.c.l.b16 %v216
    %v2122 = vunpack.c.h.b16 %v216
    %v2123 = vunpack.c.l.b16 %v217
    %v2124 = vunpack.c.h.b16 %v217
    %v2125 = vunpack.c.l.b16 %v218
    %v2126 = vunpack.c.h.b16 %v218
    %v2127 = vunpack.c.l.b16 %v219
    %v2128 = vunpack.c.h.b16 %v219
    %v2129 = vunpack.c.l.b16 %v220
    %v2130 = vunpack.c.h.b16 %v220
    %v2131 = vunpack.c.l.b16 %v221
    %v2132 = vunpack.c.h.b16 %v221
    %v2133 = vunpack.c.l.b16 %v222
    %v2134 = vunpack.c.h.b16 %v222
    %v2135 = vunpack.c.l.b16 %v223
    %v2136 = vunpack.c.h.b16 %v223
    %v2137 = vunpack.c.l.b16 %v224
    %v2138 = vunpack.c.h.b16 %v224
    %v2139 = vunpack.c.l.b16 %v225
    %v2140 = vunpack.c.h.b16 %v225
    %v2141 = vunpack.c.l.b16 %v226
    %v2142 = vunpack.c.h.b16 %v226
    %v2143 = vunpack.c.l.b16 %v227
    %v2144 = vunpack.c.h.b16 %v227
    %v2145 = vunpack.c.l.b16 %v228
    %v2146 = vunpack.c.h.b16 %v228
    %v2147 = vunpack.c.l.b16 %v229
    %v2148 = vunpack.c.h.b16 %v229
    %v2149 = vunpack.c.l.b16 %v230
    %v2150 = vunpack.c.h.b16 %v230
    %v2151 = vunpack.c.l.b16 %v231
    %v2152 = vunpack.c.h.b16 %v231
    %v2153 = vunpack.c.l.b16 %v232
    %v2154 = vunpack.c.h.b16 %v232
    %v2155 = vunpack.c.l.b16 %v233
    %v2156 = vunpack.c.h.b16 %v233
    %v2157 = vunpack.c.l.b16 %v234
    %v2158 = vunpack.c.h.b16 %v234
    %v2159 = vunpack.c.l.b16 %v235
    %v2160 = vunpack.c.h.b16 %v235
    %v2161 = vunpack.c.l.b16 %v236
    %v2162 = vunpack.c.h.b16 %v236
    %v2163 = vunpack.c.l.b16 %v237
    %v2164 = vunpack.c.h.b16 %v237
    %v2165 = vunpack.c.l.b16 %v238
    %v2166 = vunpack.c.h.b16 %v238
    %v2167 = vunpack.c.l.b16 %v239
    %v2168 = vunpack.c.h.b16 %v239
    %v2169 = vunpack.c.l.b16 %v240
    %v2170 = vunpack.c.h.b16 %v240
    %v2171 = vunpack.c.l.b16 %v241
    %v2172 = vunpack.c.h.b16 %v241
    %v2173 = vunpack.c.l.b16 %v242
    %v2174 = vunpack.c.h.b16 %v242
    %v2175 = vunpack.c.l.b16 %v243
    %v2176 = vunpack.c.h.b16 %v243
    %v2177 = vunpack.c.l.b16 %v244
    %v2178 = vunpack.c.h.b16 %v244
    %v2179 = vunpack.c.l.b16 %v245
    %v2180 = vunpack.c.h.b16 %v245
    %v2181 = vunpack.c.l.b16 %v246
    %v2182 = vunpack.c.h.b16 %v246
    %v2183 = vunpack.c.l.b16 %v247
    %v2184 = vunpack.c.h.b16 %v247
    %v2185 = vunpack.c.l.b16 %v248
    %v2186 = vunpack.c.h.b16 %v248
    %v2187 = vunpack.c.l.b16 %v249
    %v2188 = vunpack.c.h.b16 %v249
    %v2189 = vunpack.c.l.b16 %v250
    %v2190 = vunpack.c.h.b16 %v250
    %v2191 = vunpack.c.l.b16 %v251
    %v2192 = vunpack.c.h.b16 %v251
    %v2193 = vunpack.c.l.b16 %v252
    %v2194 = vunpack.c.h.b16 %v252
    %v2195 = vunpack.c.l.b16 %v253
    %v2196 = vunpack.c.h.b16 %v253
    %v2197 = vunpack.c.l.b16 %v254
    %v2198 = vunpack.c.h.b16 %v254
    %v2199 = vunpack.c.l.b16 %v255
    %v2200 = vunpack.c.h.b16 %v255
    %v2201 = vunpack.c.l.b16 %v256
    %v2202 = vunpack.c.h.b16 %v256
    %v2203 = vunpack.c.l.b16 %v257
    %v2204 = vunpack.c.h.b16 %v257
    %v2205 = vunpack.c.l.b16 %v258
    %v2206 = vunpack.c.h.b16 %v258
    %v2207 = vunpack.c.l.b16 %v259
    %v2208 = vunpack.c.h.b16 %v259
    %v2209 = vunpack.c.l.b16 %v260
    %v2210 = vunpack.c.h.b16 %v260
    %v2211 = vunpack.c.l.b16 %v261
    %v2212 = vunpack.c.h.b16 %v261
    %v2213 = vunpack.c.l.b16 %v262
    %v2214 = vunpack.c.h.b16 %v262
    %v2215 = vunpack.c.l.b16 %v263
    %v2216 = vunpack.c.h.b16 %v263
    %v2217 = vunpack.c.l.b16 %v264
    %v2218 = vunpack.c.h.b16 %v264
    %v2219 = vunpack.c.l.b16 %v265
    %v2220 = vunpack.c.h.b16 %v265
    %v2221 = vunpack.c.l.b16 %v266
    %v2222 = vunpack.c.h.b16 %v266
    %v2223 = vunpack.c.l.b16 %v267
    %v2224 = vunpack.c.h.b16 %v267
    %v2225 = vunpack.c.l.b16 %v268
    %v2226 = vunpack.c.h.b16 %v268
    %v2227 = vunpack.c.l.b16 %v269
    %v2228 = vunpack.c.h.b16 %v269
    %v2229 = vunpack.c.l.b16 %v270
    %v2230 = vunpack.c.h.b16 %v270
    %v2231 = vunpack.c.l.b16 %v271
    %v2232 = vunpack.c.h.b16 %v271
    %v2233 = vunpack.c.l.b16 %v272
    %v2234 = vunpack.c.h.b16 %v272
    %v2235 = vunpack.c.l.b16 %v273
    %v2236 = vunpack.c.h.b16 %v273
    %v2237 = vunpack.c.l.b16 %v274
    %v2238 = vunpack.c.h.b16 %v274
    %v2239 = vunpack.c.l.b16 %v275
    %v2240 = vunpack.c.h.b16 %v275
    %v2241 = vunpack.c.l.b16 %v276
    %v2242 = vunpack.c.h.b16 %v276
    %v2243 = vunpack.c.l.b16 %v277
    %v2244 = vunpack.c.h.b16 %v277
    %v2245 = vunpack.c.l.b16 %v278
    %v2246 = vunpack.c.h.b16 %v278
    %v2247 = vunpack.c.l.b16 %v279
    %v2248 = vunpack.c.h.b16 %v279
    %v2249 = vunpack.c.l.b16 %v280
    %v2250 = vunpack.c.h.b16 %v280
    %v2251 = vunpack.c.l.b16 %v281
    %v2252 = vunpack.c.h.b16 %v281
    %v2253 = vunpack.c.l.b16 %v282
    %v2254 = vunpack.c.h.b16 %v282
    %v2255 = vunpack.c.l.b16 %v283
    %v2256 = vunpack.c.h.b16 %v283
    %v2257 = vunpack.c.l.b16 %v284
    %v2258 = vunpack.c.h.b16 %v284
    %v2259 = vunpack.c.l.b16 %v285
    %v2260 = vunpack.c.h.b16 %v285
    %v2261 = vunpack.c.l.b16 %v286
    %v2262 = vunpack.c.h.b16 %v286
    %v2263 = vunpack.c.l.b16 %v287
    %v2264 = vunpack.c.h.b16 %v287
    %v2265 = vunpack.c.l.b16 %v288
    %v2266 = vunpack.c.h.b16 %v288
    %v2267 = vunpack.c.l.b16 %v289
    %v2268 = vunpack.c.h.b16 %v289
    %v2269 = vunpack.c.l.b16 %v290
    %v2270 = vunpack.c.h.b16 %v290
    %v2271 = vunpack.c.l.b16 %v291
    %v2272 = vunpack.c.h.b16 %v291
    %v2273 = vunpack.c.l.b16 %v292
    %v2274 = vunpack.c.h.b16 %v292
    %v2275 = vunpack.c.l.b16 %v293
    %v2276 = vunpack.c.h.b16 %v293
    %v2277 = vunpack.c.l.b16 %v294
    %v2278 = vunpack.c.h.b16 %v294
    %v2279 = vunpack.c.l.b16 %v295
    %v2280 = vunpack.c.h.b16 %v295
    %v2281 = vunpack.c.l.b16 %v296
    %v2282 = vunpack.c.h.b16 %v296
    %v2283 = vunpack.c.l.b16 %v297
    %v2284 = vunpack.c.h.b16 %v297
    %v2285 = vunpack.c.l.b16 %v298
    %v2286 = vunpack.c.h.b16 %v298
    %v2287 = vunpack.c.l.b16 %v299
    %v2288 = vunpack.c.h.b16 %v299
    %v2289 = vunpack.c.l.b16 %v300
    %v2290 = vunpack.c.h.b16 %v300
    %v2291 = vunpack.c.l.b16 %v301
    %v2292 = vunpack.c.h.b16 %v301
    %v2293 = vunpack.c.l.b16 %v302
    %v2294 = vunpack.c.h.b16 %v302
    %v2295 = vunpack.c.l.b16 %v303
    %v2296 = vunpack.c.h.b16 %v303
    %v2297 = vunpack.c.l.b16 %v304
    %v2298 = vunpack.c.h.b16 %v304
    %v2299 = vunpack.c.l.b16 %v305
    %v2300 = vunpack.c.h.b16 %v305
    %v2301 = vunpack.c.l.b16 %v306
    %v2302 = vunpack.c.h.b16 %v306
    %v2303 = vunpack.c.l.b16 %v307
    %v2304 = vunpack.c.h.b16 %v307
    %v2305 = vunpack.c.l.b16 %v308
    %v2306 = vunpack.c.h.b16 %v308
    %v2307 = vunpack.c.l.b16 %v309
    %v2308 = vunpack.c.h.b16 %v309
    %v2309 = vunpack.c.l.b16 %v310
    %v2310 = vunpack.c.h.b16 %v310
    %v2311 = vunpack.c.l.b16 %v311
    %v2312 = vunpack.c.h.b16 %v311
    %v2313 = vunpack.c.l.b16 %v312
    %v2314 = vunpack.c.h.b16 %v312
    %v2315 = vunpack.c.l.b16 %v313
    %v2316 = vunpack.c.h.b16 %v313
    %v2317 = vunpack.c.l.b16 %v314
    %v2318 = vunpack.c.h.b16 %v314
    %v2319 = vunpack.c.l.b16 %v315
    %v2320 = vunpack.c.h.b16 %v315
    %v2321 = vunpack.c.l.b16 %v316
    %v2322 = vunpack.c.h.b16 %v316
    %v2323 = vunpack.c.l.b16 %v317
    %v2324 = vunpack.c.h.b16 %v317
    %v2325 = vunpack.c.l.b16 %v318
    %v2326 = vunpack.c.h.b16 %v318
    %v2327 = vunpack.c.l.b16 %v319
    %v2328 = vunpack.c.h.b16 %v319
    %v2329 = vunpack.c.l.b16 %v320
    %v2330 = vunpack.c.h.b16 %v320
    %v2331 = vunpack.c.l.b16 %v321
    %v2332 = vunpack.c.h.b16 %v321
    %v2333 = vunpack.c.l.b16 %v322
    %v2334 = vunpack.c.h.b16 %v322
    %v2335 = vunpack.c.l.b16 %v323
    %v2336 = vunpack.c.h.b16 %v323
    %v2337 = vunpack.c.l.b16 %v324
    %v2338 = vunpack.c.h.b16 %v324
    %v2339 = vunpack.c.l.b16 %v325
    %v2340 = vunpack.c.h.b16 %v325
    %v2341 = vunpack.c.l.b16 %v326
    %v2342 = vunpack.c.h.b16 %v326
    %v2343 = vunpack.c.l.b16 %v327
    %v2344 = vunpack.c.h.b16 %v327
    %v2345 = vunpack.c.l.b16 %v328
    %v2346 = vunpack.c.h.b16 %v328
    %v2347 = vunpack.c.l.b16 %v329
    %v2348 = vunpack.c.h.b16 %v329
    %v2349 = vunpack.c.l.b16 %v330
    %v2350 = vunpack.c.h.b16 %v330
    %v2351 = vunpack.c.l.b16 %v331
    %v2352 = vunpack.c.h.b16 %v331
    %v2353 = vunpack.c.l.b16 %v332
    %v2354 = vunpack.c.h.b16 %v332
    %v2355 = vunpack.c.l.b16 %v333
    %v2356 = vunpack.c.h.b16 %v333
    %v2357 = vunpack.c.l.b16 %v334
    %v2358 = vunpack.c.h.b16 %v334
    %v2359 = vunpack.c.l.b16 %v335
    %v2360 = vunpack.c.h.b16 %v335
    %v2361 = vunpack.c.l.b16 %v336
    %v2362 = vunpack.c.h.b16 %v336
    %v2363 = vunpack.c.l.b16 %v337
    %v2364 = vunpack.c.h.b16 %v337
    %v2365 = vunpack.c.l.b16 %v338
    %v2366 = vunpack.c.h.b16 %v338
    %v2367 = vunpack.c.l.b16 %v339
    %v2368 = vunpack.c.h.b16 %v339
    %v2369 = vunpack.c.l.b16 %v340
    %v2370 = vunpack.c.h.b16 %v340
    %v2371 = vunpack.c.l.b16 %v341
    %v2372 = vunpack.c.h.b16 %v341
    %v2373 = vunpack.c.l.b16 %v342
    %v2374 = vunpack.c.h.b16 %v342
    %v2375 = vunpack.c.l.b16 %v343
    %v2376 = vunpack.c.h.b16 %v343
    %v2377 = vunpack.c.l.b16 %v344
    %v2378 = vunpack.c.h.b16 %v344
    %v2379 = vunpack.c.l.b16 %v345
    %v2380 = vunpack.c.h.b16 %v345
    %v2381 = vunpack.c.l.b16 %v346
    %v2382 = vunpack.c.h.b16 %v346
    %v2383 = vunpack.c.l.b16 %v347
    %v2384 = vunpack.c.h.b16 %v347
    %v2385 = vunpack.c.l.b16 %v348
    %v2386 = vunpack.c.h.b16 %v348
    %v2387 = vunpack.c.l.b16 %v349
    %v2388 = vunpack.c.h.b16 %v349
    %v2389 = vunpack.c.l.b16 %v350
    %v2390 = vunpack.c.h.b16 %v350
    %v2391 = vunpack.c.l.b16 %v351
    %v2392 = vunpack.c.h.b16 %v351
    %v2393 = vunpack.c.l.b16 %v352
    %v2394 = vunpack.c.h.b16 %v352
    %v2395 = vunpack.c.l.b16 %v353
    %v2396 = vunpack.c.h.b16 %v353
    %v2397 = vunpack.c.l.b16 %v354
    %v2398 = vunpack.c.h.b16 %v354
    %v2399 = vunpack.c.l.b16 %v355
    %v2400 = vunpack.c.h.b16 %v355
    %v2401 = vunpack.c.l.b16 %v356
    %v2402 = vunpack.c.h.b16 %v356
    %v2403 = vunpack.c.l.b16 %v357
    %v2404 = vunpack.c.h.b16 %v357
    %v2405 = vunpack.c.l.b16 %v358
    %v2406 = vunpack.c.h.b16 %v358
    %v2407 = vunpack.c.l.b16 %v359
    %v2408 = vunpack.c.h.b16 %v359
    %v2409 = vunpack.c.l.b16 %v360
    %v2410 = vunpack.c.h.b16 %v360
    %v2411 = vunpack.c.l.b16 %v361
    %v2412 = vunpack.c.h.b16 %v361
    %v2413 = vunpack.c.l.b16 %v362
    %v2414 = vunpack.c.h.b16 %v362
    %v2415 = vunpack.c.l.b16 %v363
    %v2416 = vunpack.c.h.b16 %v363
    %v2417 = vunpack.c.l.b16 %v364
    %v2418 = vunpack.c.h.b16 %v364
    %v2419 = vunpack.c.l.b16 %v365
    %v2420 = vunpack.c.h.b16 %v365
    %v2421 = vunpack.c.l.b16 %v366
    %v2422 = vunpack.c.h.b16 %v366
    %v2423 = vunpack.c.l.b16 %v367
    %v2424 = vunpack.c.h.b16 %v367
    %v2425 = vunpack.c.l.b16 %v368
    %v2426 = vunpack.c.h.b16 %v368
    %v2427 = vunpack.c.l.b16 %v369
    %v2428 = vunpack.c.h.b16 %v369
    %v2429 = vunpack.c.l.b16 %v370
    %v2430 = vunpack.c.h.b16 %v370
    %v2431 = vunpack.c.l.b16 %v371
    %v2432 = vunpack.c.h.b16 %v371
    %v2433 = vunpack.c.l.b16 %v372
    %v2434 = vunpack.c.h.b16 %v372
    %v2435 = vunpack.c.l.b16 %v373
    %v2436 = vunpack.c.h.b16 %v373
    %v2437 = vunpack.c.l.b16 %v374
    %v2438 = vunpack.c.h.b16 %v374
    %v2439 = vunpack.c.l.b16 %v375
    %v2440 = vunpack.c.h.b16 %v375
    %v2441 = vunpack.c.l.b16 %v376
    %v2442 = vunpack.c.h.b16 %v376
    %v2443 = vunpack.c.l.b16 %v377
    %v2444 = vunpack.c.h.b16 %v377
    %v2445 = vunpack.c.l.b16 %v378
    %v2446 = vunpack.c.h.b16 %v378
    %v2447 = vunpack.c.l.b16 %v379
    %v2448 = vunpack.c.h.b16 %v379
    %v2449 = vunpack.c.l.b16 %v380
    %v2450 = vunpack.c.h.b16 %v380
    %v2451 = vunpack.c.l.b16 %v381
    %v2452 = vunpack.c.h.b16 %v381
    %v2453 = vunpack.c.l.b16 %v382
    %v2454 = vunpack.c.h.b16 %v382
    %v2455 = vunpack.c.l.b16 %v383
    %v2456 = vunpack.c.h.b16 %v383
    %v2457 = vunpack.c.l.b16 %v384
    %v2458 = vunpack.c.h.b16 %v384
    %v2459 = vunpack.c.l.b16 %v385
    %v2460 = vunpack.c.h.b16 %v385
    %v2461 = vunpack.c.l.b16 %v386
    %v2462 = vunpack.c.h.b16 %v386
    %v2463 = vunpack.c.l.b16 %v387
    %v2464 = vunpack.c.h.b16 %v387
    %v2465 = vunpack.c.l.b16 %v388
    %v2466 = vunpack.c.h.b16 %v388
    %v2467 = vunpack.c.l.b16 %v389
    %v2468 = vunpack.c.h.b16 %v389
    %v2469 = vunpack.c.l.b16 %v390
    %v2470 = vunpack.c.h.b16 %v390
    %v2471 = vunpack.c.l.b16 %v391
    %v2472 = vunpack.c.h.b16 %v391
    %v2473 = vunpack.c.l.b16 %v392
    %v2474 = vunpack.c.h.b16 %v392
    %v2475 = vunpack.c.l.b16 %v393
    %v2476 = vunpack.c.h.b16 %v393
    %v2477 = vunpack.c.l.b16 %v394
    %v2478 = vunpack.c.h.b16 %v394
    %v2479 = vunpack.c.l.b16 %v395
    %v2480 = vunpack.c.h.b16 %v395
    %v2481 = vunpack.c.l.b16 %v396
    %v2482 = vunpack.c.h.b16 %v396
    %v2483 = vunpack.c.l.b16 %v397
    %v2484 = vunpack.c.h.b16 %v397
    %v2485 = vunpack.c.l.b16 %v398
    %v2486 = vunpack.c.h.b16 %v398
    %v2487 = vunpack.c.l.b16 %v399
    %v2488 = vunpack.c.h.b16 %v399
    %v2489 = vunpack.c.l.b16 %v400
    %v2490 = vunpack.c.h.b16 %v400
    %v2491 = vunpack.c.l.b16 %v401
    %v2492 = vunpack.c.h.b16 %v401
    %v2493 = vunpack.c.l.b16 %v402
    %v2494 = vunpack.c.h.b16 %v402
    %v2495 = vunpack.c.l.b16 %v403
    %v2496 = vunpack.c.h.b16 %v403
    %v2497 = vunpack.c.l.b16 %v404
    %v2498 = vunpack.c.h.b16 %v404
    %v2499 = vunpack.c.l.b16 %v405
    %v2500 = vunpack.c.h.b16 %v405
    %v2501 = vunpack.c.l.b16 %v406
    %v2502 = vunpack.c.h.b16 %v406
    %v2503 = vunpack.c.l.b16 %v407
    %v2504 = vunpack.c.h.b16 %v407
    %v2505 = vunpack.c.l.b16 %v408
    %v2506 = vunpack.c.h.b16 %v408
    %v2507 = vunpack.c.l.b16 %v409
    %v2508 = vunpack.c.h.b16 %v409
    %v2509 = vunpack.c.l.b16 %v410
    %v2510 = vunpack.c.h.b16 %v410
    %v2511 = vunpack.c.l.b16 %v411
    %v2512 = vunpack.c.h.b16 %v411
    %v2513 = vunpack.c.l.b16 %v412
    %v2514 = vunpack.c.h.b16 %v412
    %v2515 = vunpack.c.l.b16 %v413
    %v2516 = vunpack.c.h.b16 %v413
    %v2517 = vunpack.c.l.b16 %v414
    %v2518 = vunpack.c.h.b16 %v414
    %v2519 = vunpack.c.l.b16 %v415
    %v2520 = vunpack.c.h.b16 %v415
    %v2521 = vunpack.c.l.b16 %v416
    %v2522 = vunpack.c.h.b16 %v416
    %v2523 = vunpack.c.l.b16 %v417
    %v2524 = vunpack.c.h.b16 %v417
    %v2525 = vunpack.c.l.b16 %v418
    %v2526 = vunpack.c.h.b16 %v418
    %v2527 = vunpack.c.l.b16 %v419
    %v2528 = vunpack.c.h.b16 %v419
    %v2529 = vunpack.c.l.b16 %v420
    %v2530 = vunpack.c.h.b16 %v420
    %v2531 = vunpack.c.l.b16 %v421
    %v2532 = vunpack.c.h.b16 %v421
    %v2533 = vunpack.c.l.b16 %v422
    %v2534 = vunpack.c.h.b16 %v422
    %v2535 = vunpack.c.l.b16 %v423
    %v2536 = vunpack.c.h.b16 %v423
    %v2537 = vunpack.c.l.b16 %v424
    %v2538 = vunpack.c.h.b16 %v424
    %v2539 = vunpack.c.l.b16 %v425
    %v2540 = vunpack.c.h.b16 %v425
    %v2541 = vunpack.c.l.b16 %v426
    %v2542 = vunpack.c.h.b16 %v426
    %v2543 = vunpack.c.l.b16 %v427
    %v2544 = vunpack.c.h.b16 %v427
    %v2545 = vunpack.c.l.b16 %v428
    %v2546 = vunpack.c.h.b16 %v428
    %v2547 = vunpack.c.l.b16 %v429
    %v2548 = vunpack.c.h.b16 %v429
    %v2549 = vunpack.c.l.b16 %v430
    %v2550 = vunpack.c.h.b16 %v430
    %v2551 = vunpack.c.l.b16 %v431
    %v2552 = vunpack.c.h.b16 %v431
    %v2553 = vunpack.c.l.b16 %v432
    %v2554 = vunpack.c.h.b16 %v432
    %v2555 = vunpack.c.l.b16 %v433
    %v2556 = vunpack.c.h.b16 %v433
    %v2557 = vunpack.c.l.b16 %v434
    %v2558 = vunpack.c.h.b16 %v434
    %v2559 = vunpack.c.l.b16 %v435
    %v2560 = vunpack.c.h.b16 %v435
    %v2561 = vunpack.c.l.b16 %v436
    %v2562 = vunpack.c.h.b16 %v436
    %v2563 = vunpack.c.l.b16 %v437
    %v2564 = vunpack.c.h.b16 %v437
    %v2565 = vunpack.c.l.b16 %v438
    %v2566 = vunpack.c.h.b16 %v438
    %v2567 = vunpack.c.l.b16 %v439
    %v2568 = vunpack.c.h.b16 %v439
    %v2569 = vunpack.c.l.b16 %v440
    %v2570 = vunpack.c.h.b16 %v440
    %v2571 = vunpack.c.l.b16 %v441
    %v2572 = vunpack.c.h.b16 %v441
    %v2573 = vunpack.c.l.b16 %v442
    %v2574 = vunpack.c.h.b16 %v442
    %v2575 = vunpack.c.l.b16 %v443
    %v2576 = vunpack.c.h.b16 %v443
    %v2577 = vunpack.c.l.b16 %v444
    %v2578 = vunpack.c.h.b16 %v444
    %v2579 = vunpack.c.l.b16 %v445
    %v2580 = vunpack.c.h.b16 %v445
    %v2581 = vunpack.c.l.b16 %v446
    %v2582 = vunpack.c.h.b16 %v446
    %v2583 = vunpack.c.l.b16 %v447
    %v2584 = vunpack.c.h.b16 %v447
    %v2585 = vunpack.c.l.b16 %v448
    %v2586 = vunpack.c.h.b16 %v448
    %v2587 = vunpack.c.l.b16 %v449
    %v2588 = vunpack.c.h.b16 %v449
    %v2589 = vunpack.c.l.b16 %v450
    %v2590 = vunpack.c.h.b16 %v450
    %v2591 = vunpack.c.l.b16 %v451
    %v2592 = vunpack.c.h.b16 %v451
    %v2593 = vunpack.c.l.b16 %v452
    %v2594 = vunpack.c.h.b16 %v452
    %v2595 = vunpack.c.l.b16 %v453
    %v2596 = vunpack.c.h.b16 %v453
    %v2597 = vunpack.c.l.b16 %v454
    %v2598 = vunpack.c.h.b16 %v454
    %v2599 = vunpack.c.l.b16 %v455
    %v2600 = vunpack.c.h.b16 %v455
    %v2601 = vunpack.c.l.b16 %v456
    %v2602 = vunpack.c.h.b16 %v456
    %v2603 = vunpack.c.l.b16 %v457
    %v2604 = vunpack.c.h.b16 %v457
    %v2605 = vunpack.c.l.b16 %v458
    %v2606 = vunpack.c.h.b16 %v458
    %v2607 = vunpack.c.l.b16 %v459
    %v2608 = vunpack.c.h.b16 %v459
    %v2609 = vunpack.c.l.b16 %v460
    %v2610 = vunpack.c.h.b16 %v460
    %v2611 = vunpack.c.l.b16 %v461
    %v2612 = vunpack.c.h.b16 %v461
    %v2613 = vunpack.c.l.b16 %v462
    %v2614 = vunpack.c.h.b16 %v462
    %v2615 = vunpack.c.l.b16 %v463
    %v2616 = vunpack.c.h.b16 %v463
    %v2617 = vunpack.c.l.b16 %v464
    %v2618 = vunpack.c.h.b16 %v464
    %v2619 = vunpack.c.l.b16 %v465
    %v2620 = vunpack.c.h.b16 %v465
    %v2621 = vunpack.c.l.b16 %v466
    %v2622 = vunpack.c.h.b16 %v466
    %v2623 = vunpack.c.l.b16 %v467
    %v2624 = vunpack.c.h.b16 %v467
    %v2625 = vunpack.c.l.b16 %v468
    %v2626 = vunpack.c.h.b16 %v468
    %v2627 = vunpack.c.l.b16 %v469
    %v2628 = vunpack.c.h.b16 %v469
    %v2629 = vunpack.c.l.b16 %v470
    %v2630 = vunpack.c.h.b16 %v470
    %v2631 = vunpack.c.l.b16 %v471
    %v2632 = vunpack.c.h.b16 %v471
    %v2633 = vunpack.c.l.b16 %v472
    %v2634 = vunpack.c.h.b16 %v472
    %v2635 = vunpack.c.l.b16 %v473
    %v2636 = vunpack.c.h.b16 %v473
    %v2637 = vunpack.c.l.b16 %v474
    %v2638 = vunpack.c.h.b16 %v474
    %v2639 = vunpack.c.l.b16 %v475
    %v2640 = vunpack.c.h.b16 %v475
    %v2641 = vunpack.c.l.b16 %v476
    %v2642 = vunpack.c.h.b16 %v476
    %v2643 = vunpack.c.l.b16 %v477
    %v2644 = vunpack.c.h.b16 %v477
    %v2645 = vunpack.c.l.b16 %v478
    %v2646 = vunpack.c.h.b16 %v478
    %v2647 = vunpack.c.l.b16 %v479
    %v2648 = vunpack.c.h.b16 %v479
    %v2649 = vunpack.c.l.b16 %v480
    %v2650 = vunpack.c.h.b16 %v480
    %v2651 = vunpack.c.l.b16 %v481
    %v2652 = vunpack.c.h.b16 %v481
    %v2653 = vunpack.c.l.b16 %v482
    %v2654 = vunpack.c.h.b16 %v482
    %v2655 = vunpack.c.l.b16 %v483
    %v2656 = vunpack.c.h.b16 %v483
    %v2657 = vunpack.c.l.b16 %v484
    %v2658 = vunpack.c.h.b16 %v484
    %v2659 = vunpack.c.l.b16 %v485
    %v2660 = vunpack.c.h.b16 %v485
    %v2661 = vunpack.c.l.b16 %v486
    %v2662 = vunpack.c.h.b16 %v486
    %v2663 = vunpack.c.l.b16 %v487
    %v2664 = vunpack.c.h.b16 %v487
    %v2665 = vunpack.c.l.b16 %v488
    %v2666 = vunpack.c.h.b16 %v488
    %v2667 = vunpack.c.l.b16 %v489
    %v2668 = vunpack.c.h.b16 %v489
    %v2669 = vunpack.c.l.b16 %v490
    %v2670 = vunpack.c.h.b16 %v490
    %v2671 = vunpack.c.l.b16 %v491
    %v2672 = vunpack.c.h.b16 %v491
    %v2673 = vunpack.c.l.b16 %v492
    %v2674 = vunpack.c.h.b16 %v492
    %v2675 = vunpack.c.l.b16 %v493
    %v2676 = vunpack.c.h.b16 %v493
    %v2677 = vunpack.c.l.b16 %v494
    %v2678 = vunpack.c.h.b16 %v494
    %v2679 = vunpack.c.l.b16 %v495
    %v2680 = vunpack.c.h.b16 %v495
    %v2681 = vunpack.c.l.b16 %v496
    %v2682 = vunpack.c.h.b16 %v496
    %v2683 = vunpack.c.l.b16 %v497
    %v2684 = vunpack.c.h.b16 %v497
    %v2685 = vunpack.c.l.b16 %v498
    %v2686 = vunpack.c.h.b16 %v498
    %v2687 = vunpack.c.l.b16 %v499
    %v2688 = vunpack.c.h.b16 %v499
    %v2689 = vunpack.c.l.b16 %v500
    %v2690 = vunpack.c.h.b16 %v500
    %v2691 = vunpack.c.l.b16 %v501
    %v2692 = vunpack.c.h.b16 %v501
    %v2693 = vunpack.c.l.b16 %v502
    %v2694 = vunpack.c.h.b16 %v502
    %v2695 = vunpack.c.l.b16 %v503
    %v2696 = vunpack.c.h.b16 %v503
    %v2697 = vunpack.c.l.b16 %v504
    %v2698 = vunpack.c.h.b16 %v504
    %v2699 = vunpack.c.l.b16 %v505
    %v2700 = vunpack.c.h.b16 %v505
    %v2701 = vunpack.c.l.b16 %v506
    %v2702 = vunpack.c.h.b16 %v506
    %v2703 = vunpack.c.l.b16 %v507
    %v2704 = vunpack.c.h.b16 %v507
    %v2705 = vunpack.c.l.b16 %v508
    %v2706 = vunpack.c.h.b16 %v508
    %v2707 = vunpack.c.l.b16 %v509
    %v2708 = vunpack.c.h.b16 %v509
    %v2709 = vunpack.c.l.b16 %v510
    %v2710 = vunpack.c.h.b16 %v510
    %v2711 = vunpack.c.l.b16 %v511
    %v2712 = vunpack.c.h.b16 %v511
    %v2713 = vunpack.c.l.b16 %v512
    %v2714 = vunpack.c.h.b16 %v512
    %v2715 = vunpack.c.l.b16 %v513
    %v2716 = vunpack.c.h.b16 %v513
    %v2717 = vunpack.c.l.b16 %v514
    %v2718 = vunpack.c.h.b16 %v514
    %v2719 = vunpack.c.l.b16 %v515
    %v2720 = vunpack.c.h.b16 %v515
    %v2721 = vunpack.c.l.b16 %v516
    %v2722 = vunpack.c.h.b16 %v516
    %v2723 = vunpack.c.l.b16 %v517
    %v2724 = vunpack.c.h.b16 %v517
    %v2725 = vunpack.c.l.b16 %v518
    %v2726 = vunpack.c.h.b16 %v518
    %v2727 = vunpack.c.l.b16 %v519
    %v2728 = vunpack.c.h.b16 %v519
    %v2729 = vunpack.c.l.b16 %v520
    %v2730 = vunpack.c.h.b16 %v520
    %v2731 = vunpack.c.l.b16 %v521
    %v2732 = vunpack.c.h.b16 %v521
    %v2733 = vunpack.c.l.b16 %v522
    %v2734 = vunpack.c.h.b16 %v522
    %v2735 = vunpack.c.l.b16 %v523
    %v2736 = vunpack.c.h.b16 %v523
    %v2737 = vunpack.c.l.b16 %v524
    %v2738 = vunpack.c.h.b16 %v524
    %v2739 = vunpack.c.l.b16 %v525
    %v2740 = vunpack.c.h.b16 %v525
    %v2741 = vunpack.c.l.b16 %v526
    %v2742 = vunpack.c.h.b16 %v526
    %v2743 = vunpack.c.l.b16 %v527
    %v2744 = vunpack.c.h.b16 %v527
    %v2745 = vunpack.c.l.b16 %v528
    %v2746 = vunpack.c.h.b16 %v528
    %v2747 = vunpack.c.l.b16 %v529
    %v2748 = vunpack.c.h.b16 %v529
    %v2749 = vunpack.c.l.b16 %v530
    %v2750 = vunpack.c.h.b16 %v530
    %v2751 = vunpack.c.l.b16 %v531
    %v2752 = vunpack.c.h.b16 %v531
    %v2753 = vunpack.c.l.b16 %v532
    %v2754 = vunpack.c.h.b16 %v532
    %v2755 = vunpack.c.l.b16 %v533
    %v2756 = vunpack.c.h.b16 %v533
    %v2757 = vunpack.c.l.b16 %v534
    %v2758 = vunpack.c.h.b16 %v534
    %v2759 = vunpack.c.l.b16 %v535
    %v2760 = vunpack.c.h.b16 %v535
    %v2761 = vunpack.c.l.b16 %v536
    %v2762 = vunpack.c.h.b16 %v536
    %v2763 = vunpack.c.l.b16 %v537
    %v2764 = vunpack.c.h.b16 %v537
    %v2765 = vunpack.c.l.b16 %v538
    %v2766 = vunpack.c.h.b16 %v538
    %v2767 = vunpack.c.l.b16 %v539
    %v2768 = vunpack.c.h.b16 %v539
    %v2769 = vunpack.c.l.b16 %v540
    %v2770 = vunpack.c.h.b16 %v540
    %v2771 = vunpack.c.l.b16 %v541
    %v2772 = vunpack.c.h.b16 %v541
    %v2773 = vunpack.c.l.b16 %v542
    %v2774 = vunpack.c.h.b16 %v542
    %v2775 = vunpack.c.l.b16 %v543
    %v2776 = vunpack.c.h.b16 %v543
    %v2777 = vunpack.c.l.b16 %v544
    %v2778 = vunpack.c.h.b16 %v544
    %v2779 = vunpack.c.l.b16 %v545
    %v2780 = vunpack.c.h.b16 %v545
    %v2781 = vunpack.c.l.b16 %v546
    %v2782 = vunpack.c.h.b16 %v546
    %v2783 = vunpack.c.l.b16 %v547
    %v2784 = vunpack.c.h.b16 %v547
    %v2785 = vunpack.c.l.b16 %v548
    %v2786 = vunpack.c.h.b16 %v548
    %v2787 = vunpack.c.l.b16 %v549
    %v2788 = vunpack.c.h.b16 %v549
    %v2789 = vunpack.c.l.b16 %v550
    %v2790 = vunpack.c.h.b16 %v550
    %v2791 = vunpack.c.l.b16 %v551
    %v2792 = vunpack.c.h.b16 %v551
    %v2793 = vunpack.c.l.b16 %v552
    %v2794 = vunpack.c.h.b16 %v552
    %v2795 = vunpack.c.l.b16 %v553
    %v2796 = vunpack.c.h.b16 %v553
    %v2797 = vunpack.c.l.b16 %v554
    %v2798 = vunpack.c.h.b16 %v554
    %v2799 = vunpack.c.l.b16 %v555
    %v2800 = vunpack.c.h.b16 %v555
    %v2801 = vunpack.c.l.b16 %v556
    %v2802 = vunpack.c.h.b16 %v556
    %v2803 = vunpack.c.l.b16 %v557
    %v2804 = vunpack.c.h.b16 %v557
    %v2805 = vunpack.c.l.b16 %v558
    %v2806 = vunpack.c.h.b16 %v558
    %v2807 = vunpack.c.l.b16 %v559
    %v2808 = vunpack.c.h.b16 %v559
    %v2809 = vunpack.c.l.b16 %v560
    %v2810 = vunpack.c.h.b16 %v560
    %v2811 = vunpack.c.l.b16 %v561
    %v2812 = vunpack.c.h.b16 %v561
    %v2813 = vunpack.c.l.b16 %v562
    %v2814 = vunpack.c.h.b16 %v562
    %v2815 = vunpack.c.l.b16 %v563
    %v2816 = vunpack.c.h.b16 %v563
    %v2817 = vunpack.c.l.b16 %v564
    %v2818 = vunpack.c.h.b16 %v564
    %v2819 = vunpack.c.l.b16 %v565
    %v2820 = vunpack.c.h.b16 %v565
    %v2821 = vunpack.c.l.b16 %v566
    %v2822 = vunpack.c.h.b16 %v566
    %v2823 = vunpack.c.l.b16 %v567
    %v2824 = vunpack.c.h.b16 %v567
    %v2825 = vunpack.c.l.b16 %v568
    %v2826 = vunpack.c.h.b16 %v568
    %v2827 = vunpack.c.l.b16 %v569
    %v2828 = vunpack.c.h.b16 %v569
    %v2829 = vunpack.c.l.b16 %v570
    %v2830 = vunpack.c.h.b16 %v570
    %v2831 = vunpack.c.l.b16 %v571
    %v2832 = vunpack.c.h.b16 %v571
    %v2833 = vunpack.c.l.b16 %v572
    %v2834 = vunpack.c.h.b16 %v572
    %v2835 = vunpack.c.l.b16 %v573
    %v2836 = vunpack.c.h.b16 %v573
    %v2837 = vunpack.c.l.b16 %v574
    %v2838 = vunpack.c.h.b16 %v574
    %v2839 = vunpack.c.l.b16 %v575
    %v2840 = vunpack.c.h.b16 %v575
    %v2841 = vunpack.c.l.b16 %v576
    %v2842 = vunpack.c.h.b16 %v576
    %v2843 = vunpack.c.l.b16 %v577
    %v2844 = vunpack.c.h.b16 %v577
    %v2845 = vunpack.c.l.b16 %v578
    %v2846 = vunpack.c.h.b16 %v578
    %v2847 = vunpack.c.l.b16 %v579
    %v2848 = vunpack.c.h.b16 %v579
    %v2849 = vunpack.c.l.b16 %v580
    %v2850 = vunpack.c.h.b16 %v580
    %v2851 = vunpack.c.l.b16 %v581
    %v2852 = vunpack.c.h.b16 %v581
    %v2853 = vunpack.c.l.b16 %v582
    %v2854 = vunpack.c.h.b16 %v582
    %v2855 = vunpack.c.l.b16 %v583
    %v2856 = vunpack.c.h.b16 %v583
    %v2857 = vunpack.c.l.b16 %v584
    %v2858 = vunpack.c.h.b16 %v584
    %v2859 = vunpack.c.l.b16 %v585
    %v2860 = vunpack.c.h.b16 %v585
    %v2861 = vunpack.c.l.b16 %v586
    %v2862 = vunpack.c.h.b16 %v586
    %v2863 = vunpack.c.l.b16 %v587
    %v2864 = vunpack.c.h.b16 %v587
    %v2865 = vunpack.c.l.b16 %v588
    %v2866 = vunpack.c.h.b16 %v588
    %v2867 = vunpack.c.l.b16 %v589
    %v2868 = vunpack.c.h.b16 %v589
    %v2869 = vunpack.c.l.b16 %v590
    %v2870 = vunpack.c.h.b16 %v590
    %v2871 = vunpack.c.l.b16 %v591
    %v2872 = vunpack.c.h.b16 %v591
    %v2873 = vunpack.c.l.b16 %v592
    %v2874 = vunpack.c.h.b16 %v592
    %v2875 = vunpack.c.l.b16 %v593
    %v2876 = vunpack.c.h.b16 %v593
    %v2877 = vunpack.c.l.b16 %v594
    %v2878 = vunpack.c.h.b16 %v594
    %v2879 = vunpack.c.l.b16 %v595
    %v2880 = vunpack.c.h.b16 %v595
    %v2881 = vunpack.c.l.b16 %v596
    %v2882 = vunpack.c.h.b16 %v596
    %v2883 = vunpack.c.l.b16 %v597
    %v2884 = vunpack.c.h.b16 %v597
    %v2885 = vunpack.c.l.b16 %v598
    %v2886 = vunpack.c.h.b16 %v598
    %v2887 = vunpack.c.l.b16 %v599
    %v2888 = vunpack.c.h.b16 %v599
    %v2889 = vunpack.c.l.b16 %v600
    %v2890 = vunpack.c.h.b16 %v600
    %v2891 = vunpack.c.l.b16 %v601
    %v2892 = vunpack.c.h.b16 %v601
    %v2893 = vunpack.c.l.b16 %v602
    %v2894 = vunpack.c.h.b16 %v602
    %v2895 = vunpack.c.l.b16 %v603
    %v2896 = vunpack.c.h.b16 %v603
    %v2897 = vunpack.c.l.b16 %v604
    %v2898 = vunpack.c.h.b16 %v604
    %v2899 = vunpack.c.l.b16 %v605
    %v2900 = vunpack.c.h.b16 %v605
    %v2901 = vunpack.c.l.b16 %v606
    %v2902 = vunpack.c.h.b16 %v606
    %v2903 = vunpack.c.l.b16 %v607
    %v2904 = vunpack.c.h.b16 %v607
    %v2905 = vunpack.c.l.b16 %v608
    %v2906 = vunpack.c.h.b16 %v608
    %v2907 = vunpack.c.l.b16 %v609
    %v2908 = vunpack.c.h.b16 %v609
    %v2909 = vunpack.c.l.b16 %v610
    %v2910 = vunpack.c.h.b16 %v610
    %v2911 = vunpack.c.l.b16 %v611
    %v2912 = vunpack.c.h.b16 %v611
    %v2913 = vunpack.c.l.b16 %v612
    %v2914 = vunpack.c.h.b16 %v612
    %v2915 = vunpack.c.l.b16 %v613
    %v2916 = vunpack.c.h.b16 %v613
    %v2917 = vunpack.c.l.b16 %v614
    %v2918 = vunpack.c.h.b16 %v614
    %v2919 = vunpack.c.l.b16 %v615
    %v2920 = vunpack.c.h.b16 %v615
    %v2921 = vunpack.c.l.b16 %v616
    %v2922 = vunpack.c.h.b16 %v616
    %v2923 = vunpack.c.l.b16 %v617
    %v2924 = vunpack.c.h.b16 %v617
    %v2925 = vunpack.c.l.b16 %v618
    %v2926 = vunpack.c.h.b16 %v618
    %v2927 = vunpack.c.l.b16 %v619
    %v2928 = vunpack.c.h.b16 %v619
    %v2929 = vunpack.c.l.b16 %v620
    %v2930 = vunpack.c.h.b16 %v620
    %v2931 = vunpack.c.l.b16 %v621
    %v2932 = vunpack.c.h.b16 %v621
    %v2933 = vunpack.c.l.b16 %v622
    %v2934 = vunpack.c.h.b16 %v622
    %v2935 = vunpack.c.l.b16 %v623
    %v2936 = vunpack.c.h.b16 %v623
    %v2937 = vunpack.c.l.b16 %v624
    %v2938 = vunpack.c.h.b16 %v624
    %v2939 = vunpack.c.l.b16 %v625
    %v2940 = vunpack.c.h.b16 %v625
    %v2941 = vunpack.c.l.b16 %v626
    %v2942 = vunpack.c.h.b16 %v626
    %v2943 = vunpack.c.l.b16 %v627
    %v2944 = vunpack.c.h.b16 %v627
    %v2945 = vunpack.c.l.b16 %v628
    %v2946 = vunpack.c.h.b16 %v628
    %v2947 = vunpack.c.l.b16 %v629
    %v2948 = vunpack.c.h.b16 %v629
    %v2949 = vunpack.c.l.b16 %v630
    %v2950 = vunpack.c.h.b16 %v630
    %v2951 = vunpack.c.l.b16 %v631
    %v2952 = vunpack.c.h.b16 %v631
    %v2953 = vunpack.c.l.b16 %v632
    %v2954 = vunpack.c.h.b16 %v632
    %v2955 = vunpack.c.l.b16 %v633
    %v2956 = vunpack.c.h.b16 %v633
    %v2957 = vunpack.c.l.b16 %v634
    %v2958 = vunpack.c.h.b16 %v634
    %v2959 = vunpack.c.l.b16 %v635
    %v2960 = vunpack.c.h.b16 %v635
    %v2961 = vunpack.c.l.b16 %v636
    %v2962 = vunpack.c.h.b16 %v636
    %v2963 = vunpack.c.l.b16 %v637
    %v2964 = vunpack.c.h.b16 %v637
    %v2965 = vunpack.c.l.b16 %v638
    %v2966 = vunpack.c.h.b16 %v638
    %v2967 = vunpack.c.l.b16 %v639
    %v2968 = vunpack.c.h.b16 %v639
    %v2969 = vunpack.c.l.b16 %v640
    %v2970 = vunpack.c.h.b16 %v640
    %v2971 = vunpack.c.l.b16 %v641
    %v2972 = vunpack.c.h.b16 %v641
    %v2973 = vunpack.c.l.b16 %v642
    %v2974 = vunpack.c.h.b16 %v642
    %v2975 = vunpack.c.l.b16 %v643
    %v2976 = vunpack.c.h.b16 %v643
    %v2977 = vunpack.c.l.b16 %v644
    %v2978 = vunpack.c.h.b16 %v644
    %v2979 = vunpack.c.l.b16 %v645
    %v2980 = vunpack.c.h.b16 %v645
    %v2981 = vunpack.c.l.b16 %v646
    %v2982 = vunpack.c.h.b16 %v646
    %v2983 = vunpack.c.l.b16 %v647
    %v2984 = vunpack.c.h.b16 %v647
    %v2985 = vunpack.c.l.b16 %v648
    %v2986 = vunpack.c.h.b16 %v648
    %v2987 = vunpack.c.l.b16 %v649
    %v2988 = vunpack.c.h.b16 %v649
    %v2989 = vunpack.c.l.b16 %v650
    %v2990 = vunpack.c.h.b16 %v650
    %v2991 = vunpack.c.l.b16 %v651
    %v2992 = vunpack.c.h.b16 %v651
    %v2993 = vunpack.c.l.b16 %v652
    %v2994 = vunpack.c.h.b16 %v652
    %v2995 = vunpack.c.l.b16 %v653
    %v2996 = vunpack.c.h.b16 %v653
    %v2997 = vunpack.c.l.b16 %v654
    %v2998 = vunpack.c.h.b16 %v654
    %v2999 = vunpack.c.l.b16 %v655
    %v3000 = vunpack.c.h.b16 %v655
    %v3001 = vunpack.c.l.b16 %v656
    %v3002 = vunpack.c.h.b16 %v656
    %v3003 = vunpack.c.l.b16 %v657
    %v3004 = vunpack.c.h.b16 %v657
    %v3005 = vunpack.c.l.b16 %v658
    %v3006 = vunpack.c.h.b16 %v658
    %v3007 = vunpack.c.l.b16 %v659
    %v3008 = vunpack.c.h.b16 %v659
    %v3009 = vunpack.c.l.b16 %v660
    %v3010 = vunpack.c.h.b16 %v660
    %v3011 = vunpack.c.l.b16 %v661
    %v3012 = vunpack.c.h.b16 %v661
    %v3013 = vunpack.c.l.b16 %v662
    %v3014 = vunpack.c.h.b16 %v662
    %v3015 = vunpack.c.l.b16 %v663
    %v3016 = vunpack.c.h.b16 %v663
    %v3017 = vunpack.c.l.b16 %v664
    %v3018 = vunpack.c.h.b16 %v664
    %v3019 = vunpack.c.l.b16 %v665
    %v3020 = vunpack.c.h.b16 %v665
    %v3021 = vunpack.c.l.b16 %v666
    %v3022 = vunpack.c.h.b16 %v666
    %v3023 = vunpack.c.l.b16 %v667
    %v3024 = vunpack.c.h.b16 %v667
    %v3025 = vunpack.c.l.b16 %v668
    %v3026 = vunpack.c.h.b16 %v668
    %v3027 = vunpack.c.l.b16 %v669
    %v3028 = vunpack.c.h.b16 %v669
    %v3029 = vunpack.c.l.b16 %v670
    %v3030 = vunpack.c.h.b16 %v670
    %v3031 = vunpack.c.l.b16 %v671
    %v3032 = vunpack.c.h.b16 %v671
    %v3033 = vunpack.c.l.b16 %v672
    %v3034 = vunpack.c.h.b16 %v672
    %v3035 = vunpack.c.l.b16 %v673
    %v3036 = vunpack.c.h.b16 %v673
    %v3037 = vunpack.c.l.b16 %v674
    %v3038 = vunpack.c.h.b16 %v674
    %v3039 = vunpack.c.l.b16 %v675
    %v3040 = vunpack.c.h.b16 %v675
    %v3041 = vunpack.c.l.b16 %v676
    %v3042 = vunpack.c.h.b16 %v676
    %v3043 = vunpack.c.l.b16 %v677
    %v3044 = vunpack.c.h.b16 %v677
    %v3045 = vunpack.c.l.b16 %v678
    %v3046 = vunpack.c.h.b16 %v678
    %v3047 = vunpack.c.l.b16 %v679
    %v3048 = vunpack.c.h.b16 %v679
    %v3049 = vunpack.c.l.b16 %v680
    %v3050 = vunpack.c.h.b16 %v680
    %v3051 = vunpack.c.l.b16 %v681
    %v3052 = vunpack.c.h.b16 %v681
    %v3053 = vunpack.c.l.b16 %v682
    %v3054 = vunpack.c.h.b16 %v682
    %v3055 = vunpack.c.l.b16 %v683
    %v3056 = vunpack.c.h.b16 %v683
    %v3057 = vunpack.c.l.b16 %v684
    %v3058 = vunpack.c.h.b16 %v684
    %v3059 = vunpack.c.l.b16 %v685
    %v3060 = vunpack.c.h.b16 %v685
    %v3061 = vunpack.c.l.b16 %v686
    %v3062 = vunpack.c.h.b16 %v686
    %v3063 = vunpack.c.l.b16 %v687
    %v3064 = vunpack.c.h.b16 %v687
    %v3065 = vunpack.c.l.b16 %v688
    %v3066 = vunpack.c.h.b16 %v688
    %v3067 = vunpack.c.l.b16 %v689
    %v3068 = vunpack.c.h.b16 %v689
    %v3069 = vunpack.c.l.b16 %v690
    %v3070 = vunpack.c.h.b16 %v690
    %v3071 = vunpack.c.l.b16 %v691
    %v3072 = vunpack.c.h.b16 %v691
    %v3073 = vunpack.c.l.b16 %v692
    %v3074 = vunpack.c.h.b16 %v692
    %v3075 = vunpack.c.l.b16 %v693
    %v3076 = vunpack.c.h.b16 %v693
    %v3077 = vunpack.c.l.b16 %v694
    %v3078 = vunpack.c.h.b16 %v694
    %v3079 = vunpack.c.l.b16 %v695
    %v3080 = vunpack.c.h.b16 %v695
    %v3081 = vunpack.c.l.b16 %v696
    %v3082 = vunpack.c.h.b16 %v696
    %v3083 = vunpack.c.l.b16 %v697
    %v3084 = vunpack.c.h.b16 %v697
    %v3085 = vunpack.c.l.b16 %v698
    %v3086 = vunpack.c.h.b16 %v698
    %v3087 = vunpack.c.l.b16 %v699
    %v3088 = vunpack.c.h.b16 %v699
    %v3089 = vunpack.c.l.b16 %v700
    %v3090 = vunpack.c.h.b16 %v700
    %v3091 = vunpack.c.l.b16 %v701
    %v3092 = vunpack.c.h.b16 %v701
    %v3093 = vunpack.c.l.b16 %v702
    %v3094 = vunpack.c.h.b16 %v702
    %v3095 = vunpack.c.l.b16 %v703
    %v3096 = vunpack.c.h.b16 %v703
    %v3097 = vunpack.c.l.b16 %v704
    %v3098 = vunpack.c.h.b16 %v704
    %v3099 = vunpack.c.l.b16 %v705
    %v3100 = vunpack.c.h.b16 %v705
    %v3101 = vunpack.c.l.b16 %v706
    %v3102 = vunpack.c.h.b16 %v706
    %v3103 = vunpack.c.l.b16 %v707
    %v3104 = vunpack.c.h.b16 %v707
    %v3105 = vunpack.c.l.b16 %v708
    %v3106 = vunpack.c.h.b16 %v708
    %v3107 = vunpack.c.l.b16 %v709
    %v3108 = vunpack.c.h.b16 %v709
    %v3109 = vunpack.c.l.b16 %v710
    %v3110 = vunpack.c.h.b16 %v710
    %v3111 = vunpack.c.l.b16 %v711
    %v3112 = vunpack.c.h.b16 %v711
    %v3113 = vunpack.c.l.b16 %v712
    %v3114 = vunpack.c.h.b16 %v712
    %v3115 = vunpack.c.l.b16 %v713
    %v3116 = vunpack.c.h.b16 %v713
    %v3117 = vunpack.c.l.b16 %v714
    %v3118 = vunpack.c.h.b16 %v714
    %v3119 = vunpack.c.l.b16 %v715
    %v3120 = vunpack.c.h.b16 %v715
    %v3121 = vunpack.c.l.b16 %v716
    %v3122 = vunpack.c.h.b16 %v716
    %v3123 = vunpack.c.l.b16 %v717
    %v3124 = vunpack.c.h.b16 %v717
    %v3125 = vunpack.c.l.b16 %v718
    %v3126 = vunpack.c.h.b16 %v718
    %v3127 = vunpack.c.l.b16 %v719
    %v3128 = vunpack.c.h.b16 %v719
    %v3129 = vunpack.c.l.b16 %v720
    %v3130 = vunpack.c.h.b16 %v720
    %v3131 = vunpack.c.l.b16 %v721
    %v3132 = vunpack.c.h.b16 %v721
    %v3133 = vunpack.c.l.b16 %v722
    %v3134 = vunpack.c.h.b16 %v722
    %v3135 = vunpack.c.l.b16 %v723
    %v3136 = vunpack.c.h.b16 %v723
    %v3137 = vunpack.c.l.b16 %v724
    %v3138 = vunpack.c.h.b16 %v724
    %v3139 = vunpack.c.l.b16 %v725
    %v3140 = vunpack.c.h.b16 %v725
    %v3141 = vunpack.c.l.b16 %v726
    %v3142 = vunpack.c.h.b16 %v726
    %v3143 = vunpack.c.l.b16 %v727
    %v3144 = vunpack.c.h.b16 %v727
    %v3145 = vunpack.c.l.b16 %v728
    %v3146 = vunpack.c.h.b16 %v728
    %v3147 = vunpack.c.l.b16 %v729
    %v3148 = vunpack.c.h.b16 %v729
    %v3149 = vunpack.c.l.b16 %v730
    %v3150 = vunpack.c.h.b16 %v730
    %v3151 = vunpack.c.l.b16 %v731
    %v3152 = vunpack.c.h.b16 %v731
    %v3153 = vunpack.c.l.b16 %v732
    %v3154 = vunpack.c.h.b16 %v732
    %v3155 = vunpack.c.l.b16 %v733
    %v3156 = vunpack.c.h.b16 %v733
    %v3157 = vunpack.c.l.b16 %v734
    %v3158 = vunpack.c.h.b16 %v734
    %v3159 = vunpack.c.l.b16 %v735
    %v3160 = vunpack.c.h.b16 %v735
    %v3161 = vunpack.c.l.b16 %v736
    %v3162 = vunpack.c.h.b16 %v736
    %v3163 = vunpack.c.l.b16 %v737
    %v3164 = vunpack.c.h.b16 %v737
    %v3165 = vunpack.c.l.b16 %v738
    %v3166 = vunpack.c.h.b16 %v738
    %v3167 = vunpack.c.l.b16 %v739
    %v3168 = vunpack.c.h.b16 %v739
    %v3169 = vunpack.c.l.b16 %v740
    %v3170 = vunpack.c.h.b16 %v740
    %v3171 = vunpack.c.l.b16 %v741
    %v3172 = vunpack.c.h.b16 %v741
    %v3173 = vunpack.c.l.b16 %v742
    %v3174 = vunpack.c.h.b16 %v742
    %v3175 = vunpack.c.l.b16 %v743
    %v3176 = vunpack.c.h.b16 %v743
    %v3177 = vunpack.c.l.b16 %v744
    %v3178 = vunpack.c.h.b16 %v744
    %v3179 = vunpack.c.l.b16 %v745
    %v3180 = vunpack.c.h.b16 %v745
    %v3181 = vunpack.c.l.b16 %v746
    %v3182 = vunpack.c.h.b16 %v746
    %v3183 = vunpack.c.l.b16 %v747
    %v3184 = vunpack.c.h.b16 %v747
    %v3185 = vunpack.c.l.b16 %v748
    %v3186 = vunpack.c.h.b16 %v748
    %v3187 = vunpack.c.l.b16 %v749
    %v3188 = vunpack.c.h.b16 %v749
    %v3189 = vunpack.c.l.b16 %v750
    %v3190 = vunpack.c.h.b16 %v750
    %v3191 = vunpack.c.l.b16 %v751
    %v3192 = vunpack.c.h.b16 %v751
    %v3193 = vunpack.c.l.b16 %v752
    %v3194 = vunpack.c.h.b16 %v752
    %v3195 = vunpack.c.l.b16 %v753
    %v3196 = vunpack.c.h.b16 %v753
    %v3197 = vunpack.c.l.b16 %v754
    %v3198 = vunpack.c.h.b16 %v754
    %v3199 = vunpack.c.l.b16 %v755
    %v3200 = vunpack.c.h.b16 %v755
    %v3201 = vunpack.c.l.b16 %v756
    %v3202 = vunpack.c.h.b16 %v756
    %v3203 = vunpack.c.l.b16 %v757
    %v3204 = vunpack.c.h.b16 %v757
    %v3205 = vunpack.c.l.b16 %v758
    %v3206 = vunpack.c.h.b16 %v758
    %v3207 = vunpack.c.l.b16 %v759
    %v3208 = vunpack.c.h.b16 %v759
    %v3209 = vunpack.c.l.b16 %v760
    %v3210 = vunpack.c.h.b16 %v760
    %v3211 = vunpack.c.l.b16 %v761
    %v3212 = vunpack.c.h.b16 %v761
    %v3213 = vunpack.c.l.b16 %v762
    %v3214 = vunpack.c.h.b16 %v762
    %v3215 = vunpack.c.l.b16 %v763
    %v3216 = vunpack.c.h.b16 %v763
    %v3217 = vunpack.c.l.b16 %v764
    %v3218 = vunpack.c.h.b16 %v764
    %v3219 = vunpack.c.l.b16 %v765
    %v3220 = vunpack.c.h.b16 %v765
    %v3221 = vunpack.c.l.b16 %v766
    %v3222 = vunpack.c.h.b16 %v766
    %v3223 = vunpack.c.l.b16 %v767
    %v3224 = vunpack.c.h.b16 %v767
    %v3225 = vunpack.c.l.b16 %v768
    %v3226 = vunpack.c.h.b16 %v768
    %v3227 = vunpack.c.l.b16 %v769
    %v3228 = vunpack.c.h.b16 %v769
    %v3229 = vunpack.c.l.b16 %v770
    %v3230 = vunpack.c.h.b16 %v770
    %v3231 = vunpack.c.l.b16 %v771
    %v3232 = vunpack.c.h.b16 %v771
    %v3233 = vunpack.c.l.b16 %v772
    %v3234 = vunpack.c.h.b16 %v772
    %v3235 = vunpack.c.l.b16 %v773
    %v3236 = vunpack.c.h.b16 %v773
    %v3237 = vunpack.c.l.b16 %v774
    %v3238 = vunpack.c.h.b16 %v774
    %v3239 = vunpack.c.l.b16 %v775
    %v3240 = vunpack.c.h.b16 %v775
    %v3241 = vunpack.c.l.b16 %v776
    %v3242 = vunpack.c.h.b16 %v776
    %v3243 = vunpack.c.l.b16 %v777
    %v3244 = vunpack.c.h.b16 %v777
    %v3245 = vunpack.c.l.b16 %v778
    %v3246 = vunpack.c.h.b16 %v778
    %v3247 = vunpack.c.l.b16 %v779
    %v3248 = vunpack.c.h.b16 %v779
    %v3249 = vunpack.c.l.b16 %v780
    %v3250 = vunpack.c.h.b16 %v780
    %v3251 = vunpack.c.l.b16 %v781
    %v3252 = vunpack.c.h.b16 %v781
    %v3253 = vunpack.c.l.b16 %v782
    %v3254 = vunpack.c.h.b16 %v782
    %v3255 = vunpack.c.l.b16 %v783
    %v3256 = vunpack.c.h.b16 %v783
    %v3257 = vunpack.c.l.b16 %v784
    %v3258 = vunpack.c.h.b16 %v784
    %v3259 = vunpack.c.l.b16 %v785
    %v3260 = vunpack.c.h.b16 %v785
    %v3261 = vunpack.c.l.b16 %v786
    %v3262 = vunpack.c.h.b16 %v786
    %v3263 = vunpack.c.l.b16 %v787
    %v3264 = vunpack.c.h.b16 %v787
    %v3265 = vunpack.c.l.b16 %v788
    %v3266 = vunpack.c.h.b16 %v788
    %v3267 = vunpack.c.l.b16 %v789
    %v3268 = vunpack.c.h.b16 %v789
    %v3269 = vunpack.c.l.b16 %v790
    %v3270 = vunpack.c.h.b16 %v790
    %v3271 = vunpack.c.l.b16 %v791
    %v3272 = vunpack.c.h.b16 %v791
    %v3273 = vunpack.c.l.b16 %v792
    %v3274 = vunpack.c.h.b16 %v792
    %v3275 = vunpack.c.l.b16 %v793
    %v3276 = vunpack.c.h.b16 %v793
    %v3277 = vunpack.c.l.b16 %v794
    %v3278 = vunpack.c.h.b16 %v794
    %v3279 = vunpack.c.l.b16 %v795
    %v3280 = vunpack.c.h.b16 %v795
    %v3281 = vunpack.c.l.b16 %v796
    %v3282 = vunpack.c.h.b16 %v796
    %v3283 = vunpack.c.l.b16 %v797
    %v3284 = vunpack.c.h.b16 %v797
    %v3285 = vunpack.c.l.b16 %v798
    %v3286 = vunpack.c.h.b16 %v798
    %v3287 = vunpack.c.l.b16 %v799
    %v3288 = vunpack.c.h.b16 %v799
    %v3289 = vunpack.c.l.b16 %v800
    %v3290 = vunpack.c.h.b16 %v800
    %v3291 = vunpack.c.l.b16 %v801
    %v3292 = vunpack.c.h.b16 %v801
    %v3293 = vunpack.c.l.b16 %v802
    %v3294 = vunpack.c.h.b16 %v802
    %v3295 = vunpack.c.l.b16 %v803
    %v3296 = vunpack.c.h.b16 %v803
    %v3297 = vunpack.c.l.b16 %v804
    %v3298 = vunpack.c.h.b16 %v804
    %v3299 = vunpack.c.l.b16 %v805
    %v3300 = vunpack.c.h.b16 %v805
    %v3301 = vunpack.c.l.b16 %v806
    %v3302 = vunpack.c.h.b16 %v806
    %v3303 = vunpack.c.l.b16 %v807
    %v3304 = vunpack.c.h.b16 %v807
    %v3305 = vunpack.c.l.b16 %v808
    %v3306 = vunpack.c.h.b16 %v808
    %v3307 = vunpack.c.l.b16 %v809
    %v3308 = vunpack.c.h.b16 %v809
    %v3309 = vunpack.c.l.b16 %v810
    %v3310 = vunpack.c.h.b16 %v810
    %v3311 = vunpack.c.l.b16 %v811
    %v3312 = vunpack.c.h.b16 %v811
    %v3313 = vunpack.c.l.b16 %v812
    %v3314 = vunpack.c.h.b16 %v812
    %v3315 = vunpack.c.l.b16 %v813
    %v3316 = vunpack.c.h.b16 %v813
    %v3317 = vunpack.c.l.b16 %v814
    %v3318 = vunpack.c.h.b16 %v814
    %v3319 = vunpack.c.l.b16 %v815
    %v3320 = vunpack.c.h.b16 %v815
    %v3321 = vunpack.c.l.b16 %v816
    %v3322 = vunpack.c.h.b16 %v816
    %v3323 = vunpack.c.l.b16 %v817
    %v3324 = vunpack.c.h.b16 %v817
    %v3325 = vunpack.c.l.b16 %v818
    %v3326 = vunpack.c.h.b16 %v818
    %v3327 = vunpack.c.l.b16 %v819
    %v3328 = vunpack.c.h.b16 %v819
    %v3329 = vunpack.c.l.b16 %v820
    %v3330 = vunpack.c.h.b16 %v820
    %v3331 = vunpack.c.l.b16 %v821
    %v3332 = vunpack.c.h.b16 %v821
    %v3333 = vunpack.c.l.b16 %v822
    %v3334 = vunpack.c.h.b16 %v822
    %v3335 = vunpack.c.l.b16 %v823
    %v3336 = vunpack.c.h.b16 %v823
    %v3337 = vunpack.c.l.b16 %v824
    %v3338 = vunpack.c.h.b16 %v824
    %v3339 = vunpack.c.l.b16 %v825
    %v3340 = vunpack.c.h.b16 %v825
    %v3341 = vunpack.c.l.b16 %v826
    %v3342 = vunpack.c.h.b16 %v826
    %v3343 = vunpack.c.l.b16 %v827
    %v3344 = vunpack.c.h.b16 %v827
    %v3345 = vunpack.c.l.b16 %v828
    %v3346 = vunpack.c.h.b16 %v828
    %v3347 = vunpack.c.l.b16 %v829
    %v3348 = vunpack.c.h.b16 %v829
    %v3349 = vunpack.c.l.b16 %v830
    %v3350 = vunpack.c.h.b16 %v830
    %v3351 = vunpack.c.l.b16 %v831
    %v3352 = vunpack.c.h.b16 %v831
    %v3353 = vunpack.c.l.b16 %v832
    %v3354 = vunpack.c.h.b16 %v832
    %v3355 = vunpack.c.l.b16 %v833
    %v3356 = vunpack.c.h.b16 %v833
    %v3357 = vunpack.c.l.b16 %v834
    %v3358 = vunpack.c.h.b16 %v834
    %v3359 = vunpack.c.l.b16 %v835
    %v3360 = vunpack.c.h.b16 %v835
    %v3361 = vunpack.c.l.b16 %v836
    %v3362 = vunpack.c.h.b16 %v836
    %v3363 = vunpack.c.l.b16 %v837
    %v3364 = vunpack.c.h.b16 %v837
    %v3365 = vunpack.c.l.b16 %v838
    %v3366 = vunpack.c.h.b16 %v838
    %v3367 = vunpack.c.l.b16 %v839
    %v3368 = vunpack.c.h.b16 %v839
    %v3369 = vunpack.c.l.b16 %v840
    %v3370 = vunpack.c.h.b16 %v840
    %v3371 = vunpack.c.l.b16 %v841
    %v3372 = vunpack.c.h.b16 %v841
    %v3373 = vunpack.c.l.b16 %v842
    %v3374 = vunpack.c.h.b16 %v842
    %v3375 = vunpack.c.l.b16 %v843
    %v3376 = vunpack.c.h.b16 %v843
    %v3377 = vunpack.c.l.b16 %v844
    %v3378 = vunpack.c.h.b16 %v844
    %v3379 = vunpack.c.l.b16 %v845
    %v3380 = vunpack.c.h.b16 %v845
    %v3381 = vunpack.c.l.b16 %v846
    %v3382 = vunpack.c.h.b16 %v846
    %v3383 = vunpack.c.l.b16 %v847
    %v3384 = vunpack.c.h.b16 %v847
    %v3385 = vunpack.c.l.b16 %v848
    %v3386 = vunpack.c.h.b16 %v848
    %v3387 = vunpack.c.l.b16 %v849
    %v3388 = vunpack.c.h.b16 %v849
    %v3389 = vunpack.c.l.b16 %v850
    %v3390 = vunpack.c.h.b16 %v850
    %v3391 = vunpack.c.l.b16 %v851
    %v3392 = vunpack.c.h.b16 %v851
    %v3393 = vunpack.c.l.b16 %v852
    %v3394 = vunpack.c.h.b16 %v852
    %v3395 = vunpack.c.l.b16 %v853
    %v3396 = vunpack.c.h.b16 %v853
    %v3397 = vunpack.c.l.b16 %v854
    %v3398 = vunpack.c.h.b16 %v854
    %v3399 = vunpack.c.l.b16 %v855
    %v3400 = vunpack.c.h.b16 %v855
    %v3401 = vunpack.c.l.b16 %v856
    %v3402 = vunpack.c.h.b16 %v856
    %v3403 = vunpack.c.l.b16 %v857
    %v3404 = vunpack.c.h.b16 %v857
    %v3405 = vunpack.c.l.b16 %v858
    %v3406 = vunpack.c.h.b16 %v858
    %v3407 = vunpack.c.l.b16 %v859
    %v3408 = vunpack.c.h.b16 %v859
    %v3409 = vunpack.c.l.b16 %v860
    %v3410 = vunpack.c.h.b16 %v860
    %v3411 = vunpack.c.l.b16 %v861
    %v3412 = vunpack.c.h.b16 %v861
    %v3413 = vunpack.c.l.b16 %v862
    %v3414 = vunpack.c.h.b16 %v862
    %v3415 = vunpack.c.l.b16 %v863
    %v3416 = vunpack.c.h.b16 %v863
    %v3417 = vunpack.c.l.b16 %v864
    %v3418 = vunpack.c.h.b16 %v864
    %v3419 = vunpack.c.l.b16 %v865
    %v3420 = vunpack.c.h.b16 %v865
    %v3421 = vunpack.c.l.b16 %v866
    %v3422 = vunpack.c.h.b16 %v866
    %v3423 = vunpack.c.l.b16 %v867
    %v3424 = vunpack.c.h.b16 %v867
    %v3425 = vunpack.c.l.b16 %v868
    %v3426 = vunpack.c.h.b16 %v868
    %v3427 = vunpack.c.l.b16 %v869
    %v3428 = vunpack.c.h.b16 %v869
    %v3429 = vunpack.c.l.b16 %v870
    %v3430 = vunpack.c.h.b16 %v870
    %v3431 = vunpack.c.l.b16 %v871
    %v3432 = vunpack.c.h.b16 %v871
    %v3433 = vunpack.c.l.b16 %v872
    %v3434 = vunpack.c.h.b16 %v872
    %v3435 = vunpack.c.l.b16 %v873
    %v3436 = vunpack.c.h.b16 %v873
    %v3437 = vunpack.c.l.b16 %v874
    %v3438 = vunpack.c.h.b16 %v874
    %v3439 = vunpack.c.l.b16 %v875
    %v3440 = vunpack.c.h.b16 %v875
    %v3441 = vunpack.c.l.b16 %v876
    %v3442 = vunpack.c.h.b16 %v876
    %v3443 = vunpack.c.l.b16 %v877
    %v3444 = vunpack.c.h.b16 %v877
    %v3445 = vunpack.c.l.b16 %v878
    %v3446 = vunpack.c.h.b16 %v878
    %v3447 = vunpack.c.l.b16 %v879
    %v3448 = vunpack.c.h.b16 %v879
    %v3449 = vunpack.c.l.b16 %v880
    %v3450 = vunpack.c.h.b16 %v880
    %v3451 = vunpack.c.l.b16 %v881
    %v3452 = vunpack.c.h.b16 %v881
    %v3453 = vunpack.c.l.b16 %v882
    %v3454 = vunpack.c.h.b16 %v882
    %v3455 = vunpack.c.l.b16 %v883
    %v3456 = vunpack.c.h.b16 %v883
    %v3457 = vunpack.c.l.b16 %v884
    %v3458 = vunpack.c.h.b16 %v884
    %v3459 = vunpack.c.l.b16 %v885
    %v3460 = vunpack.c.h.b16 %v885
    %v3461 = vunpack.c.l.b16 %v886
    %v3462 = vunpack.c.h.b16 %v886
    %v3463 = vunpack.c.l.b16 %v887
    %v3464 = vunpack.c.h.b16 %v887
    %v3465 = vunpack.c.l.b16 %v888
    %v3466 = vunpack.c.h.b16 %v888
    %v3467 = vunpack.c.l.b16 %v889
    %v3468 = vunpack.c.h.b16 %v889
    %v3469 = vunpack.c.l.b16 %v890
    %v3470 = vunpack.c.h.b16 %v890
    %v3471 = vunpack.c.l.b16 %v891
    %v3472 = vunpack.c.h.b16 %v891
    %v3473 = vunpack.c.l.b16 %v892
    %v3474 = vunpack.c.h.b16 %v892
    %v3475 = vunpack.c.l.b16 %v893
    %v3476 = vunpack.c.h.b16 %v893
    %v3477 = vunpack.c.l.b16 %v894
    %v3478 = vunpack.c.h.b16 %v894
    %v3479 = vunpack.c.l.b16 %v895
    %v3480 = vunpack.c.h.b16 %v895
    %v3481 = vunpack.c.l.b16 %v896
    %v3482 = vunpack.c.h.b16 %v896
    %v3483 = vunpack.c.l.b16 %v897
    %v3484 = vunpack.c.h.b16 %v897
    %v3485 = vunpack.c.l.b16 %v898
    %v3486 = vunpack.c.h.b16 %v898
    %v3487 = vunpack.c.l.b16 %v899
    %v3488 = vunpack.c.h.b16 %v899
    %v3489 = vunpack.c.l.b16 %v900
    %v3490 = vunpack.c.h.b16 %v900
    %v3491 = vunpack.c.l.b16 %v901
    %v3492 = vunpack.c.h.b16 %v901
    %v3493 = vunpack.c.l.b16 %v902
    %v3494 = vunpack.c.h.b16 %v902
    %v3495 = vunpack.c.l.b16 %v903
    %v3496 = vunpack.c.h.b16 %v903
    %v3497 = vunpack.c.l.b16 %v904
    %v3498 = vunpack.c.h.b16 %v904
    %v3499 = vunpack.c.l.b16 %v905
    %v3500 = vunpack.c.h.b16 %v905
    %v3501 = vunpack.c.l.b16 %v906
    %v3502 = vunpack.c.h.b16 %v906
    %v3503 = vunpack.c.l.b16 %v907
    %v3504 = vunpack.c.h.b16 %v907
    %v3505 = vunpack.c.l.b16 %v908
    %v3506 = vunpack.c.h.b16 %v908
    %v3507 = vunpack.c.l.b16 %v909
    %v3508 = vunpack.c.h.b16 %v909
    %v3509 = vunpack.c.l.b16 %v910
    %v3510 = vunpack.c.h.b16 %v910
    %v3511 = vunpack.c.l.b16 %v911
    %v3512 = vunpack.c.h.b16 %v911
    %v3513 = vunpack.c.l.b16 %v912
    %v3514 = vunpack.c.h.b16 %v912
    %v3515 = vunpack.c.l.b16 %v913
    %v3516 = vunpack.c.h.b16 %v913
    %v3517 = vunpack.c.l.b16 %v914
    %v3518 = vunpack.c.h.b16 %v914
    %v3519 = vunpack.c.l.b16 %v915
    %v3520 = vunpack.c.h.b16 %v915
    %v3521 = vunpack.c.l.b16 %v916
    %v3522 = vunpack.c.h.b16 %v916
    %v3523 = vunpack.c.l.b16 %v917
    %v3524 = vunpack.c.h.b16 %v917
    %v3525 = vunpack.c.l.b16 %v918
    %v3526 = vunpack.c.h.b16 %v918
    %v3527 = vunpack.c.l.b16 %v919
    %v3528 = vunpack.c.h.b16 %v919
    %v3529 = vunpack.c.l.b16 %v920
    %v3530 = vunpack.c.h.b16 %v920
    %v3531 = vunpack.c.l.b16 %v921
    %v3532 = vunpack.c.h.b16 %v921
    %v3533 = vunpack.c.l.b16 %v922
    %v3534 = vunpack.c.h.b16 %v922
    %v3535 = vunpack.c.l.b16 %v923
    %v3536 = vunpack.c.h.b16 %v923
    %v3537 = vunpack.c.l.b16 %v924
    %v3538 = vunpack.c.h.b16 %v924
    %v3539 = vunpack.c.l.b16 %v925
    %v3540 = vunpack.c.h.b16 %v925
    %v3541 = vunpack.c.l.b16 %v926
    %v3542 = vunpack.c.h.b16 %v926
    %v3543 = vunpack.c.l.b16 %v927
    %v3544 = vunpack.c.h.b16 %v927
    %v3545 = vunpack.c.l.b16 %v928
    %v3546 = vunpack.c.h.b16 %v928
    %v3547 = vunpack.c.l.b16 %v929
    %v3548 = vunpack.c.h.b16 %v929
    %v3549 = vunpack.c.l.b16 %v930
    %v3550 = vunpack.c.h.b16 %v930
    %v3551 = vunpack.c.l.b16 %v931
    %v3552 = vunpack.c.h.b16 %v931
    %v3553 = vunpack.c.l.b16 %v932
    %v3554 = vunpack.c.h.b16 %v932
    %v3555 = vunpack.c.l.b16 %v933
    %v3556 = vunpack.c.h.b16 %v933
    %v3557 = vunpack.c.l.b16 %v934
    %v3558 = vunpack.c.h.b16 %v934
    %v3559 = vunpack.c.l.b16 %v935
    %v3560 = vunpack.c.h.b16 %v935
    %v3561 = vunpack.c.l.b16 %v936
    %v3562 = vunpack.c.h.b16 %v936
    %v3563 = vunpack.c.l.b16 %v937
    %v3564 = vunpack.c.h.b16 %v937
    %v3565 = vunpack.c.l.b16 %v938
    %v3566 = vunpack.c.h.b16 %v938
    %v3567 = vunpack.c.l.b16 %v939
    %v3568 = vunpack.c.h.b16 %v939
    %v3569 = vunpack.c.l.b16 %v940
    %v3570 = vunpack.c.h.b16 %v940
    %v3571 = vunpack.c.l.b16 %v941
    %v3572 = vunpack.c.h.b16 %v941
    %v3573 = vunpack.c.l.b16 %v942
    %v3574 = vunpack.c.h.b16 %v942
    %v3575 = vunpack.c.l.b16 %v943
    %v3576 = vunpack.c.h.b16 %v943
    %v3577 = vunpack.c.l.b16 %v944
    %v3578 = vunpack.c.h.b16 %v944
    %v3579 = vunpack.c.l.b16 %v945
    %v3580 = vunpack.c.h.b16 %v945
    %v3581 = vunpack.c.l.b16 %v946
    %v3582 = vunpack.c.h.b16 %v946
    %v3583 = vunpack.c.l.b16 %v947
    %v3584 = vunpack.c.h.b16 %v947
    %v3585 = vunpack.c.l.b16 %v948
    %v3586 = vunpack.c.h.b16 %v948
    %v3587 = vunpack.c.l.b16 %v949
    %v3588 = vunpack.c.h.b16 %v949
    %v3589 = vunpack.c.l.b16 %v950
    %v3590 = vunpack.c.h.b16 %v950
    %v3591 = vunpack.c.l.b16 %v951
    %v3592 = vunpack.c.h.b16 %v951
    %v3593 = vunpack.c.l.b16 %v952
    %v3594 = vunpack.c.h.b16 %v952
    %v3595 = vunpack.c.l.b16 %v953
    %v3596 = vunpack.c.h.b16 %v953
    %v3597 = vunpack.c.l.b16 %v954
    %v3598 = vunpack.c.h.b16 %v954
    %v3599 = vunpack.c.l.b16 %v955
    %v3600 = vunpack.c.h.b16 %v955
    %v3601 = vunpack.c.l.b16 %v956
    %v3602 = vunpack.c.h.b16 %v956
    %v3603 = vunpack.c.l.b16 %v957
    %v3604 = vunpack.c.h.b16 %v957
    %v3605 = vunpack.c.l.b16 %v958
    %v3606 = vunpack.c.h.b16 %v958
    %v3607 = vunpack.c.l.b16 %v959
    %v3608 = vunpack.c.h.b16 %v959
    %v3609 = vunpack.c.l.b16 %v960
    %v3610 = vunpack.c.h.b16 %v960
    %v3611 = vunpack.c.l.b16 %v961
    %v3612 = vunpack.c.h.b16 %v961
    %v3613 = vunpack.c.l.b16 %v962
    %v3614 = vunpack.c.h.b16 %v962
    %v3615 = vunpack.c.l.b16 %v963
    %v3616 = vunpack.c.h.b16 %v963
    %v3617 = vunpack.c.l.b16 %v964
    %v3618 = vunpack.c.h.b16 %v964
    %v3619 = vunpack.c.l.b16 %v965
    %v3620 = vunpack.c.h.b16 %v965
    %v3621 = vunpack.c.l.b16 %v966
    %v3622 = vunpack.c.h.b16 %v966
    %v3623 = vunpack.c.l.b16 %v967
    %v3624 = vunpack.c.h.b16 %v967
    %v3625 = vunpack.c.l.b16 %v968
    %v3626 = vunpack.c.h.b16 %v968
    %v3627 = vunpack.c.l.b16 %v969
    %v3628 = vunpack.c.h.b16 %v969
    %v3629 = vunpack.c.l.b16 %v970
    %v3630 = vunpack.c.h.b16 %v970
    %v3631 = vunpack.c.l.b16 %v971
    %v3632 = vunpack.c.h.b16 %v971
    %v3633 = vunpack.c.l.b16 %v972
    %v3634 = vunpack.c.h.b16 %v972
    %v3635 = vunpack.c.l.b16 %v973
    %v3636 = vunpack.c.h.b16 %v973
    %v3637 = vunpack.c.l.b16 %v974
    %v3638 = vunpack.c.h.b16 %v974
    %v3639 = vunpack.c.l.b16 %v975
    %v3640 = vunpack.c.h.b16 %v975
    %v3641 = vunpack.c.l.b16 %v976
    %v3642 = vunpack.c.h.b16 %v976
    %v3643 = vunpack.c.l.b16 %v977
    %v3644 = vunpack.c.h.b16 %v977
    %v3645 = vunpack.c.l.b16 %v978
    %v3646 = vunpack.c.h.b16 %v978
    %v3647 = vunpack.c.l.b16 %v979
    %v3648 = vunpack.c.h.b16 %v979
    %v3649 = vunpack.c.l.b16 %v980
    %v3650 = vunpack.c.h.b16 %v980
    %v3651 = vunpack.c.l.b16 %v981
    %v3652 = vunpack.c.h.b16 %v981
    %v3653 = vunpack.c.l.b16 %v982
    %v3654 = vunpack.c.h.b16 %v982
    %v3655 = vunpack.c.l.b16 %v983
    %v3656 = vunpack.c.h.b16 %v983
    %v3657 = vunpack.c.l.b16 %v984
    %v3658 = vunpack.c.h.b16 %v984
    %v3659 = vunpack.c.l.b16 %v985
    %v3660 = vunpack.c.h.b16 %v985
    %v3661 = vunpack.c.l.b16 %v986
    %v3662 = vunpack.c.h.b16 %v986
    %v3663 = vunpack.c.l.b16 %v987
    %v3664 = vunpack.c.h.b16 %v987
    %v3665 = vunpack.c.l.b16 %v988
    %v3666 = vunpack.c.h.b16 %v988
    %v3667 = vunpack.c.l.b16 %v989
    %v3668 = vunpack.c.h.b16 %v989
    %v3669 = vunpack.c.l.b16 %v990
    %v3670 = vunpack.c.h.b16 %v990
    %v3671 = vunpack.c.l.b16 %v991
    %v3672 = vunpack.c.h.b16 %v991
    %v3673 = vunpack.c.l.b16 %v992
    %v3674 = vunpack.c.h.b16 %v992
    %v3675 = vunpack.c.l.b16 %v993
    %v3676 = vunpack.c.h.b16 %v993
    %v3677 = vunpack.c.l.b16 %v994
    %v3678 = vunpack.c.h.b16 %v994
    %v3679 = vunpack.c.l.b16 %v995
    %v3680 = vunpack.c.h.b16 %v995
    %v3681 = vunpack.c.l.b16 %v996
    %v3682 = vunpack.c.h.b16 %v996
    %v3683 = vunpack.c.l.b16 %v997
    %v3684 = vunpack.c.h.b16 %v997
    %v3685 = vunpack.c.l.b16 %v998
    %v3686 = vunpack.c.h.b16 %v998
    %v3687 = vunpack.c.l.b16 %v999
    %v3688 = vunpack.c.h.b16 %v999
    %v3689 = vpack.c.b16 %v1905, %v1897
    %v3690 = vpack.c.b16 %v1906, %v1898
    %v3691 = vpack.c.b16 %v1907, %v1899
    %v3692 = vpack.c.b16 %v1908, %v1900
    %v3693 = vpack.c.b16 %v1909, %v1901
    %v3694 = vpack.c.b16 %v1910, %v1902
    %v3695 = vpack.c.b16 %v1911, %v1903
    %v3696 = vpack.c.b16 %v1912, %v1904
    %v3697 = vpack.c.b16 %v1921, %v1913
    %v3698 = vpack.c.b16 %v1922, %v1914
    %v3699 = vpack.c.b16 %v1923, %v1915
    %v3700 = vpack.c.b16 %v1924, %v1916
    %v3701 = vpack.c.b16 %v1925, %v1917
    %v3702 = vpack.c.b16 %v1926, %v1918
    %v3703 = vpack.c.b16 %v1927, %v1919
    %v3704 = vpack.c.b16 %v1928, %v1920
    %v3705 = vpack.c.b16 %v1937, %v1929
    %v3706 = vpack.c.b16 %v1938, %v1930
    %v3707 = vpack.c.b16 %v1939, %v1931
    %v3708 = vpack.c.b16 %v1940, %v1932
    %v3709 = vpack.c.b16 %v1941, %v1933
    %v3710 = vpack.c.b16 %v1942, %v1934
    %v3711 = vpack.c.b16 %v1943, %v1935
    %v3712 = vpack.c.b16 %v1944, %v1936
    %v3713 = vpack.c.b16 %v1953, %v1945
    %v3714 = vpack.c.b16 %v1954, %v1946
    %v3715 = vpack.c.b16 %v1955, %v1947
    %v3716 = vpack.c.b16 %v1956, %v1948
    %v3717 = vpack.c.b16 %v1957, %v1949
    %v3718 = vpack.c.b16 %v1958, %v1950
    %v3719 = vpack.c.b16 %v1959, %v1951
    %v3720 = vpack.c.b16 %v1960, %v1952
    %v3721 = vpack.c.b16 %v1969, %v1961
    %v3722 = vpack.c.b16 %v1970, %v1962
    %v3723 = vpack.c.b16 %v1971, %v1963
    %v3724 = vpack.c.b16 %v1972, %v1964
    %v3725 = vpack.c.b16 %v1973, %v1965
    %v3726 = vpack.c.b16 %v1974, %v1966
    %v3727 = vpack.c.b16 %v1975, %v1967
    %v3728 = vpack.c.b16 %v1976, %v1968
    %v3729 = vpack.c.b16 %v1985, %v1977
    %v3730 = vpack.c.b16 %v1986, %v1978
    %v3731 = vpack.c.b16 %v1987, %v1979
    %v3732 = vpack.c.b16 %v1988, %v1980
    %v3733 = vpack.c.b16 %v1989, %v1981
    %v3734 = vpack.c.b16 %v1990, %v1982
    %v3735 = vpack.c.b16 %v1991, %v1983
    %v3736 = vpack.c.b16 %v1992, %v1984
    %v3737 = vpack.c.b16 %v2001, %v1993
    %v3738 = vpack.c.b16 %v2002, %v1994
    %v3739 = vpack.c.b16 %v2003, %v1995
    %v3740 = vpack.c.b16 %v2004, %v1996
    %v3741 = vpack.c.b16 %v2005, %v1997
    %v3742 = vpack.c.b16 %v2006, %v1998
    %v3743 = vpack.c.b16 %v2007, %v1999
    %v3744 = vpack.c.b16 %v2008, %v2000
    %v3745 = vpack.c.b16 %v2017, %v2009
    %v3746 = vpack.c.b16 %v2018, %v2010
    %v3747 = vpack.c.b16 %v2019, %v2011
    %v3748 = vpack.c.b16 %v2020, %v2012
    %v3749 = vpack.c.b16 %v2021, %v2013
    %v3750 = vpack.c.b16 %v2022, %v2014
    %v3751 = vpack.c.b16 %v2023, %v2015
    %v3752 = vpack.c.b16 %v2024, %v2016
    %v3753 = vpack.c.b16 %v2033, %v2025
    %v3754 = vpack.c.b16 %v2034, %v2026
    %v3755 = vpack.c.b16 %v2035, %v2027
    %v3756 = vpack.c.b16 %v2036, %v2028
    %v3757 = vpack.c.b16 %v2037, %v2029
    %v3758 = vpack.c.b16 %v2038, %v2030
    %v3759 = vpack.c.b16 %v2039, %v2031
    %v3760 = vpack.c.b16 %v2040, %v2032
    %v3761 = vpack.c.b16 %v2049, %v2041
    %v3762 = vpack.c.b16 %v2050, %v2042
    %v3763 = vpack.c.b16 %v2051, %v2043
    %v3764 = vpack.c.b16 %v2052, %v2044
    %v3765 = vpack.c.b16 %v2053, %v2045
    %v3766 = vpack.c.b16 %v2054, %v2046
    %v3767 = vpack.c.b16 %v2055, %v2047
    %v3768 = vpack.c.b16 %v2056, %v2048
    %v3769 = vpack.c.b16 %v2065, %v2057
    %v3770 = vpack.c.b16 %v2066, %v2058
    %v3771 = vpack.c.b16 %v2067, %v2059
    %v3772 = vpack.c.b16 %v2068, %v2060
    %v3773 = vpack.c.b16 %v2069, %v2061
    %v3774 = vpack.c.b16 %v2070, %v2062
    %v3775 = vpack.c.b16 %v2071, %v2063
    %v3776 = vpack.c.b16 %v2072, %v2064
    %v3777 = vpack.c.b16 %v2081, %v2073
    %v3778 = vpack.c.b16 %v2082, %v2074
    %v3779 = vpack.c.b16 %v2083, %v2075
    %v3780 = vpack.c.b16 %v2084, %v2076
    %v3781 = vpack.c.b16 %v2085, %v2077
    %v3782 = vpack.c.b16 %v2086, %v2078
    %v3783 = vpack.c.b16 %v2087, %v2079
    %v3784 = vpack.c.b16 %v2088, %v2080
    %v3785 = vpack.c.b16 %v2097, %v2089
    %v3786 = vpack.c.b16 %v2098, %v2090
    %v3787 = vpack.c.b16 %v2099, %v2091
    %v3788 = vpack.c.b16 %v2100, %v2092
    %v3789 = vpack.c.b16 %v2101, %v2093
    %v3790 = vpack.c.b16 %v2102, %v2094
    %v3791 = vpack.c.b16 %v2103, %v2095
    %v3792 = vpack.c.b16 %v2104, %v2096
    %v3793 = vpack.c.b16 %v2113, %v2105
    %v3794 = vpack.c.b16 %v2114, %v2106
    %v3795 = vpack.c.b16 %v2115, %v2107
    %v3796 = vpack.c.b16 %v2116, %v2108
    %v3797 = vpack.c.b16 %v2117, %v2109
    %v3798 = vpack.c.b16 %v2118, %v2110
    %v3799 = vpack.c.b16 %v2119, %v2111
    %v3800 = vpack.c.b16 %v2120, %v2112
    %v3801 = vpack.c.b16 %v2129, %v2121
    %v3802 = vpack.c.b16 %v2130, %v2122
    %v3803 = vpack.c.b16 %v2131, %v2123
    %v3804 = vpack.c.b16 %v2132, %v2124
    %v3805 = vpack.c.b16 %v2133, %v2125
    %v3806 = vpack.c.b16 %v2134, %v2126
    %v3807 = vpack.c.b16 %v2135, %v2127
    %v3808 = vpack.c.b16 %v2136, %v2128
    %v3809 = vpack.c.b16 %v2145, %v2137
    %v3810 = vpack.c.b16 %v2146, %v2138
    %v3811 = vpack.c.b16 %v2147, %v2139
    %v3812 = vpack.c.b16 %v2148, %v2140
    %v3813 = vpack.c.b16 %v2149, %v2141
    %v3814 = vpack.c.b16 %v2150, %v2142
    %v3815 = vpack.c.b16 %v2151, %v2143
    %v3816 = vpack.c.b16 %v2152, %v2144
    %v3817 = vpack.c.b16 %v2161, %v2153
    %v3818 = vpack.c.b16 %v2162, %v2154
    %v3819 = vpack.c.b16 %v2163, %v2155
    %v3820 = vpack.c.b16 %v2164, %v2156
    %v3821 = vpack.c.b16 %v2165, %v2157
    %v3822 = vpack.c.b16 %v2166, %v2158
    %v3823 = vpack.c.b16 %v2167, %v2159
    %v3824 = vpack.c.b16 %v2168, %v2160
    %v3825 = vpack.c.b16 %v2177, %v2169
    %v3826 = vpack.c.b16 %v2178, %v2170
    %v3827 = vpack.c.b16 %v2179, %v2171
    %v3828 = vpack.c.b16 %v2180, %v2172
    %v3829 = vpack.c.b16 %v2181, %v2173
    %v3830 = vpack.c.b16 %v2182, %v2174
    %v3831 = vpack.c.b16 %v2183, %v2175
    %v3832 = vpack.c.b16 %v2184, %v2176
    %v3833 = vpack.c.b16 %v2193, %v2185
    %v3834 = vpack.c.b16 %v2194, %v2186
    %v3835 = vpack.c.b16 %v2195, %v2187
    %v3836 = vpack.c.b16 %v2196, %v2188
    %v3837 = vpack.c.b16 %v2197, %v2189
    %v3838 = vpack.c.b16 %v2198, %v2190
    %v3839 = vpack.c.b16 %v2199, %v2191
    %v3840 = vpack.c.b16 %v2200, %v2192
    %v3841 = vpack.c.b16 %v2209, %v2201
    %v3842 = vpack.c.b16 %v2210, %v2202
    %v3843 = vpack.c.b16 %v2211, %v2203
    %v3844 = vpack.c.b16 %v2212, %v2204
    %v3845 = vpack.c.b16 %v2213, %v2205
    %v3846 = vpack.c.b16 %v2214, %v2206
    %v3847 = vpack.c.b16 %v2215, %v2207
    %v3848 = vpack.c.b16 %v2216, %v2208
    %v3849 = vpack.c.b16 %v2225, %v2217
    %v3850 = vpack.c.b16 %v2226, %v2218
    %v3851 = vpack.c.b16 %v2227, %v2219
    %v3852 = vpack.c.b16 %v2228, %v2220
    %v3853 = vpack.c.b16 %v2229, %v2221
    %v3854 = vpack.c.b16 %v2230, %v2222
    %v3855 = vpack.c.b16 %v2231, %v2223
    %v3856 = vpack.c.b16 %v2232, %v2224
    %v3857 = vpack.c.b16 %v2241, %v2233
    %v3858 = vpack.c.b16 %v2242, %v2234
    %v3859 = vpack.c.b16 %v2243, %v2235
    %v3860 = vpack.c.b16 %v2244, %v2236
    %v3861 = vpack.c.b16 %v2245, %v2237
    %v3862 = vpack.c.b16 %v2246, %v2238
    %v3863 = vpack.c.b16 %v2247, %v2239
    %v3864 = vpack.c.b16 %v2248, %v2240
    %v3865 = vpack.c.b16 %v2257, %v2249
    %v3866 = vpack.c.b16 %v2258, %v2250
    %v3867 = vpack.c.b16 %v2259, %v2251
    %v3868 = vpack.c.b16 %v2260, %v2252
    %v3869 = vpack.c.b16 %v2261, %v2253
    %v3870 = vpack.c.b16 %v2262, %v2254
    %v3871 = vpack.c.b16 %v2263, %v2255
    %v3872 = vpack.c.b16 %v2264, %v2256
    %v3873 = vpack.c.b16 %v2273, %v2265
    %v3874 = vpack.c.b16 %v2274, %v2266
    %v3875 = vpack.c.b16 %v2275, %v2267
    %v3876 = vpack.c.b16 %v2276, %v2268
    %v3877 = vpack.c.b16 %v2277, %v2269
    %v3878 = vpack.c.b16 %v2278, %v2270
    %v3879 = vpack.c.b16 %v2279, %v2271
    %v3880 = vpack.c.b16 %v2280, %v2272
    %v3881 = vpack.c.b16 %v2289, %v2281
    %v3882 = vpack.c.b16 %v2290, %v2282
    %v3883 = vpack.c.b16 %v2291, %v2283
    %v3884 = vpack.c.b16 %v2292, %v2284
    %v3885 = vpack.c.b16 %v2293, %v2285
    %v3886 = vpack.c.b16 %v2294, %v2286
    %v3887 = vpack.c.b16 %v2295, %v2287
    %v3888 = vpack.c.b16 %v2296, %v2288
    %v3889 = vpack.c.b16 %v2305, %v2297
    %v3890 = vpack.c.b16 %v2306, %v2298
    %v3891 = vpack.c.b16 %v2307, %v2299
    %v3892 = vpack.c.b16 %v2308, %v2300
    %v3893 = vpack.c.b16 %v2309, %v2301
    %v3894 = vpack.c.b16 %v2310, %v2302
    %v3895 = vpack.c.b16 %v2311, %v2303
    %v3896 = vpack.c.b16 %v2312, %v2304
    %v3897 = vpack.c.b16 %v2321, %v2313
    %v3898 = vpack.c.b16 %v2322, %v2314
    %v3899 = vpack.c.b16 %v2323, %v2315
    %v3900 = vpack.c.b16 %v2324, %v2316
    %v3901 = vpack.c.b16 %v2325, %v2317
    %v3902 = vpack.c.b16 %v2326, %v2318
    %v3903 = vpack.c.b16 %v2327, %v2319
    %v3904 = vpack.c.b16 %v2328, %v2320
    %v3905 = vpack.c.b16 %v2337, %v2329
    %v3906 = vpack.c.b16 %v2338, %v2330
    %v3907 = vpack.c.b16 %v2339, %v2331
    %v3908 = vpack.c.b16 %v2340, %v2332
    %v3909 = vpack.c.b16 %v2341, %v2333
    %v3910 = vpack.c.b16 %v2342, %v2334
    %v3911 = vpack.c.b16 %v2343, %v2335
    %v3912 = vpack.c.b16 %v2344, %v2336
    %v3913 = vpack.c.b16 %v2353, %v2345
    %v3914 = vpack.c.b16 %v2354, %v2346
    %v3915 = vpack.c.b16 %v2355, %v2347
    %v3916 = vpack.c.b16 %v2356, %v2348
    %v3917 = vpack.c.b16 %v2357, %v2349
    %v3918 = vpack.c.b16 %v2358, %v2350
    %v3919 = vpack.c.b16 %v2359, %v2351
    %v3920 = vpack.c.b16 %v2360, %v2352
    %v3921 = vpack.c.b16 %v2369, %v2361
    %v3922 = vpack.c.b16 %v2370, %v2362
    %v3923 = vpack.c.b16 %v2371, %v2363
    %v3924 = vpack.c.b16 %v2372, %v2364
    %v3925 = vpack.c.b16 %v2373, %v2365
    %v3926 = vpack.c.b16 %v2374, %v2366
    %v3927 = vpack.c.b16 %v2375, %v2367
    %v3928 = vpack.c.b16 %v2376, %v2368
    %v3929 = vpack.c.b16 %v2385, %v2377
    %v3930 = vpack.c.b16 %v2386, %v2378
    %v3931 = vpack.c.b16 %v2387, %v2379
    %v3932 = vpack.c.b16 %v2388, %v2380
    %v3933 = vpack.c.b16 %v2389, %v2381
    %v3934 = vpack.c.b16 %v2390, %v2382
    %v3935 = vpack.c.b16 %v2391, %v2383
    %v3936 = vpack.c.b16 %v2392, %v2384
    %v3937 = vpack.c.b16 %v2401, %v2393
    %v3938 = vpack.c.b16 %v2402, %v2394
    %v3939 = vpack.c.b16 %v2403, %v2395
    %v3940 = vpack.c.b16 %v2404, %v2396
    %v3941 = vpack.c.b16 %v2405, %v2397
    %v3942 = vpack.c.b16 %v2406, %v2398
    %v3943 = vpack.c.b16 %v2407, %v2399
    %v3944 = vpack.c.b16 %v2408, %v2400
    %v3945 = vpack.c.b16 %v2417, %v2409
    %v3946 = vpack.c.b16 %v2418, %v2410
    %v3947 = vpack.c.b16 %v2419, %v2411
    %v3948 = vpack.c.b16 %v2420, %v2412
    %v3949 = vpack.c.b16 %v2421, %v2413
    %v3950 = vpack.c.b16 %v2422, %v2414
    %v3951 = vpack.c.b16 %v2423, %v2415
    %v3952 = vpack.c.b16 %v2424, %v2416
    %v3953 = vpack.c.b16 %v2433, %v2425
    %v3954 = vpack.c.b16 %v2434, %v2426
    %v3955 = vpack.c.b16 %v2435, %v2427
    %v3956 = vpack.c.b16 %v2436, %v2428
    %v3957 = vpack.c.b16 %v2437, %v2429
    %v3958 = vpack.c.b16 %v2438, %v2430
    %v3959 = vpack.c.b16 %v2439, %v2431
    %v3960 = vpack.c.b16 %v2440, %v2432
    %v3961 = vpack.c.b16 %v2449, %v2441
    %v3962 = vpack.c.b16 %v2450, %v2442
    %v3963 = vpack.c.b16 %v2451, %v2443
    %v3964 = vpack.c.b16 %v2452, %v2444
    %v3965 = vpack.c.b16 %v2453, %v2445
    %v3966 = vpack.c.b16 %v2454, %v2446
    %v3967 = vpack.c.b16 %v2455, %v2447
    %v3968 = vpack.c.b16 %v2456, %v2448
    %v3969 = vpack.c.b16 %v2465, %v2457
    %v3970 = vpack.c.b16 %v2466, %v2458
    %v3971 = vpack.c.b16 %v2467, %v2459
    %v3972 = vpack.c.b16 %v2468, %v2460
    %v3973 = vpack.c.b16 %v2469, %v2461
    %v3974 = vpack.c.b16 %v2470, %v2462
    %v3975 = vpack.c.b16 %v2471, %v2463
    %v3976 = vpack.c.b16 %v2472, %v2464
    %v3977 = vpack.c.b16 %v2481, %v2473
    %v3978 = vpack.c.b16 %v2482, %v2474
    %v3979 = vpack.c.b16 %v2483, %v2475
    %v3980 = vpack.c.b16 %v2484, %v2476
    %v3981 = vpack.c.b16 %v2485, %v2477
    %v3982 = vpack.c.b16 %v2486, %v2478
    %v3983 = vpack.c.b16 %v2487, %v2479
    %v3984 = vpack.c.b16 %v2488, %v2480
    %v3985 = vpack.c.b16 %v2497, %v2489
    %v3986 = vpack.c.b16 %v2498, %v2490
    %v3987 = vpack.c.b16 %v2499, %v2491
    %v3988 = vpack.c.b16 %v2500, %v2492
    %v3989 = vpack.c.b16 %v2501, %v2493
    %v3990 = vpack.c.b16 %v2502, %v2494
    %v3991 = vpack.c.b16 %v2503, %v2495
    %v3992 = vpack.c.b16 %v2504, %v2496
    %v3993 = vpack.c.b16 %v2513, %v2505
    %v3994 = vpack.c.b16 %v2514, %v2506
    %v3995 = vpack.c.b16 %v2515, %v2507
    %v3996 = vpack.c.b16 %v2516, %v2508
    %v3997 = vpack.c.b16 %v2517, %v2509
    %v3998 = vpack.c.b16 %v2518, %v2510
    %v3999 = vpack.c.b16 %v2519, %v2511
    %v4000 = vpack.c.b16 %v2520, %v2512
    %v4001 = vpack.c.b16 %v2529, %v2521
    %v4002 = vpack.c.b16 %v2530, %v2522
    %v4003 = vpack.c.b16 %v2531, %v2523
    %v4004 = vpack.c.b16 %v2532, %v2524
    %v4005 = vpack.c.b16 %v2533, %v2525
    %v4006 = vpack.c.b16 %v2534, %v2526
    %v4007 = vpack.c.b16 %v2535, %v2527
    %v4008 = vpack.c.b16 %v2536, %v2528
    %v4009 = vpack.c.b16 %v2545, %v2537
    %v4010 = vpack.c.b16 %v2546, %v2538
    %v4011 = vpack.c.b16 %v2547, %v2539
    %v4012 = vpack.c.b16 %v2548, %v2540
    %v4013 = vpack.c.b16 %v2549, %v2541
    %v4014 = vpack.c.b16 %v2550, %v2542
    %v4015 = vpack.c.b16 %v2551, %v2543
    %v4016 = vpack.c.b16 %v2552, %v2544
    %v4017 = vpack.c.b16 %v2561, %v2553
    %v4018 = vpack.c.b16 %v2562, %v2554
    %v4019 = vpack.c.b16 %v2563, %v2555
    %v4020 = vpack.c.b16 %v2564, %v2556
    %v4021 = vpack.c.b16 %v2565, %v2557
    %v4022 = vpack.c.b16 %v2566, %v2558
    %v4023 = vpack.c.b16 %v2567, %v2559
    %v4024 = vpack.c.b16 %v2568, %v2560
    %v4025 = vpack.c.b16 %v2577, %v2569
    %v4026 = vpack.c.b16 %v2578, %v2570
    %v4027 = vpack.c.b16 %v2579, %v2571
    %v4028 = vpack.c.b16 %v2580, %v2572
    %v4029 = vpack.c.b16 %v2581, %v2573
    %v4030 = vpack.c.b16 %v2582, %v2574
    %v4031 = vpack.c.b16 %v2583, %v2575
    %v4032 = vpack.c.b16 %v2584, %v2576
    %v4033 = vpack.c.b16 %v2593, %v2585
    %v4034 = vpack.c.b16 %v2594, %v2586
    %v4035 = vpack.c.b16 %v2595, %v2587
    %v4036 = vpack.c.b16 %v2596, %v2588
    %v4037 = vpack.c.b16 %v2597, %v2589
    %v4038 = vpack.c.b16 %v2598, %v2590
    %v4039 = vpack.c.b16 %v2599, %v2591
    %v4040 = vpack.c.b16 %v2600, %v2592
    %v4041 = vpack.c.b16 %v2609, %v2601
    %v4042 = vpack.c.b16 %v2610, %v2602
    %v4043 = vpack.c.b16 %v2611, %v2603
    %v4044 = vpack.c.b16 %v2612, %v2604
    %v4045 = vpack.c.b16 %v2613, %v2605
    %v4046 = vpack.c.b16 %v2614, %v2606
    %v4047 = vpack.c.b16 %v2615, %v2607
    %v4048 = vpack.c.b16 %v2616, %v2608
    %v4049 = vpack.c.b16 %v2625, %v2617
    %v4050 = vpack.c.b16 %v2626, %v2618
    %v4051 = vpack.c.b16 %v2627, %v2619
    %v4052 = vpack.c.b16 %v2628, %v2620
    %v4053 = vpack.c.b16 %v2629, %v2621
    %v4054 = vpack.c.b16 %v2630, %v2622
    %v4055 = vpack.c.b16 %v2631, %v2623
    %v4056 = vpack.c.b16 %v2632, %v2624
    %v4057 = vpack.c.b16 %v2641, %v2633
    %v4058 = vpack.c.b16 %v2642, %v2634
    %v4059 = vpack.c.b16 %v2643, %v2635
    %v4060 = vpack.c.b16 %v2644, %v2636
    %v4061 = vpack.c.b16 %v2645, %v2637
    %v4062 = vpack.c.b16 %v2646, %v2638
    %v4063 = vpack.c.b16 %v2647, %v2639
    %v4064 = vpack.c.b16 %v2648, %v2640
    %v4065 = vpack.c.b16 %v2657, %v2649
    %v4066 = vpack.c.b16 %v2658, %v2650
    %v4067 = vpack.c.b16 %v2659, %v2651
    %v4068 = vpack.c.b16 %v2660, %v2652
    %v4069 = vpack.c.b16 %v2661, %v2653
    %v4070 = vpack.c.b16 %v2662, %v2654
    %v4071 = vpack.c.b16 %v2663, %v2655
    %v4072 = vpack.c.b16 %v2664, %v2656
    %v4073 = vpack.c.b16 %v2673, %v2665
    %v4074 = vpack.c.b16 %v2674, %v2666
    %v4075 = vpack.c.b16 %v2675, %v2667
    %v4076 = vpack.c.b16 %v2676, %v2668
    %v4077 = vpack.c.b16 %v2677, %v2669
    %v4078 = vpack.c.b16 %v2678, %v2670
    %v4079 = vpack.c.b16 %v2679, %v2671
    %v4080 = vpack.c.b16 %v2680, %v2672
    %v4081 = vpack.c.b16 %v2689, %v2681
    %v4082 = vpack.c.b16 %v2690, %v2682
    %v4083 = vpack.c.b16 %v2691, %v2683
    %v4084 = vpack.c.b16 %v2692, %v2684
    %v4085 = vpack.c.b16 %v2693, %v2685
    %v4086 = vpack.c.b16 %v2694, %v2686
    %v4087 = vpack.c.b16 %v2695, %v2687
    %v4088 = vpack.c.b16 %v2696, %v2688
    %v4089 = vpack.c.b16 %v2705, %v2697
    %v4090 = vpack.c.b16 %v2706, %v2698
    %v4091 = vpack.c.b16 %v2707, %v2699
    %v4092 = vpack.c.b16 %v2708, %v2700
    %v4093 = vpack.c.b16 %v2709, %v2701
    %v4094 = vpack.c.b16 %v2710, %v2702
    %v4095 = vpack.c.b16 %v2711, %v2703
    %v4096 = vpack.c.b16 %v2712, %v2704
    %v4097 = vpack.c.b16 %v2721, %v2713
    %v4098 = vpack.c.b16 %v2722, %v2714
    %v4099 = vpack.c.b16 %v2723, %v2715
    %v4100 = vpack.c.b16 %v2724, %v2716
    %v4101 = vpack.c.b16 %v2725, %v2717
    %v4102 = vpack.c.b16 %v2726, %v2718
    %v4103 = vpack.c.b16 %v2727, %v2719
    %v4104 = vpack.c.b16 %v2728, %v2720
    %v4105 = vpack.c.b16 %v2737, %v2729
    %v4106 = vpack.c.b16 %v2738, %v2730
    %v4107 = vpack.c.b16 %v2739, %v2731
    %v4108 = vpack.c.b16 %v2740, %v2732
    %v4109 = vpack.c.b16 %v2741, %v2733
    %v4110 = vpack.c.b16 %v2742, %v2734
    %v4111 = vpack.c.b16 %v2743, %v2735
    %v4112 = vpack.c.b16 %v2744, %v2736
    %v4113 = vpack.c.b16 %v2753, %v2745
    %v4114 = vpack.c.b16 %v2754, %v2746
    %v4115 = vpack.c.b16 %v2755, %v2747
    %v4116 = vpack.c.b16 %v2756, %v2748
    %v4117 = vpack.c.b16 %v2757, %v2749
    %v4118 = vpack.c.b16 %v2758, %v2750
    %v4119 = vpack.c.b16 %v2759, %v2751
    %v4120 = vpack.c.b16 %v2760, %v2752
    %v4121 = vpack.c.b16 %v2769, %v2761
    %v4122 = vpack.c.b16 %v2770, %v2762
    %v4123 = vpack.c.b16 %v2771, %v2763
    %v4124 = vpack.c.b16 %v2772, %v2764
    %v4125 = vpack.c.b16 %v2773, %v2765
    %v4126 = vpack.c.b16 %v2774, %v2766
    %v4127 = vpack.c.b16 %v2775, %v2767
    %v4128 = vpack.c.b16 %v2776, %v2768
    %v4129 = vpack.c.b16 %v2785, %v2777
    %v4130 = vpack.c.b16 %v2786, %v2778
    %v4131 = vpack.c.b16 %v2787, %v2779
    %v4132 = vpack.c.b16 %v2788, %v2780
    %v4133 = vpack.c.b16 %v2789, %v2781
    %v4134 = vpack.c.b16 %v2790, %v2782
    %v4135 = vpack.c.b16 %v2791, %v2783
    %v4136 = vpack.c.b16 %v2792, %v2784
    %v4137 = vpack.c.b16 %v2801, %v2793
    %v4138 = vpack.c.b16 %v2802, %v2794
    %v4139 = vpack.c.b16 %v2803, %v2795
    %v4140 = vpack.c.b16 %v2804, %v2796
    %v4141 = vpack.c.b16 %v2805, %v2797
    %v4142 = vpack.c.b16 %v2806, %v2798
    %v4143 = vpack.c.b16 %v2807, %v2799
    %v4144 = vpack.c.b16 %v2808, %v2800
    %v4145 = vpack.c.b16 %v2817, %v2809
    %v4146 = vpack.c.b16 %v2818, %v2810
    %v4147 = vpack.c.b16 %v2819, %v2811
    %v4148 = vpack.c.b16 %v2820, %v2812
    %v4149 = vpack.c.b16 %v2821, %v2813
    %v4150 = vpack.c.b16 %v2822, %v2814
    %v4151 = vpack.c.b16 %v2823, %v2815
    %v4152 = vpack.c.b16 %v2824, %v2816
    %v4153 = vpack.c.b16 %v2833, %v2825
    %v4154 = vpack.c.b16 %v2834, %v2826
    %v4155 = vpack.c.b16 %v2835, %v2827
    %v4156 = vpack.c.b16 %v2836, %v2828
    %v4157 = vpack.c.b16 %v2837, %v2829
    %v4158 = vpack.c.b16 %v2838, %v2830
    %v4159 = vpack.c.b16 %v2839, %v2831
    %v4160 = vpack.c.b16 %v2840, %v2832
    %v4161 = vpack.c.b16 %v2849, %v2841
    %v4162 = vpack.c.b16 %v2850, %v2842
    %v4163 = vpack.c.b16 %v2851, %v2843
    %v4164 = vpack.c.b16 %v2852, %v2844
    %v4165 = vpack.c.b16 %v2853, %v2845
    %v4166 = vpack.c.b16 %v2854, %v2846
    %v4167 = vpack.c.b16 %v2855, %v2847
    %v4168 = vpack.c.b16 %v2856, %v2848
    %v4169 = vpack.c.b16 %v2865, %v2857
    %v4170 = vpack.c.b16 %v2866, %v2858
    %v4171 = vpack.c.b16 %v2867, %v2859
    %v4172 = vpack.c.b16 %v2868, %v2860
    %v4173 = vpack.c.b16 %v2869, %v2861
    %v4174 = vpack.c.b16 %v2870, %v2862
    %v4175 = vpack.c.b16 %v2871, %v2863
    %v4176 = vpack.c.b16 %v2872, %v2864
    %v4177 = vpack.c.b16 %v2881, %v2873
    %v4178 = vpack.c.b16 %v2882, %v2874
    %v4179 = vpack.c.b16 %v2883, %v2875
    %v4180 = vpack.c.b16 %v2884, %v2876
    %v4181 = vpack.c.b16 %v2885, %v2877
    %v4182 = vpack.c.b16 %v2886, %v2878
    %v4183 = vpack.c.b16 %v2887, %v2879
    %v4184 = vpack.c.b16 %v2888, %v2880
    %v4185 = vpack.c.b16 %v2897, %v2889
    %v4186 = vpack.c.b16 %v2898, %v2890
    %v4187 = vpack.c.b16 %v2899, %v2891
    %v4188 = vpack.c.b16 %v2900, %v2892
    %v4189 = vpack.c.b16 %v2901, %v2893
    %v4190 = vpack.c.b16 %v2902, %v2894
    %v4191 = vpack.c.b16 %v2903, %v2895
    %v4192 = vpack.c.b16 %v2904, %v2896
    %v4193 = vpack.c.b16 %v2913, %v2905
    %v4194 = vpack.c.b16 %v2914, %v2906
    %v4195 = vpack.c.b16 %v2915, %v2907
    %v4196 = vpack.c.b16 %v2916, %v2908
    %v4197 = vpack.c.b16 %v2917, %v2909
    %v4198 = vpack.c.b16 %v2918, %v2910
    %v4199 = vpack.c.b16 %v2919, %v2911
    %v4200 = vpack.c.b16 %v2920, %v2912
    %v4201 = vpack.c.b16 %v2929, %v2921
    %v4202 = vpack.c.b16 %v2930, %v2922
    %v4203 = vpack.c.b16 %v2931, %v2923
    %v4204 = vpack.c.b16 %v2932, %v2924
    %v4205 = vpack.c.b16 %v2933, %v2925
    %v4206 = vpack.c.b16 %v2934, %v2926
    %v4207 = vpack.c.b16 %v2935, %v2927
    %v4208 = vpack.c.b16 %v2936, %v2928
    %v4209 = vpack.c.b16 %v2945, %v2937
    %v4210 = vpack.c.b16 %v2946, %v2938
    %v4211 = vpack.c.b16 %v2947, %v2939
    %v4212 = vpack.c.b16 %v2948, %v2940
    %v4213 = vpack.c.b16 %v2949, %v2941
    %v4214 = vpack.c.b16 %v2950, %v2942
    %v4215 = vpack.c.b16 %v2951, %v2943
    %v4216 = vpack.c.b16 %v2952, %v2944
    %v4217 = vpack.c.b16 %v2961, %v2953
    %v4218 = vpack.c.b16 %v2962, %v2954
    %v4219 = vpack.c.b16 %v2963, %v2955
    %v4220 = vpack.c.b16 %v2964, %v2956
    %v4221 = vpack.c.b16 %v2965, %v2957
    %v4222 = vpack.c.b16 %v2966, %v2958
    %v4223 = vpack.c.b16 %v2967, %v2959
    %v4224 = vpack.c.b16 %v2968, %v2960
    %v4225 = vpack.c.b16 %v2977, %v2969
    %v4226 = vpack.c.b16 %v2978, %v2970
    %v4227 = vpack.c.b16 %v2979, %v2971
    %v4228 = vpack.c.b16 %v2980, %v2972
    %v4229 = vpack.c.b16 %v2981, %v2973
    %v4230 = vpack.c.b16 %v2982, %v2974
    %v4231 = vpack.c.b16 %v2983, %v2975
    %v4232 = vpack.c.b16 %v2984, %v2976
    %v4233 = vpack.c.b16 %v2993, %v2985
    %v4234 = vpack.c.b16 %v2994, %v2986
    %v4235 = vpack.c.b16 %v2995, %v2987
    %v4236 = vpack.c.b16 %v2996, %v2988
    %v4237 = vpack.c.b16 %v2997, %v2989
    %v4238 = vpack.c.b16 %v2998, %v2990
    %v4239 = vpack.c.b16 %v2999, %v2991
    %v4240 = vpack.c.b16 %v3000, %v2992
    %v4241 = vpack.c.b16 %v3009, %v3001
    %v4242 = vpack.c.b16 %v3010, %v3002
    %v4243 = vpack.c.b16 %v3011, %v3003
    %v4244 = vpack.c.b16 %v3012, %v3004
    %v4245 = vpack.c.b16 %v3013, %v3005
    %v4246 = vpack.c.b16 %v3014, %v3006
    %v4247 = vpack.c.b16 %v3015, %v3007
    %v4248 = vpack.c.b16 %v3016, %v3008
    %v4249 = vpack.c.b16 %v3025, %v3017
    %v4250 = vpack.c.b16 %v3026, %v3018
    %v4251 = vpack.c.b16 %v3027, %v3019
    %v4252 = vpack.c.b16 %v3028, %v3020
    %v4253 = vpack.c.b16 %v3029, %v3021
    %v4254 = vpack.c.b16 %v3030, %v3022
    %v4255 = vpack.c.b16 %v3031, %v3023
    %v4256 = vpack.c.b16 %v3032, %v3024
    %v4257 = vpack.c.b16 %v3041, %v3033
    %v4258 = vpack.c.b16 %v3042, %v3034
    %v4259 = vpack.c.b16 %v3043, %v3035
    %v4260 = vpack.c.b16 %v3044, %v3036
    %v4261 = vpack.c.b16 %v3045, %v3037
    %v4262 = vpack.c.b16 %v3046, %v3038
    %v4263 = vpack.c.b16 %v3047, %v3039
    %v4264 = vpack.c.b16 %v3048, %v3040
    %v4265 = vpack.c.b16 %v3057, %v3049
    %v4266 = vpack.c.b16 %v3058, %v3050
    %v4267 = vpack.c.b16 %v3059, %v3051
    %v4268 = vpack.c.b16 %v3060, %v3052
    %v4269 = vpack.c.b16 %v3061, %v3053
    %v4270 = vpack.c.b16 %v3062, %v3054
    %v4271 = vpack.c.b16 %v3063, %v3055
    %v4272 = vpack.c.b16 %v3064, %v3056
    %v4273 = vpack.c.b16 %v3073, %v3065
    %v4274 = vpack.c.b16 %v3074, %v3066
    %v4275 = vpack.c.b16 %v3075, %v3067
    %v4276 = vpack.c.b16 %v3076, %v3068
    %v4277 = vpack.c.b16 %v3077, %v3069
    %v4278 = vpack.c.b16 %v3078, %v3070
    %v4279 = vpack.c.b16 %v3079, %v3071
    %v4280 = vpack.c.b16 %v3080, %v3072
    %v4281 = vpack.c.b16 %v3089, %v3081
    %v4282 = vpack.c.b16 %v3090, %v3082
    %v4283 = vpack.c.b16 %v3091, %v3083
    %v4284 = vpack.c.b16 %v3092, %v3084
    %v4285 = vpack.c.b16 %v3093, %v3085
    %v4286 = vpack.c.b16 %v3094, %v3086
    %v4287 = vpack.c.b16 %v3095, %v3087
    %v4288 = vpack.c.b16 %v3096, %v3088
    %v4289 = vpack.c.b16 %v3105, %v3097
    %v4290 = vpack.c.b16 %v3106, %v3098
    %v4291 = vpack.c.b16 %v3107, %v3099
    %v4292 = vpack.c.b16 %v3108, %v3100
    %v4293 = vpack.c.b16 %v3109, %v3101
    %v4294 = vpack.c.b16 %v3110, %v3102
    %v4295 = vpack.c.b16 %v3111, %v3103
    %v4296 = vpack.c.b16 %v3112, %v3104
    %v4297 = vpack.c.b16 %v3121, %v3113
    %v4298 = vpack.c.b16 %v3122, %v3114
    %v4299 = vpack.c.b16 %v3123, %v3115
    %v4300 = vpack.c.b16 %v3124, %v3116
    %v4301 = vpack.c.b16 %v3125, %v3117
    %v4302 = vpack.c.b16 %v3126, %v3118
    %v4303 = vpack.c.b16 %v3127, %v3119
    %v4304 = vpack.c.b16 %v3128, %v3120
    %v4305 = vpack.c.b16 %v3137, %v3129
    %v4306 = vpack.c.b16 %v3138, %v3130
    %v4307 = vpack.c.b16 %v3139, %v3131
    %v4308 = vpack.c.b16 %v3140, %v3132
    %v4309 = vpack.c.b16 %v3141, %v3133
    %v4310 = vpack.c.b16 %v3142, %v3134
    %v4311 = vpack.c.b16 %v3143, %v3135
    %v4312 = vpack.c.b16 %v3144, %v3136
    %v4313 = vpack.c.b16 %v3153, %v3145
    %v4314 = vpack.c.b16 %v3154, %v3146
    %v4315 = vpack.c.b16 %v3155, %v3147
    %v4316 = vpack.c.b16 %v3156, %v3148
    %v4317 = vpack.c.b16 %v3157, %v3149
    %v4318 = vpack.c.b16 %v3158, %v3150
    %v4319 = vpack.c.b16 %v3159, %v3151
    %v4320 = vpack.c.b16 %v3160, %v3152
    %v4321 = vpack.c.b16 %v3169, %v3161
    %v4322 = vpack.c.b16 %v3170, %v3162
    %v4323 = vpack.c.b16 %v3171, %v3163
    %v4324 = vpack.c.b16 %v3172, %v3164
    %v4325 = vpack.c.b16 %v3173, %v3165
    %v4326 = vpack.c.b16 %v3174, %v3166
    %v4327 = vpack.c.b16 %v3175, %v3167
    %v4328 = vpack.c.b16 %v3176, %v3168
    %v4329 = vpack.c.b16 %v3185, %v3177
    %v4330 = vpack.c.b16 %v3186, %v3178
    %v4331 = vpack.c.b16 %v3187, %v3179
    %v4332 = vpack.c.b16 %v3188, %v3180
    %v4333 = vpack.c.b16 %v3189, %v3181
    %v4334 = vpack.c.b16 %v3190, %v3182
    %v4335 = vpack.c.b16 %v3191, %v3183
    %v4336 = vpack.c.b16 %v3192, %v3184
    %v4337 = vpack.c.b16 %v3201, %v3193
    %v4338 = vpack.c.b16 %v3202, %v3194
    %v4339 = vpack.c.b16 %v3203, %v3195
    %v4340 = vpack.c.b16 %v3204, %v3196
    %v4341 = vpack.c.b16 %v3205, %v3197
    %v4342 = vpack.c.b16 %v3206, %v3198
    %v4343 = vpack.c.b16 %v3207, %v3199
    %v4344 = vpack.c.b16 %v3208, %v3200
    %v4345 = vpack.c.b16 %v3217, %v3209
    %v4346 = vpack.c.b16 %v3218, %v3210
    %v4347 = vpack.c.b16 %v3219, %v3211
    %v4348 = vpack.c.b16 %v3220, %v3212
    %v4349 = vpack.c.b16 %v3221, %v3213
    %v4350 = vpack.c.b16 %v3222, %v3214
    %v4351 = vpack.c.b16 %v3223, %v3215
    %v4352 = vpack.c.b16 %v3224, %v3216
    %v4353 = vpack.c.b16 %v3233, %v3225
    %v4354 = vpack.c.b16 %v3234, %v3226
    %v4355 = vpack.c.b16 %v3235, %v3227
    %v4356 = vpack.c.b16 %v3236, %v3228
    %v4357 = vpack.c.b16 %v3237, %v3229
    %v4358 = vpack.c.b16 %v3238, %v3230
    %v4359 = vpack.c.b16 %v3239, %v3231
    %v4360 = vpack.c.b16 %v3240, %v3232
    %v4361 = vpack.c.b16 %v3249, %v3241
    %v4362 = vpack.c.b16 %v3250, %v3242
    %v4363 = vpack.c.b16 %v3251, %v3243
    %v4364 = vpack.c.b16 %v3252, %v3244
    %v4365 = vpack.c.b16 %v3253, %v3245
    %v4366 = vpack.c.b16 %v3254, %v3246
    %v4367 = vpack.c.b16 %v3255, %v3247
    %v4368 = vpack.c.b16 %v3256, %v3248
    %v4369 = vpack.c.b16 %v3265, %v3257
    %v4370 = vpack.c.b16 %v3266, %v3258
    %v4371 = vpack.c.b16 %v3267, %v3259
    %v4372 = vpack.c.b16 %v3268, %v3260
    %v4373 = vpack.c.b16 %v3269, %v3261
    %v4374 = vpack.c.b16 %v3270, %v3262
    %v4375 = vpack.c.b16 %v3271, %v3263
    %v4376 = vpack.c.b16 %v3272, %v3264
    %v4377 = vpack.c.b16 %v3281, %v3273
    %v4378 = vpack.c.b16 %v3282, %v3274
    %v4379 = vpack.c.b16 %v3283, %v3275
    %v4380 = vpack.c.b16 %v3284, %v3276
    %v4381 = vpack.c.b16 %v3285, %v3277
    %v4382 = vpack.c.b16 %v3286, %v3278
    %v4383 = vpack.c.b16 %v3287, %v3279
    %v4384 = vpack.c.b16 %v3288, %v3280
    %v4385 = vpack.c.b16 %v3297, %v3289
    %v4386 = vpack.c.b16 %v3298, %v3290
    %v4387 = vpack.c.b16 %v3299, %v3291
    %v4388 = vpack.c.b16 %v3300, %v3292
    %v4389 = vpack.c.b16 %v3301, %v3293
    %v4390 = vpack.c.b16 %v3302, %v3294
    %v4391 = vpack.c.b16 %v3303, %v3295
    %v4392 = vpack.c.b16 %v3304, %v3296
    %v4393 = vpack.c.b16 %v3313, %v3305
    %v4394 = vpack.c.b16 %v3314, %v3306
    %v4395 = vpack.c.b16 %v3315, %v3307
    %v4396 = vpack.c.b16 %v3316, %v3308
    %v4397 = vpack.c.b16 %v3317, %v3309
    %v4398 = vpack.c.b16 %v3318, %v3310
    %v4399 = vpack.c.b16 %v3319, %v3311
    %v4400 = vpack.c.b16 %v3320, %v3312
    %v4401 = vpack.c.b16 %v3329, %v3321
    %v4402 = vpack.c.b16 %v3330, %v3322
    %v4403 = vpack.c.b16 %v3331, %v3323
    %v4404 = vpack.c.b16 %v3332, %v3324
    %v4405 = vpack.c.b16 %v3333, %v3325
    %v4406 = vpack.c.b16 %v3334, %v3326
    %v4407 = vpack.c.b16 %v3335, %v3327
    %v4408 = vpack.c.b16 %v3336, %v3328
    %v4409 = vpack.c.b16 %v3345, %v3337
    %v4410 = vpack.c.b16 %v3346, %v3338
    %v4411 = vpack.c.b16 %v3347, %v3339
    %v4412 = vpack.c.b16 %v3348, %v3340
    %v4413 = vpack.c.b16 %v3349, %v3341
    %v4414 = vpack.c.b16 %v3350, %v3342
    %v4415 = vpack.c.b16 %v3351, %v3343
    %v4416 = vpack.c.b16 %v3352, %v3344
    %v4417 = vpack.c.b16 %v3361, %v3353
    %v4418 = vpack.c.b16 %v3362, %v3354
    %v4419 = vpack.c.b16 %v3363, %v3355
    %v4420 = vpack.c.b16 %v3364, %v3356
    %v4421 = vpack.c.b16 %v3365, %v3357
    %v4422 = vpack.c.b16 %v3366, %v3358
    %v4423 = vpack.c.b16 %v3367, %v3359
    %v4424 = vpack.c.b16 %v3368, %v3360
    %v4425 = vpack.c.b16 %v3377, %v3369
    %v4426 = vpack.c.b16 %v3378, %v3370
    %v4427 = vpack.c.b16 %v3379, %v3371
    %v4428 = vpack.c.b16 %v3380, %v3372
    %v4429 = vpack.c.b16 %v3381, %v3373
    %v4430 = vpack.c.b16 %v3382, %v3374
    %v4431 = vpack.c.b16 %v3383, %v3375
    %v4432 = vpack.c.b16 %v3384, %v3376
    %v4433 = vpack.c.b16 %v3393, %v3385
    %v4434 = vpack.c.b16 %v3394, %v3386
    %v4435 = vpack.c.b16 %v3395, %v3387
    %v4436 = vpack.c.b16 %v3396, %v3388
    %v4437 = vpack.c.b16 %v3397, %v3389
    %v4438 = vpack.c.b16 %v3398, %v3390
    %v4439 = vpack.c.b16 %v3399, %v3391
    %v4440 = vpack.c.b16 %v3400, %v3392
    %v4441 = vpack.c.b16 %v3409, %v3401
    %v4442 = vpack.c.b16 %v3410, %v3402
    %v4443 = vpack.c.b16 %v3411, %v3403
    %v4444 = vpack.c.b16 %v3412, %v3404
    %v4445 = vpack.c.b16 %v3413, %v3405
    %v4446 = vpack.c.b16 %v3414, %v3406
    %v4447 = vpack.c.b16 %v3415, %v3407
    %v4448 = vpack.c.b16 %v3416, %v3408
    %v4449 = vpack.c.b16 %v3425, %v3417
    %v4450 = vpack.c.b16 %v3426, %v3418
    %v4451 = vpack.c.b16 %v3427, %v3419
    %v4452 = vpack.c.b16 %v3428, %v3420
    %v4453 = vpack.c.b16 %v3429, %v3421
    %v4454 = vpack.c.b16 %v3430, %v3422
    %v4455 = vpack.c.b16 %v3431, %v3423
    %v4456 = vpack.c.b16 %v3432, %v3424
    %v4457 = vpack.c.b16 %v3441, %v3433
    %v4458 = vpack.c.b16 %v3442, %v3434
    %v4459 = vpack.c.b16 %v3443, %v3435
    %v4460 = vpack.c.b16 %v3444, %v3436
    %v4461 = vpack.c.b16 %v3445, %v3437
    %v4462 = vpack.c.b16 %v3446, %v3438
    %v4463 = vpack.c.b16 %v3447, %v3439
    %v4464 = vpack.c.b16 %v3448, %v3440
    %v4465 = vpack.c.b16 %v3457, %v3449
    %v4466 = vpack.c.b16 %v3458, %v3450
    %v4467 = vpack.c.b16 %v3459, %v3451
    %v4468 = vpack.c.b16 %v3460, %v3452
    %v4469 = vpack.c.b16 %v3461, %v3453
    %v4470 = vpack.c.b16 %v3462, %v3454
    %v4471 = vpack.c.b16 %v3463, %v3455
    %v4472 = vpack.c.b16 %v3464, %v3456
    %v4473 = vpack.c.b16 %v3473, %v3465
    %v4474 = vpack.c.b16 %v3474, %v3466
    %v4475 = vpack.c.b16 %v3475, %v3467
    %v4476 = vpack.c.b16 %v3476, %v3468
    %v4477 = vpack.c.b16 %v3477, %v3469
    %v4478 = vpack.c.b16 %v3478, %v3470
    %v4479 = vpack.c.b16 %v3479, %v3471
    %v4480 = vpack.c.b16 %v3480, %v3472
    %v4481 = vpack.c.b16 %v3489, %v3481
    %v4482 = vpack.c.b16 %v3490, %v3482
    %v4483 = vpack.c.b16 %v3491, %v3483
    %v4484 = vpack.c.b16 %v3492, %v3484
    %v4485 = vpack.c.b16 %v3493, %v3485
    %v4486 = vpack.c.b16 %v3494, %v3486
    %v4487 = vpack.c.b16 %v3495, %v3487
    %v4488 = vpack.c.b16 %v3496, %v3488
    %v4489 = vpack.c.b16 %v3505, %v3497
    %v4490 = vpack.c.b16 %v3506, %v3498
    %v4491 = vpack.c.b16 %v3507, %v3499
    %v4492 = vpack.c.b16 %v3508, %v3500
    %v4493 = vpack.c.b16 %v3509, %v3501
    %v4494 = vpack.c.b16 %v3510, %v3502
    %v4495 = vpack.c.b16 %v3511, %v3503
    %v4496 = vpack.c.b16 %v3512, %v3504
    %v4497 = vpack.c.b16 %v3521, %v3513
    %v4498 = vpack.c.b16 %v3522, %v3514
    %v4499 = vpack.c.b16 %v3523, %v3515
    %v4500 = vpack.c.b16 %v3524, %v3516
    %v4501 = vpack.c.b16 %v3525, %v3517
    %v4502 = vpack.c.b16 %v3526, %v3518
    %v4503 = vpack.c.b16 %v3527, %v3519
    %v4504 = vpack.c.b16 %v3528, %v3520
    %v4505 = vpack.c.b16 %v3537, %v3529
    %v4506 = vpack.c.b16 %v3538, %v3530
    %v4507 = vpack.c.b16 %v3539, %v3531
    %v4508 = vpack.c.b16 %v3540, %v3532
    %v4509 = vpack.c.b16 %v3541, %v3533
    %v4510 = vpack.c.b16 %v3542, %v3534
    %v4511 = vpack.c.b16 %v3543, %v3535
    %v4512 = vpack.c.b16 %v3544, %v3536
    %v4513 = vpack.c.b16 %v3553, %v3545
    %v4514 = vpack.c.b16 %v3554, %v3546
    %v4515 = vpack.c.b16 %v3555, %v3547
    %v4516 = vpack.c.b16 %v3556, %v3548
    %v4517 = vpack.c.b16 %v3557, %v3549
    %v4518 = vpack.c.b16 %v3558, %v3550
    %v4519 = vpack.c.b16 %v3559, %v3551
    %v4520 = vpack.c.b16 %v3560, %v3552
    %v4521 = vpack.c.b16 %v3569, %v3561
    %v4522 = vpack.c.b16 %v3570, %v3562
    %v4523 = vpack.c.b16 %v3571, %v3563
    %v4524 = vpack.c.b16 %v3572, %v3564
    %v4525 = vpack.c.b16 %v3573, %v3565
    %v4526 = vpack.c.b16 %v3574, %v3566
    %v4527 = vpack.c.b16 %v3575, %v3567
    %v4528 = vpack.c.b16 %v3576, %v3568
    %v4529 = vpack.c.b16 %v3585, %v3577
    %v4530 = vpack.c.b16 %v3586, %v3578
    %v4531 = vpack.c.b16 %v3587, %v3579
    %v4532 = vpack.c.b16 %v3588, %v3580
    %v4533 = vpack.c.b16 %v3589, %v3581
    %v4534 = vpack.c.b16 %v3590, %v3582
    %v4535 = vpack.c.b16 %v3591, %v3583
    %v4536 = vpack.c.b16 %v3592, %v3584
    %v4537 = vpack.c.b16 %v3601, %v3593
    %v4538 = vpack.c.b16 %v3602, %v3594
    %v4539 = vpack.c.b16 %v3603, %v3595
    %v4540 = vpack.c.b16 %v3604, %v3596
    %v4541 = vpack.c.b16 %v3605, %v3597
    %v4542 = vpack.c.b16 %v3606, %v3598
    %v4543 = vpack.c.b16 %v3607, %v3599
    %v4544 = vpack.c.b16 %v3608, %v3600
    %v4545 = vpack.c.b16 %v3617, %v3609
    %v4546 = vpack.c.b16 %v3618, %v3610
    %v4547 = vpack.c.b16 %v3619, %v3611
    %v4548 = vpack.c.b16 %v3620, %v3612
    %v4549 = vpack.c.b16 %v3621, %v3613
    %v4550 = vpack.c.b16 %v3622, %v3614
    %v4551 = vpack.c.b16 %v3623, %v3615
    %v4552 = vpack.c.b16 %v3624, %v3616
    %v4553 = vpack.c.b16 %v3633, %v3625
    %v4554 = vpack.c.b16 %v3634, %v3626
    %v4555 = vpack.c.b16 %v3635, %v3627
    %v4556 = vpack.c.b16 %v3636, %v3628
    %v4557 = vpack.c.b16 %v3637, %v3629
    %v4558 = vpack.c.b16 %v3638, %v3630
    %v4559 = vpack.c.b16 %v3639, %v3631
    %v4560 = vpack.c.b16 %v3640, %v3632
    %v4561 = vpack.c.b16 %v3649, %v3641
    %v4562 = vpack.c.b16 %v3650, %v3642
    %v4563 = vpack.c.b16 %v3651, %v3643
    %v4564 = vpack.c.b16 %v3652, %v3644
    %v4565 = vpack.c.b16 %v3653, %v3645
    %v4566 = vpack.c.b16 %v3654, %v3646
    %v4567 = vpack.c.b16 %v3655, %v3647
    %v4568 = vpack.c.b16 %v3656, %v3648
    %v4569 = vpack.c.b16 %v3665, %v3657
    %v4570 = vpack.c.b16 %v3666, %v3658
    %v4571 = vpack.c.b16 %v3667, %v3659
    %v4572 = vpack.c.b16 %v3668, %v3660
    %v4573 = vpack.c.b16 %v3669, %v3661
    %v4574 = vpack.c.b16 %v3670, %v3662
    %v4575 = vpack.c.b16 %v3671, %v3663
    %v4576 = vpack.c.b16 %v3672, %v3664
    %v4577 = vpack.c.b16 %v3681, %v3673
    %v4578 = vpack.c.b16 %v3682, %v3674
    %v4579 = vpack.c.b16 %v3683, %v3675
    %v4580 = vpack.c.b16 %v3684, %v3676
    %v4581 = vpack.c.b16 %v3685, %v3677
    %v4582 = vpack.c.b16 %v3686, %v3678
    %v4583 = vpack.c.b16 %v3687, %v3679
    %v4584 = vpack.c.b16 %v3688, %v3680
    %v5482 = vperm.slane %v1000, 0
    %v5483 = vperm.slane %v1000, 1
    %v5484 = vperm.slane %v1000, 2
    %v5485 = vperm.slane %v1000, 3
    %v5486 = vperm.slane %v1000, 4
    %v5487 = vperm.slane %v1000, 5
    %v5488 = vperm.slane %v1000, 6
    %v5489 = vperm.slane %v1000, 7
    %5498 = vmatpush.bf16.msra.mxu0 %v3745
    %5499 = vmatpush.bf16.msra.mxu0 %v3737
    %5500 = vmatpush.bf16.msra.mxu0 %v3729
    %5501 = vmatpush.bf16.msra.mxu0 %v3721
    %5502 = vmatpush.bf16.msra.mxu0 %v3713
    %5503 = vmatpush.bf16.msra.mxu0 %v3705
    %5504 = vmatpush.bf16.msra.mxu0 %v3697
    %5505 = vmatpush.bf16.msra.mxu0 %v3689
    %5506 = vmatmul.bf16.gmra.mxu0 %v90
    %v5507 = vpop.f32.mrf.mxu0
    %v5508 = vadd.f32 %v5482, %v5507
    %v5509 = vpop.f32.mrf.mxu0
    %5510 = vdwg.mxu0
    %5511 = vmatpush.bf16.msra.mxu0 %v3809
    %5512 = vmatpush.bf16.msra.mxu0 %v3801
    %5513 = vmatpush.bf16.msra.mxu0 %v3793
    %5514 = vmatpush.bf16.msra.mxu0 %v3785
    %5515 = vmatpush.bf16.msra.mxu0 %v3777
    %5516 = vmatpush.bf16.msra.mxu0 %v3769
    %5517 = vmatpush.bf16.msra.mxu0 %v3761
    %5518 = vmatpush.bf16.msra.mxu0 %v3753
    %5519 = vmatmul.bf16.gmra.mxu0 %v91
    %v5520 = vpop.f32.mrf.mxu0
    %v5521 = vadd.f32 %v5508, %v5520
    %v5522 = vpop.f32.mrf.mxu0
    %5523 = vdwg.mxu0
    %5524 = vmatpush.bf16.msra.mxu0 %v3873
    %5525 = vmatpush.bf16.msra.mxu0 %v3865
    %5526 = vmatpush.bf16.msra.mxu0 %v3857
    %5527 = vmatpush.bf16.msra.mxu0 %v3849
    %5528 = vmatpush.bf16.msra.mxu0 %v3841
    %5529 = vmatpush.bf16.msra.mxu0 %v3833
    %5530 = vmatpush.bf16.msra.mxu0 %v3825
    %5531 = vmatpush.bf16.msra.mxu0 %v3817
    %5532 = vmatmul.bf16.gmra.mxu0 %v92
    %v5533 = vpop.f32.mrf.mxu0
    %v5534 = vadd.f32 %v5521, %v5533
    %v5535 = vpop.f32.mrf.mxu0
    %5536 = vdwg.mxu0
    %5537 = vmatpush.bf16.msra.mxu0 %v3937
    %5538 = vmatpush.bf16.msra.mxu0 %v3929
    %5539 = vmatpush.bf16.msra.mxu0 %v3921
    %5540 = vmatpush.bf16.msra.mxu0 %v3913
    %5541 = vmatpush.bf16.msra.mxu0 %v3905
    %5542 = vmatpush.bf16.msra.mxu0 %v3897
    %5543 = vmatpush.bf16.msra.mxu0 %v3889
    %5544 = vmatpush.bf16.msra.mxu0 %v3881
    %5545 = vmatmul.bf16.gmra.mxu0 %v93
    %v5546 = vpop.f32.mrf.mxu0
    %v5547 = vadd.f32 %v5534, %v5546
    %v5548 = vpop.f32.mrf.mxu0
    %5549 = vdwg.mxu0
    %5550 = vmatpush.bf16.msra.mxu0 %v4001
    %5551 = vmatpush.bf16.msra.mxu0 %v3993
    %5552 = vmatpush.bf16.msra.mxu0 %v3985
    %5553 = vmatpush.bf16.msra.mxu0 %v3977
    %5554 = vmatpush.bf16.msra.mxu0 %v3969
    %5555 = vmatpush.bf16.msra.mxu0 %v3961
    %5556 = vmatpush.bf16.msra.mxu0 %v3953
    %5557 = vmatpush.bf16.msra.mxu0 %v3945
    %5558 = vmatmul.bf16.gmra.mxu0 %v94
    %v5559 = vpop.f32.mrf.mxu0
    %v5560 = vadd.f32 %v5547, %v5559
    %v5561 = vpop.f32.mrf.mxu0
    %5562 = vdwg.mxu0
    %5563 = vmatpush.bf16.msra.mxu0 %v4065
    %5564 = vmatpush.bf16.msra.mxu0 %v4057
    %5565 = vmatpush.bf16.msra.mxu0 %v4049
    %5566 = vmatpush.bf16.msra.mxu0 %v4041
    %5567 = vmatpush.bf16.msra.mxu0 %v4033
    %5568 = vmatpush.bf16.msra.mxu0 %v4025
    %5569 = vmatpush.bf16.msra.mxu0 %v4017
    %5570 = vmatpush.bf16.msra.mxu0 %v4009
    %5571 = vmatmul.bf16.gmra.mxu0 %v95
    %v5572 = vpop.f32.mrf.mxu0
    %v5573 = vadd.f32 %v5560, %v5572
    %v5574 = vpop.f32.mrf.mxu0
    %5575 = vdwg.mxu0
    %5576 = vmatpush.bf16.msra.mxu0 %v4129
    %5577 = vmatpush.bf16.msra.mxu0 %v4121
    %5578 = vmatpush.bf16.msra.mxu0 %v4113
    %5579 = vmatpush.bf16.msra.mxu0 %v4105
    %5580 = vmatpush.bf16.msra.mxu0 %v4097
    %5581 = vmatpush.bf16.msra.mxu0 %v4089
    %5582 = vmatpush.bf16.msra.mxu0 %v4081
    %5583 = vmatpush.bf16.msra.mxu0 %v4073
    %5584 = vmatmul.bf16.gmra.mxu0 %v96
    %v5585 = vpop.f32.mrf.mxu0
    %v5586 = vadd.f32 %v5573, %v5585
    %v5587 = vpop.f32.mrf.mxu0
    %5588 = vdwg.mxu0
    %5589 = vmatpush.bf16.msra.mxu0 %v4193
    %5590 = vmatpush.bf16.msra.mxu0 %v4185
    %5591 = vmatpush.bf16.msra.mxu0 %v4177
    %5592 = vmatpush.bf16.msra.mxu0 %v4169
    %5593 = vmatpush.bf16.msra.mxu0 %v4161
    %5594 = vmatpush.bf16.msra.mxu0 %v4153
    %5595 = vmatpush.bf16.msra.mxu0 %v4145
    %5596 = vmatpush.bf16.msra.mxu0 %v4137
    %5597 = vmatmul.bf16.gmra.mxu0 %v97
    %v5598 = vpop.f32.mrf.mxu0
    %v5599 = vadd.f32 %v5586, %v5598
    %v5600 = vpop.f32.mrf.mxu0
    %5601 = vdwg.mxu0
    %5602 = vmatpush.bf16.msra.mxu0 %v4257
    %5603 = vmatpush.bf16.msra.mxu0 %v4249
    %5604 = vmatpush.bf16.msra.mxu0 %v4241
    %5605 = vmatpush.bf16.msra.mxu0 %v4233
    %5606 = vmatpush.bf16.msra.mxu0 %v4225
    %5607 = vmatpush.bf16.msra.mxu0 %v4217
    %5608 = vmatpush.bf16.msra.mxu0 %v4209
    %5609 = vmatpush.bf16.msra.mxu0 %v4201
    %5610 = vmatmul.bf16.gmra.mxu0 %v98
    %v5611 = vpop.f32.mrf.mxu0
    %v5612 = vadd.f32 %v5599, %v5611
    %v5613 = vpop.f32.mrf.mxu0
    %5614 = vdwg.mxu0
    %5615 = vmatpush.bf16.msra.mxu0 %v4321
    %5616 = vmatpush.bf16.msra.mxu0 %v4313
    %5617 = vmatpush.bf16.msra.mxu0 %v4305
    %5618 = vmatpush.bf16.msra.mxu0 %v4297
    %5619 = vmatpush.bf16.msra.mxu0 %v4289
    %5620 = vmatpush.bf16.msra.mxu0 %v4281
    %5621 = vmatpush.bf16.msra.mxu0 %v4273
    %5622 = vmatpush.bf16.msra.mxu0 %v4265
    %5623 = vmatmul.bf16.gmra.mxu0 %v99
    %v5624 = vpop.f32.mrf.mxu0
    %v5625 = vadd.f32 %v5612, %v5624
    %v5626 = vpop.f32.mrf.mxu0
    %5627 = vdwg.mxu0
    %5628 = vmatpush.bf16.msra.mxu0 %v4385
    %5629 = vmatpush.bf16.msra.mxu0 %v4377
    %5630 = vmatpush.bf16.msra.mxu0 %v4369
    %5631 = vmatpush.bf16.msra.mxu0 %v4361
    %5632 = vmatpush.bf16.msra.mxu0 %v4353
    %5633 = vmatpush.bf16.msra.mxu0 %v4345
    %5634 = vmatpush.bf16.msra.mxu0 %v4337
    %5635 = vmatpush.bf16.msra.mxu0 %v4329
    %5636 = vmatmul.bf16.gmra.mxu0 %v100
    %v5637 = vpop.f32.mrf.mxu0
    %v5638 = vadd.f32 %v5625, %v5637
    %v5639 = vpop.f32.mrf.mxu0
    %5640 = vdwg.mxu0
    %5641 = vmatpush.bf16.msra.mxu0 %v4449
    %5642 = vmatpush.bf16.msra.mxu0 %v4441
    %5643 = vmatpush.bf16.msra.mxu0 %v4433
    %5644 = vmatpush.bf16.msra.mxu0 %v4425
    %5645 = vmatpush.bf16.msra.mxu0 %v4417
    %5646 = vmatpush.bf16.msra.mxu0 %v4409
    %5647 = vmatpush.bf16.msra.mxu0 %v4401
    %5648 = vmatpush.bf16.msra.mxu0 %v4393
    %5649 = vmatmul.bf16.gmra.mxu0 %v101
    %v5650 = vpop.f32.mrf.mxu0
    %v5651 = vadd.f32 %v5638, %v5650
    %v5652 = vpop.f32.mrf.mxu0
    %5653 = vdwg.mxu0
    %5654 = vmatpush.bf16.msra.mxu0 %v4513
    %5655 = vmatpush.bf16.msra.mxu0 %v4505
    %5656 = vmatpush.bf16.msra.mxu0 %v4497
    %5657 = vmatpush.bf16.msra.mxu0 %v4489
    %5658 = vmatpush.bf16.msra.mxu0 %v4481
    %5659 = vmatpush.bf16.msra.mxu0 %v4473
    %5660 = vmatpush.bf16.msra.mxu0 %v4465
    %5661 = vmatpush.bf16.msra.mxu0 %v4457
    %5662 = vmatmul.bf16.gmra.mxu0 %v102
    %v5663 = vpop.f32.mrf.mxu0
    %v5664 = vadd.f32 %v5651, %v5663
    %v5665 = vpop.f32.mrf.mxu0
    %5666 = vdwg.mxu0
    %5667 = vmatpush.bf16.msra.mxu0 %v4577
    %5668 = vmatpush.bf16.msra.mxu0 %v4569
    %5669 = vmatpush.bf16.msra.mxu0 %v4561
    %5670 = vmatpush.bf16.msra.mxu0 %v4553
    %5671 = vmatpush.bf16.msra.mxu0 %v4545
    %5672 = vmatpush.bf16.msra.mxu0 %v4537
    %5673 = vmatpush.bf16.msra.mxu0 %v4529
    %5674 = vmatpush.bf16.msra.mxu0 %v4521
    %5675 = vmatmul.bf16.gmra.mxu0 %v103
    %v5676 = vpop.f32.mrf.mxu0
    %v5677 = vadd.f32 %v5664, %v5676
    %v5678 = vpop.f32.mrf.mxu0
    %5679 = vdwg.mxu0
    %5680 = vmatpush.bf16.msra.mxu0 %v3746
    %5681 = vmatpush.bf16.msra.mxu0 %v3738
    %5682 = vmatpush.bf16.msra.mxu0 %v3730
    %5683 = vmatpush.bf16.msra.mxu0 %v3722
    %5684 = vmatpush.bf16.msra.mxu0 %v3714
    %5685 = vmatpush.bf16.msra.mxu0 %v3706
    %5686 = vmatpush.bf16.msra.mxu0 %v3698
    %5687 = vmatpush.bf16.msra.mxu0 %v3690
    %5688 = vmatmul.bf16.gmra.mxu0 %v90
    %v5689 = vpop.f32.mrf.mxu0
    %v5690 = vadd.f32 %v5483, %v5689
    %v5691 = vpop.f32.mrf.mxu0
    %5692 = vdwg.mxu0
    %5693 = vmatpush.bf16.msra.mxu0 %v3810
    %5694 = vmatpush.bf16.msra.mxu0 %v3802
    %5695 = vmatpush.bf16.msra.mxu0 %v3794
    %5696 = vmatpush.bf16.msra.mxu0 %v3786
    %5697 = vmatpush.bf16.msra.mxu0 %v3778
    %5698 = vmatpush.bf16.msra.mxu0 %v3770
    %5699 = vmatpush.bf16.msra.mxu0 %v3762
    %5700 = vmatpush.bf16.msra.mxu0 %v3754
    %5701 = vmatmul.bf16.gmra.mxu0 %v91
    %v5702 = vpop.f32.mrf.mxu0
    %v5703 = vadd.f32 %v5690, %v5702
    %v5704 = vpop.f32.mrf.mxu0
    %5705 = vdwg.mxu0
    %5706 = vmatpush.bf16.msra.mxu0 %v3874
    %5707 = vmatpush.bf16.msra.mxu0 %v3866
    %5708 = vmatpush.bf16.msra.mxu0 %v3858
    %5709 = vmatpush.bf16.msra.mxu0 %v3850
    %5710 = vmatpush.bf16.msra.mxu0 %v3842
    %5711 = vmatpush.bf16.msra.mxu0 %v3834
    %5712 = vmatpush.bf16.msra.mxu0 %v3826
    %5713 = vmatpush.bf16.msra.mxu0 %v3818
    %5714 = vmatmul.bf16.gmra.mxu0 %v92
    %v5715 = vpop.f32.mrf.mxu0
    %v5716 = vadd.f32 %v5703, %v5715
    %v5717 = vpop.f32.mrf.mxu0
    %5718 = vdwg.mxu0
    %5719 = vmatpush.bf16.msra.mxu0 %v3938
    %5720 = vmatpush.bf16.msra.mxu0 %v3930
    %5721 = vmatpush.bf16.msra.mxu0 %v3922
    %5722 = vmatpush.bf16.msra.mxu0 %v3914
    %5723 = vmatpush.bf16.msra.mxu0 %v3906
    %5724 = vmatpush.bf16.msra.mxu0 %v3898
    %5725 = vmatpush.bf16.msra.mxu0 %v3890
    %5726 = vmatpush.bf16.msra.mxu0 %v3882
    %5727 = vmatmul.bf16.gmra.mxu0 %v93
    %v5728 = vpop.f32.mrf.mxu0
    %v5729 = vadd.f32 %v5716, %v5728
    %v5730 = vpop.f32.mrf.mxu0
    %5731 = vdwg.mxu0
    %5732 = vmatpush.bf16.msra.mxu0 %v4002
    %5733 = vmatpush.bf16.msra.mxu0 %v3994
    %5734 = vmatpush.bf16.msra.mxu0 %v3986
    %5735 = vmatpush.bf16.msra.mxu0 %v3978
    %5736 = vmatpush.bf16.msra.mxu0 %v3970
    %5737 = vmatpush.bf16.msra.mxu0 %v3962
    %5738 = vmatpush.bf16.msra.mxu0 %v3954
    %5739 = vmatpush.bf16.msra.mxu0 %v3946
    %5740 = vmatmul.bf16.gmra.mxu0 %v94
    %v5741 = vpop.f32.mrf.mxu0
    %v5742 = vadd.f32 %v5729, %v5741
    %v5743 = vpop.f32.mrf.mxu0
    %5744 = vdwg.mxu0
    %5745 = vmatpush.bf16.msra.mxu0 %v4066
    %5746 = vmatpush.bf16.msra.mxu0 %v4058
    %5747 = vmatpush.bf16.msra.mxu0 %v4050
    %5748 = vmatpush.bf16.msra.mxu0 %v4042
    %5749 = vmatpush.bf16.msra.mxu0 %v4034
    %5750 = vmatpush.bf16.msra.mxu0 %v4026
    %5751 = vmatpush.bf16.msra.mxu0 %v4018
    %5752 = vmatpush.bf16.msra.mxu0 %v4010
    %5753 = vmatmul.bf16.gmra.mxu0 %v95
    %v5754 = vpop.f32.mrf.mxu0
    %v5755 = vadd.f32 %v5742, %v5754
    %v5756 = vpop.f32.mrf.mxu0
    %5757 = vdwg.mxu0
    %5758 = vmatpush.bf16.msra.mxu0 %v4130
    %5759 = vmatpush.bf16.msra.mxu0 %v4122
    %5760 = vmatpush.bf16.msra.mxu0 %v4114
    %5761 = vmatpush.bf16.msra.mxu0 %v4106
    %5762 = vmatpush.bf16.msra.mxu0 %v4098
    %5763 = vmatpush.bf16.msra.mxu0 %v4090
    %5764 = vmatpush.bf16.msra.mxu0 %v4082
    %5765 = vmatpush.bf16.msra.mxu0 %v4074
    %5766 = vmatmul.bf16.gmra.mxu0 %v96
    %v5767 = vpop.f32.mrf.mxu0
    %v5768 = vadd.f32 %v5755, %v5767
    %v5769 = vpop.f32.mrf.mxu0
    %5770 = vdwg.mxu0
    %5771 = vmatpush.bf16.msra.mxu0 %v4194
    %5772 = vmatpush.bf16.msra.mxu0 %v4186
    %5773 = vmatpush.bf16.msra.mxu0 %v4178
    %5774 = vmatpush.bf16.msra.mxu0 %v4170
    %5775 = vmatpush.bf16.msra.mxu0 %v4162
    %5776 = vmatpush.bf16.msra.mxu0 %v4154
    %5777 = vmatpush.bf16.msra.mxu0 %v4146
    %5778 = vmatpush.bf16.msra.mxu0 %v4138
    %5779 = vmatmul.bf16.gmra.mxu0 %v97
    %v5780 = vpop.f32.mrf.mxu0
    %v5781 = vadd.f32 %v5768, %v5780
    %v5782 = vpop.f32.mrf.mxu0
    %5783 = vdwg.mxu0
    %5784 = vmatpush.bf16.msra.mxu0 %v4258
    %5785 = vmatpush.bf16.msra.mxu0 %v4250
    %5786 = vmatpush.bf16.msra.mxu0 %v4242
    %5787 = vmatpush.bf16.msra.mxu0 %v4234
    %5788 = vmatpush.bf16.msra.mxu0 %v4226
    %5789 = vmatpush.bf16.msra.mxu0 %v4218
    %5790 = vmatpush.bf16.msra.mxu0 %v4210
    %5791 = vmatpush.bf16.msra.mxu0 %v4202
    %5792 = vmatmul.bf16.gmra.mxu0 %v98
    %v5793 = vpop.f32.mrf.mxu0
    %v5794 = vadd.f32 %v5781, %v5793
    %v5795 = vpop.f32.mrf.mxu0
    %5796 = vdwg.mxu0
    %5797 = vmatpush.bf16.msra.mxu0 %v4322
    %5798 = vmatpush.bf16.msra.mxu0 %v4314
    %5799 = vmatpush.bf16.msra.mxu0 %v4306
    %5800 = vmatpush.bf16.msra.mxu0 %v4298
    %5801 = vmatpush.bf16.msra.mxu0 %v4290
    %5802 = vmatpush.bf16.msra.mxu0 %v4282
    %5803 = vmatpush.bf16.msra.mxu0 %v4274
    %5804 = vmatpush.bf16.msra.mxu0 %v4266
    %5805 = vmatmul.bf16.gmra.mxu0 %v99
    %v5806 = vpop.f32.mrf.mxu0
    %v5807 = vadd.f32 %v5794, %v5806
    %v5808 = vpop.f32.mrf.mxu0
    %5809 = vdwg.mxu0
    %5810 = vmatpush.bf16.msra.mxu0 %v4386
    %5811 = vmatpush.bf16.msra.mxu0 %v4378
    %5812 = vmatpush.bf16.msra.mxu0 %v4370
    %5813 = vmatpush.bf16.msra.mxu0 %v4362
    %5814 = vmatpush.bf16.msra.mxu0 %v4354
    %5815 = vmatpush.bf16.msra.mxu0 %v4346
    %5816 = vmatpush.bf16.msra.mxu0 %v4338
    %5817 = vmatpush.bf16.msra.mxu0 %v4330
    %5818 = vmatmul.bf16.gmra.mxu0 %v100
    %v5819 = vpop.f32.mrf.mxu0
    %v5820 = vadd.f32 %v5807, %v5819
    %v5821 = vpop.f32.mrf.mxu0
    %5822 = vdwg.mxu0
    %5823 = vmatpush.bf16.msra.mxu0 %v4450
    %5824 = vmatpush.bf16.msra.mxu0 %v4442
    %5825 = vmatpush.bf16.msra.mxu0 %v4434
    %5826 = vmatpush.bf16.msra.mxu0 %v4426
    %5827 = vmatpush.bf16.msra.mxu0 %v4418
    %5828 = vmatpush.bf16.msra.mxu0 %v4410
    %5829 = vmatpush.bf16.msra.mxu0 %v4402
    %5830 = vmatpush.bf16.msra.mxu0 %v4394
    %5831 = vmatmul.bf16.gmra.mxu0 %v101
    %v5832 = vpop.f32.mrf.mxu0
    %v5833 = vadd.f32 %v5820, %v5832
    %v5834 = vpop.f32.mrf.mxu0
    %5835 = vdwg.mxu0
    %5836 = vmatpush.bf16.msra.mxu0 %v4514
    %5837 = vmatpush.bf16.msra.mxu0 %v4506
    %5838 = vmatpush.bf16.msra.mxu0 %v4498
    %5839 = vmatpush.bf16.msra.mxu0 %v4490
    %5840 = vmatpush.bf16.msra.mxu0 %v4482
    %5841 = vmatpush.bf16.msra.mxu0 %v4474
    %5842 = vmatpush.bf16.msra.mxu0 %v4466
    %5843 = vmatpush.bf16.msra.mxu0 %v4458
    %5844 = vmatmul.bf16.gmra.mxu0 %v102
    %v5845 = vpop.f32.mrf.mxu0
    %v5846 = vadd.f32 %v5833, %v5845
    %v5847 = vpop.f32.mrf.mxu0
    %5848 = vdwg.mxu0
    %5849 = vmatpush.bf16.msra.mxu0 %v4578
    %5850 = vmatpush.bf16.msra.mxu0 %v4570
    %5851 = vmatpush.bf16.msra.mxu0 %v4562
    %5852 = vmatpush.bf16.msra.mxu0 %v4554
    %5853 = vmatpush.bf16.msra.mxu0 %v4546
    %5854 = vmatpush.bf16.msra.mxu0 %v4538
    %5855 = vmatpush.bf16.msra.mxu0 %v4530
    %5856 = vmatpush.bf16.msra.mxu0 %v4522
    %5857 = vmatmul.bf16.gmra.mxu0 %v103
    %v5858 = vpop.f32.mrf.mxu0
    %v5859 = vadd.f32 %v5846, %v5858
    %v5860 = vpop.f32.mrf.mxu0
    %5861 = vdwg.mxu0
    %5862 = vmatpush.bf16.msra.mxu0 %v3747
    %5863 = vmatpush.bf16.msra.mxu0 %v3739
    %5864 = vmatpush.bf16.msra.mxu0 %v3731
    %5865 = vmatpush.bf16.msra.mxu0 %v3723
    %5866 = vmatpush.bf16.msra.mxu0 %v3715
    %5867 = vmatpush.bf16.msra.mxu0 %v3707
    %5868 = vmatpush.bf16.msra.mxu0 %v3699
    %5869 = vmatpush.bf16.msra.mxu0 %v3691
    %5870 = vmatmul.bf16.gmra.mxu0 %v90
    %v5871 = vpop.f32.mrf.mxu0
    %v5872 = vadd.f32 %v5484, %v5871
    %v5873 = vpop.f32.mrf.mxu0
    %5874 = vdwg.mxu0
    %5875 = vmatpush.bf16.msra.mxu0 %v3811
    %5876 = vmatpush.bf16.msra.mxu0 %v3803
    %5877 = vmatpush.bf16.msra.mxu0 %v3795
    %5878 = vmatpush.bf16.msra.mxu0 %v3787
    %5879 = vmatpush.bf16.msra.mxu0 %v3779
    %5880 = vmatpush.bf16.msra.mxu0 %v3771
    %5881 = vmatpush.bf16.msra.mxu0 %v3763
    %5882 = vmatpush.bf16.msra.mxu0 %v3755
    %5883 = vmatmul.bf16.gmra.mxu0 %v91
    %v5884 = vpop.f32.mrf.mxu0
    %v5885 = vadd.f32 %v5872, %v5884
    %v5886 = vpop.f32.mrf.mxu0
    %5887 = vdwg.mxu0
    %5888 = vmatpush.bf16.msra.mxu0 %v3875
    %5889 = vmatpush.bf16.msra.mxu0 %v3867
    %5890 = vmatpush.bf16.msra.mxu0 %v3859
    %5891 = vmatpush.bf16.msra.mxu0 %v3851
    %5892 = vmatpush.bf16.msra.mxu0 %v3843
    %5893 = vmatpush.bf16.msra.mxu0 %v3835
    %5894 = vmatpush.bf16.msra.mxu0 %v3827
    %5895 = vmatpush.bf16.msra.mxu0 %v3819
    %5896 = vmatmul.bf16.gmra.mxu0 %v92
    %v5897 = vpop.f32.mrf.mxu0
    %v5898 = vadd.f32 %v5885, %v5897
    %v5899 = vpop.f32.mrf.mxu0
    %5900 = vdwg.mxu0
    %5901 = vmatpush.bf16.msra.mxu0 %v3939
    %5902 = vmatpush.bf16.msra.mxu0 %v3931
    %5903 = vmatpush.bf16.msra.mxu0 %v3923
    %5904 = vmatpush.bf16.msra.mxu0 %v3915
    %5905 = vmatpush.bf16.msra.mxu0 %v3907
    %5906 = vmatpush.bf16.msra.mxu0 %v3899
    %5907 = vmatpush.bf16.msra.mxu0 %v3891
    %5908 = vmatpush.bf16.msra.mxu0 %v3883
    %5909 = vmatmul.bf16.gmra.mxu0 %v93
    %v5910 = vpop.f32.mrf.mxu0
    %v5911 = vadd.f32 %v5898, %v5910
    %v5912 = vpop.f32.mrf.mxu0
    %5913 = vdwg.mxu0
    %5914 = vmatpush.bf16.msra.mxu0 %v4003
    %5915 = vmatpush.bf16.msra.mxu0 %v3995
    %5916 = vmatpush.bf16.msra.mxu0 %v3987
    %5917 = vmatpush.bf16.msra.mxu0 %v3979
    %5918 = vmatpush.bf16.msra.mxu0 %v3971
    %5919 = vmatpush.bf16.msra.mxu0 %v3963
    %5920 = vmatpush.bf16.msra.mxu0 %v3955
    %5921 = vmatpush.bf16.msra.mxu0 %v3947
    %5922 = vmatmul.bf16.gmra.mxu0 %v94
    %v5923 = vpop.f32.mrf.mxu0
    %v5924 = vadd.f32 %v5911, %v5923
    %v5925 = vpop.f32.mrf.mxu0
    %5926 = vdwg.mxu0
    %5927 = vmatpush.bf16.msra.mxu0 %v4067
    %5928 = vmatpush.bf16.msra.mxu0 %v4059
    %5929 = vmatpush.bf16.msra.mxu0 %v4051
    %5930 = vmatpush.bf16.msra.mxu0 %v4043
    %5931 = vmatpush.bf16.msra.mxu0 %v4035
    %5932 = vmatpush.bf16.msra.mxu0 %v4027
    %5933 = vmatpush.bf16.msra.mxu0 %v4019
    %5934 = vmatpush.bf16.msra.mxu0 %v4011
    %5935 = vmatmul.bf16.gmra.mxu0 %v95
    %v5936 = vpop.f32.mrf.mxu0
    %v5937 = vadd.f32 %v5924, %v5936
    %v5938 = vpop.f32.mrf.mxu0
    %5939 = vdwg.mxu0
    %5940 = vmatpush.bf16.msra.mxu0 %v4131
    %5941 = vmatpush.bf16.msra.mxu0 %v4123
    %5942 = vmatpush.bf16.msra.mxu0 %v4115
    %5943 = vmatpush.bf16.msra.mxu0 %v4107
    %5944 = vmatpush.bf16.msra.mxu0 %v4099
    %5945 = vmatpush.bf16.msra.mxu0 %v4091
    %5946 = vmatpush.bf16.msra.mxu0 %v4083
    %5947 = vmatpush.bf16.msra.mxu0 %v4075
    %5948 = vmatmul.bf16.gmra.mxu0 %v96
    %v5949 = vpop.f32.mrf.mxu0
    %v5950 = vadd.f32 %v5937, %v5949
    %v5951 = vpop.f32.mrf.mxu0
    %5952 = vdwg.mxu0
    %5953 = vmatpush.bf16.msra.mxu0 %v4195
    %5954 = vmatpush.bf16.msra.mxu0 %v4187
    %5955 = vmatpush.bf16.msra.mxu0 %v4179
    %5956 = vmatpush.bf16.msra.mxu0 %v4171
    %5957 = vmatpush.bf16.msra.mxu0 %v4163
    %5958 = vmatpush.bf16.msra.mxu0 %v4155
    %5959 = vmatpush.bf16.msra.mxu0 %v4147
    %5960 = vmatpush.bf16.msra.mxu0 %v4139
    %5961 = vmatmul.bf16.gmra.mxu0 %v97
    %v5962 = vpop.f32.mrf.mxu0
    %v5963 = vadd.f32 %v5950, %v5962
    %v5964 = vpop.f32.mrf.mxu0
    %5965 = vdwg.mxu0
    %5966 = vmatpush.bf16.msra.mxu0 %v4259
    %5967 = vmatpush.bf16.msra.mxu0 %v4251
    %5968 = vmatpush.bf16.msra.mxu0 %v4243
    %5969 = vmatpush.bf16.msra.mxu0 %v4235
    %5970 = vmatpush.bf16.msra.mxu0 %v4227
    %5971 = vmatpush.bf16.msra.mxu0 %v4219
    %5972 = vmatpush.bf16.msra.mxu0 %v4211
    %5973 = vmatpush.bf16.msra.mxu0 %v4203
    %5974 = vmatmul.bf16.gmra.mxu0 %v98
    %v5975 = vpop.f32.mrf.mxu0
    %v5976 = vadd.f32 %v5963, %v5975
    %v5977 = vpop.f32.mrf.mxu0
    %5978 = vdwg.mxu0
    %5979 = vmatpush.bf16.msra.mxu0 %v4323
    %5980 = vmatpush.bf16.msra.mxu0 %v4315
    %5981 = vmatpush.bf16.msra.mxu0 %v4307
    %5982 = vmatpush.bf16.msra.mxu0 %v4299
    %5983 = vmatpush.bf16.msra.mxu0 %v4291
    %5984 = vmatpush.bf16.msra.mxu0 %v4283
    %5985 = vmatpush.bf16.msra.mxu0 %v4275
    %5986 = vmatpush.bf16.msra.mxu0 %v4267
    %5987 = vmatmul.bf16.gmra.mxu0 %v99
    %v5988 = vpop.f32.mrf.mxu0
    %v5989 = vadd.f32 %v5976, %v5988
    %v5990 = vpop.f32.mrf.mxu0
    %5991 = vdwg.mxu0
    %5992 = vmatpush.bf16.msra.mxu0 %v4387
    %5993 = vmatpush.bf16.msra.mxu0 %v4379
    %5994 = vmatpush.bf16.msra.mxu0 %v4371
    %5995 = vmatpush.bf16.msra.mxu0 %v4363
    %5996 = vmatpush.bf16.msra.mxu0 %v4355
    %5997 = vmatpush.bf16.msra.mxu0 %v4347
    %5998 = vmatpush.bf16.msra.mxu0 %v4339
    %5999 = vmatpush.bf16.msra.mxu0 %v4331
    %6000 = vmatmul.bf16.gmra.mxu0 %v100
    %v6001 = vpop.f32.mrf.mxu0
    %v6002 = vadd.f32 %v5989, %v6001
    %v6003 = vpop.f32.mrf.mxu0
    %6004 = vdwg.mxu0
    %6005 = vmatpush.bf16.msra.mxu0 %v4451
    %6006 = vmatpush.bf16.msra.mxu0 %v4443
    %6007 = vmatpush.bf16.msra.mxu0 %v4435
    %6008 = vmatpush.bf16.msra.mxu0 %v4427
    %6009 = vmatpush.bf16.msra.mxu0 %v4419
    %6010 = vmatpush.bf16.msra.mxu0 %v4411
    %6011 = vmatpush.bf16.msra.mxu0 %v4403
    %6012 = vmatpush.bf16.msra.mxu0 %v4395
    %6013 = vmatmul.bf16.gmra.mxu0 %v101
    %v6014 = vpop.f32.mrf.mxu0
    %v6015 = vadd.f32 %v6002, %v6014
    %v6016 = vpop.f32.mrf.mxu0
    %6017 = vdwg.mxu0
    %6018 = vmatpush.bf16.msra.mxu0 %v4515
    %6019 = vmatpush.bf16.msra.mxu0 %v4507
    %6020 = vmatpush.bf16.msra.mxu0 %v4499
    %6021 = vmatpush.bf16.msra.mxu0 %v4491
    %6022 = vmatpush.bf16.msra.mxu0 %v4483
    %6023 = vmatpush.bf16.msra.mxu0 %v4475
    %6024 = vmatpush.bf16.msra.mxu0 %v4467
    %6025 = vmatpush.bf16.msra.mxu0 %v4459
    %6026 = vmatmul.bf16.gmra.mxu0 %v102
    %v6027 = vpop.f32.mrf.mxu0
    %v6028 = vadd.f32 %v6015, %v6027
    %v6029 = vpop.f32.mrf.mxu0
    %6030 = vdwg.mxu0
    %6031 = vmatpush.bf16.msra.mxu0 %v4579
    %6032 = vmatpush.bf16.msra.mxu0 %v4571
    %6033 = vmatpush.bf16.msra.mxu0 %v4563
    %6034 = vmatpush.bf16.msra.mxu0 %v4555
    %6035 = vmatpush.bf16.msra.mxu0 %v4547
    %6036 = vmatpush.bf16.msra.mxu0 %v4539
    %6037 = vmatpush.bf16.msra.mxu0 %v4531
    %6038 = vmatpush.bf16.msra.mxu0 %v4523
    %6039 = vmatmul.bf16.gmra.mxu0 %v103
    %v6040 = vpop.f32.mrf.mxu0
    %v6041 = vadd.f32 %v6028, %v6040
    %v6042 = vpop.f32.mrf.mxu0
    %6043 = vdwg.mxu0
    %6044 = vmatpush.bf16.msra.mxu0 %v3748
    %6045 = vmatpush.bf16.msra.mxu0 %v3740
    %6046 = vmatpush.bf16.msra.mxu0 %v3732
    %6047 = vmatpush.bf16.msra.mxu0 %v3724
    %6048 = vmatpush.bf16.msra.mxu0 %v3716
    %6049 = vmatpush.bf16.msra.mxu0 %v3708
    %6050 = vmatpush.bf16.msra.mxu0 %v3700
    %6051 = vmatpush.bf16.msra.mxu0 %v3692
    %6052 = vmatmul.bf16.gmra.mxu0 %v90
    %v6053 = vpop.f32.mrf.mxu0
    %v6054 = vadd.f32 %v5485, %v6053
    %v6055 = vpop.f32.mrf.mxu0
    %6056 = vdwg.mxu0
    %6057 = vmatpush.bf16.msra.mxu0 %v3812
    %6058 = vmatpush.bf16.msra.mxu0 %v3804
    %6059 = vmatpush.bf16.msra.mxu0 %v3796
    %6060 = vmatpush.bf16.msra.mxu0 %v3788
    %6061 = vmatpush.bf16.msra.mxu0 %v3780
    %6062 = vmatpush.bf16.msra.mxu0 %v3772
    %6063 = vmatpush.bf16.msra.mxu0 %v3764
    %6064 = vmatpush.bf16.msra.mxu0 %v3756
    %6065 = vmatmul.bf16.gmra.mxu0 %v91
    %v6066 = vpop.f32.mrf.mxu0
    %v6067 = vadd.f32 %v6054, %v6066
    %v6068 = vpop.f32.mrf.mxu0
    %6069 = vdwg.mxu0
    %6070 = vmatpush.bf16.msra.mxu0 %v3876
    %6071 = vmatpush.bf16.msra.mxu0 %v3868
    %6072 = vmatpush.bf16.msra.mxu0 %v3860
    %6073 = vmatpush.bf16.msra.mxu0 %v3852
    %6074 = vmatpush.bf16.msra.mxu0 %v3844
    %6075 = vmatpush.bf16.msra.mxu0 %v3836
    %6076 = vmatpush.bf16.msra.mxu0 %v3828
    %6077 = vmatpush.bf16.msra.mxu0 %v3820
    %6078 = vmatmul.bf16.gmra.mxu0 %v92
    %v6079 = vpop.f32.mrf.mxu0
    %v6080 = vadd.f32 %v6067, %v6079
    %v6081 = vpop.f32.mrf.mxu0
    %6082 = vdwg.mxu0
    %6083 = vmatpush.bf16.msra.mxu0 %v3940
    %6084 = vmatpush.bf16.msra.mxu0 %v3932
    %6085 = vmatpush.bf16.msra.mxu0 %v3924
    %6086 = vmatpush.bf16.msra.mxu0 %v3916
    %6087 = vmatpush.bf16.msra.mxu0 %v3908
    %6088 = vmatpush.bf16.msra.mxu0 %v3900
    %6089 = vmatpush.bf16.msra.mxu0 %v3892
    %6090 = vmatpush.bf16.msra.mxu0 %v3884
    %6091 = vmatmul.bf16.gmra.mxu0 %v93
    %v6092 = vpop.f32.mrf.mxu0
    %v6093 = vadd.f32 %v6080, %v6092
    %v6094 = vpop.f32.mrf.mxu0
    %6095 = vdwg.mxu0
    %6096 = vmatpush.bf16.msra.mxu0 %v4004
    %6097 = vmatpush.bf16.msra.mxu0 %v3996
    %6098 = vmatpush.bf16.msra.mxu0 %v3988
    %6099 = vmatpush.bf16.msra.mxu0 %v3980
    %6100 = vmatpush.bf16.msra.mxu0 %v3972
    %6101 = vmatpush.bf16.msra.mxu0 %v3964
    %6102 = vmatpush.bf16.msra.mxu0 %v3956
    %6103 = vmatpush.bf16.msra.mxu0 %v3948
    %6104 = vmatmul.bf16.gmra.mxu0 %v94
    %v6105 = vpop.f32.mrf.mxu0
    %v6106 = vadd.f32 %v6093, %v6105
    %v6107 = vpop.f32.mrf.mxu0
    %6108 = vdwg.mxu0
    %6109 = vmatpush.bf16.msra.mxu0 %v4068
    %6110 = vmatpush.bf16.msra.mxu0 %v4060
    %6111 = vmatpush.bf16.msra.mxu0 %v4052
    %6112 = vmatpush.bf16.msra.mxu0 %v4044
    %6113 = vmatpush.bf16.msra.mxu0 %v4036
    %6114 = vmatpush.bf16.msra.mxu0 %v4028
    %6115 = vmatpush.bf16.msra.mxu0 %v4020
    %6116 = vmatpush.bf16.msra.mxu0 %v4012
    %6117 = vmatmul.bf16.gmra.mxu0 %v95
    %v6118 = vpop.f32.mrf.mxu0
    %v6119 = vadd.f32 %v6106, %v6118
    %v6120 = vpop.f32.mrf.mxu0
    %6121 = vdwg.mxu0
    %6122 = vmatpush.bf16.msra.mxu0 %v4132
    %6123 = vmatpush.bf16.msra.mxu0 %v4124
    %6124 = vmatpush.bf16.msra.mxu0 %v4116
    %6125 = vmatpush.bf16.msra.mxu0 %v4108
    %6126 = vmatpush.bf16.msra.mxu0 %v4100
    %6127 = vmatpush.bf16.msra.mxu0 %v4092
    %6128 = vmatpush.bf16.msra.mxu0 %v4084
    %6129 = vmatpush.bf16.msra.mxu0 %v4076
    %6130 = vmatmul.bf16.gmra.mxu0 %v96
    %v6131 = vpop.f32.mrf.mxu0
    %v6132 = vadd.f32 %v6119, %v6131
    %v6133 = vpop.f32.mrf.mxu0
    %6134 = vdwg.mxu0
    %6135 = vmatpush.bf16.msra.mxu0 %v4196
    %6136 = vmatpush.bf16.msra.mxu0 %v4188
    %6137 = vmatpush.bf16.msra.mxu0 %v4180
    %6138 = vmatpush.bf16.msra.mxu0 %v4172
    %6139 = vmatpush.bf16.msra.mxu0 %v4164
    %6140 = vmatpush.bf16.msra.mxu0 %v4156
    %6141 = vmatpush.bf16.msra.mxu0 %v4148
    %6142 = vmatpush.bf16.msra.mxu0 %v4140
    %6143 = vmatmul.bf16.gmra.mxu0 %v97
    %v6144 = vpop.f32.mrf.mxu0
    %v6145 = vadd.f32 %v6132, %v6144
    %v6146 = vpop.f32.mrf.mxu0
    %6147 = vdwg.mxu0
    %6148 = vmatpush.bf16.msra.mxu0 %v4260
    %6149 = vmatpush.bf16.msra.mxu0 %v4252
    %6150 = vmatpush.bf16.msra.mxu0 %v4244
    %6151 = vmatpush.bf16.msra.mxu0 %v4236
    %6152 = vmatpush.bf16.msra.mxu0 %v4228
    %6153 = vmatpush.bf16.msra.mxu0 %v4220
    %6154 = vmatpush.bf16.msra.mxu0 %v4212
    %6155 = vmatpush.bf16.msra.mxu0 %v4204
    %6156 = vmatmul.bf16.gmra.mxu0 %v98
    %v6157 = vpop.f32.mrf.mxu0
    %v6158 = vadd.f32 %v6145, %v6157
    %v6159 = vpop.f32.mrf.mxu0
    %6160 = vdwg.mxu0
    %6161 = vmatpush.bf16.msra.mxu0 %v4324
    %6162 = vmatpush.bf16.msra.mxu0 %v4316
    %6163 = vmatpush.bf16.msra.mxu0 %v4308
    %6164 = vmatpush.bf16.msra.mxu0 %v4300
    %6165 = vmatpush.bf16.msra.mxu0 %v4292
    %6166 = vmatpush.bf16.msra.mxu0 %v4284
    %6167 = vmatpush.bf16.msra.mxu0 %v4276
    %6168 = vmatpush.bf16.msra.mxu0 %v4268
    %6169 = vmatmul.bf16.gmra.mxu0 %v99
    %v6170 = vpop.f32.mrf.mxu0
    %v6171 = vadd.f32 %v6158, %v6170
    %v6172 = vpop.f32.mrf.mxu0
    %6173 = vdwg.mxu0
    %6174 = vmatpush.bf16.msra.mxu0 %v4388
    %6175 = vmatpush.bf16.msra.mxu0 %v4380
    %6176 = vmatpush.bf16.msra.mxu0 %v4372
    %6177 = vmatpush.bf16.msra.mxu0 %v4364
    %6178 = vmatpush.bf16.msra.mxu0 %v4356
    %6179 = vmatpush.bf16.msra.mxu0 %v4348
    %6180 = vmatpush.bf16.msra.mxu0 %v4340
    %6181 = vmatpush.bf16.msra.mxu0 %v4332
    %6182 = vmatmul.bf16.gmra.mxu0 %v100
    %v6183 = vpop.f32.mrf.mxu0
    %v6184 = vadd.f32 %v6171, %v6183
    %v6185 = vpop.f32.mrf.mxu0
    %6186 = vdwg.mxu0
    %6187 = vmatpush.bf16.msra.mxu0 %v4452
    %6188 = vmatpush.bf16.msra.mxu0 %v4444
    %6189 = vmatpush.bf16.msra.mxu0 %v4436
    %6190 = vmatpush.bf16.msra.mxu0 %v4428
    %6191 = vmatpush.bf16.msra.mxu0 %v4420
    %6192 = vmatpush.bf16.msra.mxu0 %v4412
    %6193 = vmatpush.bf16.msra.mxu0 %v4404
    %6194 = vmatpush.bf16.msra.mxu0 %v4396
    %6195 = vmatmul.bf16.gmra.mxu0 %v101
    %v6196 = vpop.f32.mrf.mxu0
    %v6197 = vadd.f32 %v6184, %v6196
    %v6198 = vpop.f32.mrf.mxu0
    %6199 = vdwg.mxu0
    %6200 = vmatpush.bf16.msra.mxu0 %v4516
    %6201 = vmatpush.bf16.msra.mxu0 %v4508
    %6202 = vmatpush.bf16.msra.mxu0 %v4500
    %6203 = vmatpush.bf16.msra.mxu0 %v4492
    %6204 = vmatpush.bf16.msra.mxu0 %v4484
    %6205 = vmatpush.bf16.msra.mxu0 %v4476
    %6206 = vmatpush.bf16.msra.mxu0 %v4468
    %6207 = vmatpush.bf16.msra.mxu0 %v4460
    %6208 = vmatmul.bf16.gmra.mxu0 %v102
    %v6209 = vpop.f32.mrf.mxu0
    %v6210 = vadd.f32 %v6197, %v6209
    %v6211 = vpop.f32.mrf.mxu0
    %6212 = vdwg.mxu0
    %6213 = vmatpush.bf16.msra.mxu0 %v4580
    %6214 = vmatpush.bf16.msra.mxu0 %v4572
    %6215 = vmatpush.bf16.msra.mxu0 %v4564
    %6216 = vmatpush.bf16.msra.mxu0 %v4556
    %6217 = vmatpush.bf16.msra.mxu0 %v4548
    %6218 = vmatpush.bf16.msra.mxu0 %v4540
    %6219 = vmatpush.bf16.msra.mxu0 %v4532
    %6220 = vmatpush.bf16.msra.mxu0 %v4524
    %6221 = vmatmul.bf16.gmra.mxu0 %v103
    %v6222 = vpop.f32.mrf.mxu0
    %v6223 = vadd.f32 %v6210, %v6222
    %v6224 = vpop.f32.mrf.mxu0
    %6225 = vdwg.mxu0
    %6226 = vmatpush.bf16.msra.mxu0 %v3749
    %6227 = vmatpush.bf16.msra.mxu0 %v3741
    %6228 = vmatpush.bf16.msra.mxu0 %v3733
    %6229 = vmatpush.bf16.msra.mxu0 %v3725
    %6230 = vmatpush.bf16.msra.mxu0 %v3717
    %6231 = vmatpush.bf16.msra.mxu0 %v3709
    %6232 = vmatpush.bf16.msra.mxu0 %v3701
    %6233 = vmatpush.bf16.msra.mxu0 %v3693
    %6234 = vmatmul.bf16.gmra.mxu0 %v90
    %v6235 = vpop.f32.mrf.mxu0
    %v6236 = vadd.f32 %v5486, %v6235
    %v6237 = vpop.f32.mrf.mxu0
    %6238 = vdwg.mxu0
    %6239 = vmatpush.bf16.msra.mxu0 %v3813
    %6240 = vmatpush.bf16.msra.mxu0 %v3805
    %6241 = vmatpush.bf16.msra.mxu0 %v3797
    %6242 = vmatpush.bf16.msra.mxu0 %v3789
    %6243 = vmatpush.bf16.msra.mxu0 %v3781
    %6244 = vmatpush.bf16.msra.mxu0 %v3773
    %6245 = vmatpush.bf16.msra.mxu0 %v3765
    %6246 = vmatpush.bf16.msra.mxu0 %v3757
    %6247 = vmatmul.bf16.gmra.mxu0 %v91
    %v6248 = vpop.f32.mrf.mxu0
    %v6249 = vadd.f32 %v6236, %v6248
    %v6250 = vpop.f32.mrf.mxu0
    %6251 = vdwg.mxu0
    %6252 = vmatpush.bf16.msra.mxu0 %v3877
    %6253 = vmatpush.bf16.msra.mxu0 %v3869
    %6254 = vmatpush.bf16.msra.mxu0 %v3861
    %6255 = vmatpush.bf16.msra.mxu0 %v3853
    %6256 = vmatpush.bf16.msra.mxu0 %v3845
    %6257 = vmatpush.bf16.msra.mxu0 %v3837
    %6258 = vmatpush.bf16.msra.mxu0 %v3829
    %6259 = vmatpush.bf16.msra.mxu0 %v3821
    %6260 = vmatmul.bf16.gmra.mxu0 %v92
    %v6261 = vpop.f32.mrf.mxu0
    %v6262 = vadd.f32 %v6249, %v6261
    %v6263 = vpop.f32.mrf.mxu0
    %6264 = vdwg.mxu0
    %6265 = vmatpush.bf16.msra.mxu0 %v3941
    %6266 = vmatpush.bf16.msra.mxu0 %v3933
    %6267 = vmatpush.bf16.msra.mxu0 %v3925
    %6268 = vmatpush.bf16.msra.mxu0 %v3917
    %6269 = vmatpush.bf16.msra.mxu0 %v3909
    %6270 = vmatpush.bf16.msra.mxu0 %v3901
    %6271 = vmatpush.bf16.msra.mxu0 %v3893
    %6272 = vmatpush.bf16.msra.mxu0 %v3885
    %6273 = vmatmul.bf16.gmra.mxu0 %v93
    %v6274 = vpop.f32.mrf.mxu0
    %v6275 = vadd.f32 %v6262, %v6274
    %v6276 = vpop.f32.mrf.mxu0
    %6277 = vdwg.mxu0
    %6278 = vmatpush.bf16.msra.mxu0 %v4005
    %6279 = vmatpush.bf16.msra.mxu0 %v3997
    %6280 = vmatpush.bf16.msra.mxu0 %v3989
    %6281 = vmatpush.bf16.msra.mxu0 %v3981
    %6282 = vmatpush.bf16.msra.mxu0 %v3973
    %6283 = vmatpush.bf16.msra.mxu0 %v3965
    %6284 = vmatpush.bf16.msra.mxu0 %v3957
    %6285 = vmatpush.bf16.msra.mxu0 %v3949
    %6286 = vmatmul.bf16.gmra.mxu0 %v94
    %v6287 = vpop.f32.mrf.mxu0
    %v6288 = vadd.f32 %v6275, %v6287
    %v6289 = vpop.f32.mrf.mxu0
    %6290 = vdwg.mxu0
    %6291 = vmatpush.bf16.msra.mxu0 %v4069
    %6292 = vmatpush.bf16.msra.mxu0 %v4061
    %6293 = vmatpush.bf16.msra.mxu0 %v4053
    %6294 = vmatpush.bf16.msra.mxu0 %v4045
    %6295 = vmatpush.bf16.msra.mxu0 %v4037
    %6296 = vmatpush.bf16.msra.mxu0 %v4029
    %6297 = vmatpush.bf16.msra.mxu0 %v4021
    %6298 = vmatpush.bf16.msra.mxu0 %v4013
    %6299 = vmatmul.bf16.gmra.mxu0 %v95
    %v6300 = vpop.f32.mrf.mxu0
    %v6301 = vadd.f32 %v6288, %v6300
    %v6302 = vpop.f32.mrf.mxu0
    %6303 = vdwg.mxu0
    %6304 = vmatpush.bf16.msra.mxu0 %v4133
    %6305 = vmatpush.bf16.msra.mxu0 %v4125
    %6306 = vmatpush.bf16.msra.mxu0 %v4117
    %6307 = vmatpush.bf16.msra.mxu0 %v4109
    %6308 = vmatpush.bf16.msra.mxu0 %v4101
    %6309 = vmatpush.bf16.msra.mxu0 %v4093
    %6310 = vmatpush.bf16.msra.mxu0 %v4085
    %6311 = vmatpush.bf16.msra.mxu0 %v4077
    %6312 = vmatmul.bf16.gmra.mxu0 %v96
    %v6313 = vpop.f32.mrf.mxu0
    %v6314 = vadd.f32 %v6301, %v6313
    %v6315 = vpop.f32.mrf.mxu0
    %6316 = vdwg.mxu0
    %6317 = vmatpush.bf16.msra.mxu0 %v4197
    %6318 = vmatpush.bf16.msra.mxu0 %v4189
    %6319 = vmatpush.bf16.msra.mxu0 %v4181
    %6320 = vmatpush.bf16.msra.mxu0 %v4173
    %6321 = vmatpush.bf16.msra.mxu0 %v4165
    %6322 = vmatpush.bf16.msra.mxu0 %v4157
    %6323 = vmatpush.bf16.msra.mxu0 %v4149
    %6324 = vmatpush.bf16.msra.mxu0 %v4141
    %6325 = vmatmul.bf16.gmra.mxu0 %v97
    %v6326 = vpop.f32.mrf.mxu0
    %v6327 = vadd.f32 %v6314, %v6326
    %v6328 = vpop.f32.mrf.mxu0
    %6329 = vdwg.mxu0
    %6330 = vmatpush.bf16.msra.mxu0 %v4261
    %6331 = vmatpush.bf16.msra.mxu0 %v4253
    %6332 = vmatpush.bf16.msra.mxu0 %v4245
    %6333 = vmatpush.bf16.msra.mxu0 %v4237
    %6334 = vmatpush.bf16.msra.mxu0 %v4229
    %6335 = vmatpush.bf16.msra.mxu0 %v4221
    %6336 = vmatpush.bf16.msra.mxu0 %v4213
    %6337 = vmatpush.bf16.msra.mxu0 %v4205
    %6338 = vmatmul.bf16.gmra.mxu0 %v98
    %v6339 = vpop.f32.mrf.mxu0
    %v6340 = vadd.f32 %v6327, %v6339
    %v6341 = vpop.f32.mrf.mxu0
    %6342 = vdwg.mxu0
    %6343 = vmatpush.bf16.msra.mxu0 %v4325
    %6344 = vmatpush.bf16.msra.mxu0 %v4317
    %6345 = vmatpush.bf16.msra.mxu0 %v4309
    %6346 = vmatpush.bf16.msra.mxu0 %v4301
    %6347 = vmatpush.bf16.msra.mxu0 %v4293
    %6348 = vmatpush.bf16.msra.mxu0 %v4285
    %6349 = vmatpush.bf16.msra.mxu0 %v4277
    %6350 = vmatpush.bf16.msra.mxu0 %v4269
    %6351 = vmatmul.bf16.gmra.mxu0 %v99
    %v6352 = vpop.f32.mrf.mxu0
    %v6353 = vadd.f32 %v6340, %v6352
    %v6354 = vpop.f32.mrf.mxu0
    %6355 = vdwg.mxu0
    %6356 = vmatpush.bf16.msra.mxu0 %v4389
    %6357 = vmatpush.bf16.msra.mxu0 %v4381
    %6358 = vmatpush.bf16.msra.mxu0 %v4373
    %6359 = vmatpush.bf16.msra.mxu0 %v4365
    %6360 = vmatpush.bf16.msra.mxu0 %v4357
    %6361 = vmatpush.bf16.msra.mxu0 %v4349
    %6362 = vmatpush.bf16.msra.mxu0 %v4341
    %6363 = vmatpush.bf16.msra.mxu0 %v4333
    %6364 = vmatmul.bf16.gmra.mxu0 %v100
    %v6365 = vpop.f32.mrf.mxu0
    %v6366 = vadd.f32 %v6353, %v6365
    %v6367 = vpop.f32.mrf.mxu0
    %6368 = vdwg.mxu0
    %6369 = vmatpush.bf16.msra.mxu0 %v4453
    %6370 = vmatpush.bf16.msra.mxu0 %v4445
    %6371 = vmatpush.bf16.msra.mxu0 %v4437
    %6372 = vmatpush.bf16.msra.mxu0 %v4429
    %6373 = vmatpush.bf16.msra.mxu0 %v4421
    %6374 = vmatpush.bf16.msra.mxu0 %v4413
    %6375 = vmatpush.bf16.msra.mxu0 %v4405
    %6376 = vmatpush.bf16.msra.mxu0 %v4397
    %6377 = vmatmul.bf16.gmra.mxu0 %v101
    %v6378 = vpop.f32.mrf.mxu0
    %v6379 = vadd.f32 %v6366, %v6378
    %v6380 = vpop.f32.mrf.mxu0
    %6381 = vdwg.mxu0
    %6382 = vmatpush.bf16.msra.mxu0 %v4517
    %6383 = vmatpush.bf16.msra.mxu0 %v4509
    %6384 = vmatpush.bf16.msra.mxu0 %v4501
    %6385 = vmatpush.bf16.msra.mxu0 %v4493
    %6386 = vmatpush.bf16.msra.mxu0 %v4485
    %6387 = vmatpush.bf16.msra.mxu0 %v4477
    %6388 = vmatpush.bf16.msra.mxu0 %v4469
    %6389 = vmatpush.bf16.msra.mxu0 %v4461
    %6390 = vmatmul.bf16.gmra.mxu0 %v102
    %v6391 = vpop.f32.mrf.mxu0
    %v6392 = vadd.f32 %v6379, %v6391
    %v6393 = vpop.f32.mrf.mxu0
    %6394 = vdwg.mxu0
    %6395 = vmatpush.bf16.msra.mxu0 %v4581
    %6396 = vmatpush.bf16.msra.mxu0 %v4573
    %6397 = vmatpush.bf16.msra.mxu0 %v4565
    %6398 = vmatpush.bf16.msra.mxu0 %v4557
    %6399 = vmatpush.bf16.msra.mxu0 %v4549
    %6400 = vmatpush.bf16.msra.mxu0 %v4541
    %6401 = vmatpush.bf16.msra.mxu0 %v4533
    %6402 = vmatpush.bf16.msra.mxu0 %v4525
    %6403 = vmatmul.bf16.gmra.mxu0 %v103
    %v6404 = vpop.f32.mrf.mxu0
    %v6405 = vadd.f32 %v6392, %v6404
    %v6406 = vpop.f32.mrf.mxu0
    %6407 = vdwg.mxu0
    %6408 = vmatpush.bf16.msra.mxu0 %v3750
    %6409 = vmatpush.bf16.msra.mxu0 %v3742
    %6410 = vmatpush.bf16.msra.mxu0 %v3734
    %6411 = vmatpush.bf16.msra.mxu0 %v3726
    %6412 = vmatpush.bf16.msra.mxu0 %v3718
    %6413 = vmatpush.bf16.msra.mxu0 %v3710
    %6414 = vmatpush.bf16.msra.mxu0 %v3702
    %6415 = vmatpush.bf16.msra.mxu0 %v3694
    %6416 = vmatmul.bf16.gmra.mxu0 %v90
    %v6417 = vpop.f32.mrf.mxu0
    %v6418 = vadd.f32 %v5487, %v6417
    %v6419 = vpop.f32.mrf.mxu0
    %6420 = vdwg.mxu0
    %6421 = vmatpush.bf16.msra.mxu0 %v3814
    %6422 = vmatpush.bf16.msra.mxu0 %v3806
    %6423 = vmatpush.bf16.msra.mxu0 %v3798
    %6424 = vmatpush.bf16.msra.mxu0 %v3790
    %6425 = vmatpush.bf16.msra.mxu0 %v3782
    %6426 = vmatpush.bf16.msra.mxu0 %v3774
    %6427 = vmatpush.bf16.msra.mxu0 %v3766
    %6428 = vmatpush.bf16.msra.mxu0 %v3758
    %6429 = vmatmul.bf16.gmra.mxu0 %v91
    %v6430 = vpop.f32.mrf.mxu0
    %v6431 = vadd.f32 %v6418, %v6430
    %v6432 = vpop.f32.mrf.mxu0
    %6433 = vdwg.mxu0
    %6434 = vmatpush.bf16.msra.mxu0 %v3878
    %6435 = vmatpush.bf16.msra.mxu0 %v3870
    %6436 = vmatpush.bf16.msra.mxu0 %v3862
    %6437 = vmatpush.bf16.msra.mxu0 %v3854
    %6438 = vmatpush.bf16.msra.mxu0 %v3846
    %6439 = vmatpush.bf16.msra.mxu0 %v3838
    %6440 = vmatpush.bf16.msra.mxu0 %v3830
    %6441 = vmatpush.bf16.msra.mxu0 %v3822
    %6442 = vmatmul.bf16.gmra.mxu0 %v92
    %v6443 = vpop.f32.mrf.mxu0
    %v6444 = vadd.f32 %v6431, %v6443
    %v6445 = vpop.f32.mrf.mxu0
    %6446 = vdwg.mxu0
    %6447 = vmatpush.bf16.msra.mxu0 %v3942
    %6448 = vmatpush.bf16.msra.mxu0 %v3934
    %6449 = vmatpush.bf16.msra.mxu0 %v3926
    %6450 = vmatpush.bf16.msra.mxu0 %v3918
    %6451 = vmatpush.bf16.msra.mxu0 %v3910
    %6452 = vmatpush.bf16.msra.mxu0 %v3902
    %6453 = vmatpush.bf16.msra.mxu0 %v3894
    %6454 = vmatpush.bf16.msra.mxu0 %v3886
    %6455 = vmatmul.bf16.gmra.mxu0 %v93
    %v6456 = vpop.f32.mrf.mxu0
    %v6457 = vadd.f32 %v6444, %v6456
    %v6458 = vpop.f32.mrf.mxu0
    %6459 = vdwg.mxu0
    %6460 = vmatpush.bf16.msra.mxu0 %v4006
    %6461 = vmatpush.bf16.msra.mxu0 %v3998
    %6462 = vmatpush.bf16.msra.mxu0 %v3990
    %6463 = vmatpush.bf16.msra.mxu0 %v3982
    %6464 = vmatpush.bf16.msra.mxu0 %v3974
    %6465 = vmatpush.bf16.msra.mxu0 %v3966
    %6466 = vmatpush.bf16.msra.mxu0 %v3958
    %6467 = vmatpush.bf16.msra.mxu0 %v3950
    %6468 = vmatmul.bf16.gmra.mxu0 %v94
    %v6469 = vpop.f32.mrf.mxu0
    %v6470 = vadd.f32 %v6457, %v6469
    %v6471 = vpop.f32.mrf.mxu0
    %6472 = vdwg.mxu0
    %6473 = vmatpush.bf16.msra.mxu0 %v4070
    %6474 = vmatpush.bf16.msra.mxu0 %v4062
    %6475 = vmatpush.bf16.msra.mxu0 %v4054
    %6476 = vmatpush.bf16.msra.mxu0 %v4046
    %6477 = vmatpush.bf16.msra.mxu0 %v4038
    %6478 = vmatpush.bf16.msra.mxu0 %v4030
    %6479 = vmatpush.bf16.msra.mxu0 %v4022
    %6480 = vmatpush.bf16.msra.mxu0 %v4014
    %6481 = vmatmul.bf16.gmra.mxu0 %v95
    %v6482 = vpop.f32.mrf.mxu0
    %v6483 = vadd.f32 %v6470, %v6482
    %v6484 = vpop.f32.mrf.mxu0
    %6485 = vdwg.mxu0
    %6486 = vmatpush.bf16.msra.mxu0 %v4134
    %6487 = vmatpush.bf16.msra.mxu0 %v4126
    %6488 = vmatpush.bf16.msra.mxu0 %v4118
    %6489 = vmatpush.bf16.msra.mxu0 %v4110
    %6490 = vmatpush.bf16.msra.mxu0 %v4102
    %6491 = vmatpush.bf16.msra.mxu0 %v4094
    %6492 = vmatpush.bf16.msra.mxu0 %v4086
    %6493 = vmatpush.bf16.msra.mxu0 %v4078
    %6494 = vmatmul.bf16.gmra.mxu0 %v96
    %v6495 = vpop.f32.mrf.mxu0
    %v6496 = vadd.f32 %v6483, %v6495
    %v6497 = vpop.f32.mrf.mxu0
    %6498 = vdwg.mxu0
    %6499 = vmatpush.bf16.msra.mxu0 %v4198
    %6500 = vmatpush.bf16.msra.mxu0 %v4190
    %6501 = vmatpush.bf16.msra.mxu0 %v4182
    %6502 = vmatpush.bf16.msra.mxu0 %v4174
    %6503 = vmatpush.bf16.msra.mxu0 %v4166
    %6504 = vmatpush.bf16.msra.mxu0 %v4158
    %6505 = vmatpush.bf16.msra.mxu0 %v4150
    %6506 = vmatpush.bf16.msra.mxu0 %v4142
    %6507 = vmatmul.bf16.gmra.mxu0 %v97
    %v6508 = vpop.f32.mrf.mxu0
    %v6509 = vadd.f32 %v6496, %v6508
    %v6510 = vpop.f32.mrf.mxu0
    %6511 = vdwg.mxu0
    %6512 = vmatpush.bf16.msra.mxu0 %v4262
    %6513 = vmatpush.bf16.msra.mxu0 %v4254
    %6514 = vmatpush.bf16.msra.mxu0 %v4246
    %6515 = vmatpush.bf16.msra.mxu0 %v4238
    %6516 = vmatpush.bf16.msra.mxu0 %v4230
    %6517 = vmatpush.bf16.msra.mxu0 %v4222
    %6518 = vmatpush.bf16.msra.mxu0 %v4214
    %6519 = vmatpush.bf16.msra.mxu0 %v4206
    %6520 = vmatmul.bf16.gmra.mxu0 %v98
    %v6521 = vpop.f32.mrf.mxu0
    %v6522 = vadd.f32 %v6509, %v6521
    %v6523 = vpop.f32.mrf.mxu0
    %6524 = vdwg.mxu0
    %6525 = vmatpush.bf16.msra.mxu0 %v4326
    %6526 = vmatpush.bf16.msra.mxu0 %v4318
    %6527 = vmatpush.bf16.msra.mxu0 %v4310
    %6528 = vmatpush.bf16.msra.mxu0 %v4302
    %6529 = vmatpush.bf16.msra.mxu0 %v4294
    %6530 = vmatpush.bf16.msra.mxu0 %v4286
    %6531 = vmatpush.bf16.msra.mxu0 %v4278
    %6532 = vmatpush.bf16.msra.mxu0 %v4270
    %6533 = vmatmul.bf16.gmra.mxu0 %v99
    %v6534 = vpop.f32.mrf.mxu0
    %v6535 = vadd.f32 %v6522, %v6534
    %v6536 = vpop.f32.mrf.mxu0
    %6537 = vdwg.mxu0
    %6538 = vmatpush.bf16.msra.mxu0 %v4390
    %6539 = vmatpush.bf16.msra.mxu0 %v4382
    %6540 = vmatpush.bf16.msra.mxu0 %v4374
    %6541 = vmatpush.bf16.msra.mxu0 %v4366
    %6542 = vmatpush.bf16.msra.mxu0 %v4358
    %6543 = vmatpush.bf16.msra.mxu0 %v4350
    %6544 = vmatpush.bf16.msra.mxu0 %v4342
    %6545 = vmatpush.bf16.msra.mxu0 %v4334
    %6546 = vmatmul.bf16.gmra.mxu0 %v100
    %v6547 = vpop.f32.mrf.mxu0
    %v6548 = vadd.f32 %v6535, %v6547
    %v6549 = vpop.f32.mrf.mxu0
    %6550 = vdwg.mxu0
    %6551 = vmatpush.bf16.msra.mxu0 %v4454
    %6552 = vmatpush.bf16.msra.mxu0 %v4446
    %6553 = vmatpush.bf16.msra.mxu0 %v4438
    %6554 = vmatpush.bf16.msra.mxu0 %v4430
    %6555 = vmatpush.bf16.msra.mxu0 %v4422
    %6556 = vmatpush.bf16.msra.mxu0 %v4414
    %6557 = vmatpush.bf16.msra.mxu0 %v4406
    %6558 = vmatpush.bf16.msra.mxu0 %v4398
    %6559 = vmatmul.bf16.gmra.mxu0 %v101
    %v6560 = vpop.f32.mrf.mxu0
    %v6561 = vadd.f32 %v6548, %v6560
    %v6562 = vpop.f32.mrf.mxu0
    %6563 = vdwg.mxu0
    %6564 = vmatpush.bf16.msra.mxu0 %v4518
    %6565 = vmatpush.bf16.msra.mxu0 %v4510
    %6566 = vmatpush.bf16.msra.mxu0 %v4502
    %6567 = vmatpush.bf16.msra.mxu0 %v4494
    %6568 = vmatpush.bf16.msra.mxu0 %v4486
    %6569 = vmatpush.bf16.msra.mxu0 %v4478
    %6570 = vmatpush.bf16.msra.mxu0 %v4470
    %6571 = vmatpush.bf16.msra.mxu0 %v4462
    %6572 = vmatmul.bf16.gmra.mxu0 %v102
    %v6573 = vpop.f32.mrf.mxu0
    %v6574 = vadd.f32 %v6561, %v6573
    %v6575 = vpop.f32.mrf.mxu0
    %6576 = vdwg.mxu0
    %6577 = vmatpush.bf16.msra.mxu0 %v4582
    %6578 = vmatpush.bf16.msra.mxu0 %v4574
    %6579 = vmatpush.bf16.msra.mxu0 %v4566
    %6580 = vmatpush.bf16.msra.mxu0 %v4558
    %6581 = vmatpush.bf16.msra.mxu0 %v4550
    %6582 = vmatpush.bf16.msra.mxu0 %v4542
    %6583 = vmatpush.bf16.msra.mxu0 %v4534
    %6584 = vmatpush.bf16.msra.mxu0 %v4526
    %6585 = vmatmul.bf16.gmra.mxu0 %v103
    %v6586 = vpop.f32.mrf.mxu0
    %v6587 = vadd.f32 %v6574, %v6586
    %v6588 = vpop.f32.mrf.mxu0
    %6589 = vdwg.mxu0
    %6590 = vmatpush.bf16.msra.mxu0 %v3751
    %6591 = vmatpush.bf16.msra.mxu0 %v3743
    %6592 = vmatpush.bf16.msra.mxu0 %v3735
    %6593 = vmatpush.bf16.msra.mxu0 %v3727
    %6594 = vmatpush.bf16.msra.mxu0 %v3719
    %6595 = vmatpush.bf16.msra.mxu0 %v3711
    %6596 = vmatpush.bf16.msra.mxu0 %v3703
    %6597 = vmatpush.bf16.msra.mxu0 %v3695
    %6598 = vmatmul.bf16.gmra.mxu0 %v90
    %v6599 = vpop.f32.mrf.mxu0
    %v6600 = vadd.f32 %v5488, %v6599
    %v6601 = vpop.f32.mrf.mxu0
    %6602 = vdwg.mxu0
    %6603 = vmatpush.bf16.msra.mxu0 %v3815
    %6604 = vmatpush.bf16.msra.mxu0 %v3807
    %6605 = vmatpush.bf16.msra.mxu0 %v3799
    %6606 = vmatpush.bf16.msra.mxu0 %v3791
    %6607 = vmatpush.bf16.msra.mxu0 %v3783
    %6608 = vmatpush.bf16.msra.mxu0 %v3775
    %6609 = vmatpush.bf16.msra.mxu0 %v3767
    %6610 = vmatpush.bf16.msra.mxu0 %v3759
    %6611 = vmatmul.bf16.gmra.mxu0 %v91
    %v6612 = vpop.f32.mrf.mxu0
    %v6613 = vadd.f32 %v6600, %v6612
    %v6614 = vpop.f32.mrf.mxu0
    %6615 = vdwg.mxu0
    %6616 = vmatpush.bf16.msra.mxu0 %v3879
    %6617 = vmatpush.bf16.msra.mxu0 %v3871
    %6618 = vmatpush.bf16.msra.mxu0 %v3863
    %6619 = vmatpush.bf16.msra.mxu0 %v3855
    %6620 = vmatpush.bf16.msra.mxu0 %v3847
    %6621 = vmatpush.bf16.msra.mxu0 %v3839
    %6622 = vmatpush.bf16.msra.mxu0 %v3831
    %6623 = vmatpush.bf16.msra.mxu0 %v3823
    %6624 = vmatmul.bf16.gmra.mxu0 %v92
    %v6625 = vpop.f32.mrf.mxu0
    %v6626 = vadd.f32 %v6613, %v6625
    %v6627 = vpop.f32.mrf.mxu0
    %6628 = vdwg.mxu0
    %6629 = vmatpush.bf16.msra.mxu0 %v3943
    %6630 = vmatpush.bf16.msra.mxu0 %v3935
    %6631 = vmatpush.bf16.msra.mxu0 %v3927
    %6632 = vmatpush.bf16.msra.mxu0 %v3919
    %6633 = vmatpush.bf16.msra.mxu0 %v3911
    %6634 = vmatpush.bf16.msra.mxu0 %v3903
    %6635 = vmatpush.bf16.msra.mxu0 %v3895
    %6636 = vmatpush.bf16.msra.mxu0 %v3887
    %6637 = vmatmul.bf16.gmra.mxu0 %v93
    %v6638 = vpop.f32.mrf.mxu0
    %v6639 = vadd.f32 %v6626, %v6638
    %v6640 = vpop.f32.mrf.mxu0
    %6641 = vdwg.mxu0
    %6642 = vmatpush.bf16.msra.mxu0 %v4007
    %6643 = vmatpush.bf16.msra.mxu0 %v3999
    %6644 = vmatpush.bf16.msra.mxu0 %v3991
    %6645 = vmatpush.bf16.msra.mxu0 %v3983
    %6646 = vmatpush.bf16.msra.mxu0 %v3975
    %6647 = vmatpush.bf16.msra.mxu0 %v3967
    %6648 = vmatpush.bf16.msra.mxu0 %v3959
    %6649 = vmatpush.bf16.msra.mxu0 %v3951
    %6650 = vmatmul.bf16.gmra.mxu0 %v94
    %v6651 = vpop.f32.mrf.mxu0
    %v6652 = vadd.f32 %v6639, %v6651
    %v6653 = vpop.f32.mrf.mxu0
    %6654 = vdwg.mxu0
    %6655 = vmatpush.bf16.msra.mxu0 %v4071
    %6656 = vmatpush.bf16.msra.mxu0 %v4063
    %6657 = vmatpush.bf16.msra.mxu0 %v4055
    %6658 = vmatpush.bf16.msra.mxu0 %v4047
    %6659 = vmatpush.bf16.msra.mxu0 %v4039
    %6660 = vmatpush.bf16.msra.mxu0 %v4031
    %6661 = vmatpush.bf16.msra.mxu0 %v4023
    %6662 = vmatpush.bf16.msra.mxu0 %v4015
    %6663 = vmatmul.bf16.gmra.mxu0 %v95
    %v6664 = vpop.f32.mrf.mxu0
    %v6665 = vadd.f32 %v6652, %v6664
    %v6666 = vpop.f32.mrf.mxu0
    %6667 = vdwg.mxu0
    %6668 = vmatpush.bf16.msra.mxu0 %v4135
    %6669 = vmatpush.bf16.msra.mxu0 %v4127
    %6670 = vmatpush.bf16.msra.mxu0 %v4119
    %6671 = vmatpush.bf16.msra.mxu0 %v4111
    %6672 = vmatpush.bf16.msra.mxu0 %v4103
    %6673 = vmatpush.bf16.msra.mxu0 %v4095
    %6674 = vmatpush.bf16.msra.mxu0 %v4087
    %6675 = vmatpush.bf16.msra.mxu0 %v4079
    %6676 = vmatmul.bf16.gmra.mxu0 %v96
    %v6677 = vpop.f32.mrf.mxu0
    %v6678 = vadd.f32 %v6665, %v6677
    %v6679 = vpop.f32.mrf.mxu0
    %6680 = vdwg.mxu0
    %6681 = vmatpush.bf16.msra.mxu0 %v4199
    %6682 = vmatpush.bf16.msra.mxu0 %v4191
    %6683 = vmatpush.bf16.msra.mxu0 %v4183
    %6684 = vmatpush.bf16.msra.mxu0 %v4175
    %6685 = vmatpush.bf16.msra.mxu0 %v4167
    %6686 = vmatpush.bf16.msra.mxu0 %v4159
    %6687 = vmatpush.bf16.msra.mxu0 %v4151
    %6688 = vmatpush.bf16.msra.mxu0 %v4143
    %6689 = vmatmul.bf16.gmra.mxu0 %v97
    %v6690 = vpop.f32.mrf.mxu0
    %v6691 = vadd.f32 %v6678, %v6690
    %v6692 = vpop.f32.mrf.mxu0
    %6693 = vdwg.mxu0
    %6694 = vmatpush.bf16.msra.mxu0 %v4263
    %6695 = vmatpush.bf16.msra.mxu0 %v4255
    %6696 = vmatpush.bf16.msra.mxu0 %v4247
    %6697 = vmatpush.bf16.msra.mxu0 %v4239
    %6698 = vmatpush.bf16.msra.mxu0 %v4231
    %6699 = vmatpush.bf16.msra.mxu0 %v4223
    %6700 = vmatpush.bf16.msra.mxu0 %v4215
    %6701 = vmatpush.bf16.msra.mxu0 %v4207
    %6702 = vmatmul.bf16.gmra.mxu0 %v98
    %v6703 = vpop.f32.mrf.mxu0
    %v6704 = vadd.f32 %v6691, %v6703
    %v6705 = vpop.f32.mrf.mxu0
    %6706 = vdwg.mxu0
    %6707 = vmatpush.bf16.msra.mxu0 %v4327
    %6708 = vmatpush.bf16.msra.mxu0 %v4319
    %6709 = vmatpush.bf16.msra.mxu0 %v4311
    %6710 = vmatpush.bf16.msra.mxu0 %v4303
    %6711 = vmatpush.bf16.msra.mxu0 %v4295
    %6712 = vmatpush.bf16.msra.mxu0 %v4287
    %6713 = vmatpush.bf16.msra.mxu0 %v4279
    %6714 = vmatpush.bf16.msra.mxu0 %v4271
    %6715 = vmatmul.bf16.gmra.mxu0 %v99
    %v6716 = vpop.f32.mrf.mxu0
    %v6717 = vadd.f32 %v6704, %v6716
    %v6718 = vpop.f32.mrf.mxu0
    %6719 = vdwg.mxu0
    %6720 = vmatpush.bf16.msra.mxu0 %v4391
    %6721 = vmatpush.bf16.msra.mxu0 %v4383
    %6722 = vmatpush.bf16.msra.mxu0 %v4375
    %6723 = vmatpush.bf16.msra.mxu0 %v4367
    %6724 = vmatpush.bf16.msra.mxu0 %v4359
    %6725 = vmatpush.bf16.msra.mxu0 %v4351
    %6726 = vmatpush.bf16.msra.mxu0 %v4343
    %6727 = vmatpush.bf16.msra.mxu0 %v4335
    %6728 = vmatmul.bf16.gmra.mxu0 %v100
    %v6729 = vpop.f32.mrf.mxu0
    %v6730 = vadd.f32 %v6717, %v6729
    %v6731 = vpop.f32.mrf.mxu0
    %6732 = vdwg.mxu0
    %6733 = vmatpush.bf16.msra.mxu0 %v4455
    %6734 = vmatpush.bf16.msra.mxu0 %v4447
    %6735 = vmatpush.bf16.msra.mxu0 %v4439
    %6736 = vmatpush.bf16.msra.mxu0 %v4431
    %6737 = vmatpush.bf16.msra.mxu0 %v4423
    %6738 = vmatpush.bf16.msra.mxu0 %v4415
    %6739 = vmatpush.bf16.msra.mxu0 %v4407
    %6740 = vmatpush.bf16.msra.mxu0 %v4399
    %6741 = vmatmul.bf16.gmra.mxu0 %v101
    %v6742 = vpop.f32.mrf.mxu0
    %v6743 = vadd.f32 %v6730, %v6742
    %v6744 = vpop.f32.mrf.mxu0
    %6745 = vdwg.mxu0
    %6746 = vmatpush.bf16.msra.mxu0 %v4519
    %6747 = vmatpush.bf16.msra.mxu0 %v4511
    %6748 = vmatpush.bf16.msra.mxu0 %v4503
    %6749 = vmatpush.bf16.msra.mxu0 %v4495
    %6750 = vmatpush.bf16.msra.mxu0 %v4487
    %6751 = vmatpush.bf16.msra.mxu0 %v4479
    %6752 = vmatpush.bf16.msra.mxu0 %v4471
    %6753 = vmatpush.bf16.msra.mxu0 %v4463
    %6754 = vmatmul.bf16.gmra.mxu0 %v102
    %v6755 = vpop.f32.mrf.mxu0
    %v6756 = vadd.f32 %v6743, %v6755
    %v6757 = vpop.f32.mrf.mxu0
    %6758 = vdwg.mxu0
    %6759 = vmatpush.bf16.msra.mxu0 %v4583
    %6760 = vmatpush.bf16.msra.mxu0 %v4575
    %6761 = vmatpush.bf16.msra.mxu0 %v4567
    %6762 = vmatpush.bf16.msra.mxu0 %v4559
    %6763 = vmatpush.bf16.msra.mxu0 %v4551
    %6764 = vmatpush.bf16.msra.mxu0 %v4543
    %6765 = vmatpush.bf16.msra.mxu0 %v4535
    %6766 = vmatpush.bf16.msra.mxu0 %v4527
    %6767 = vmatmul.bf16.gmra.mxu0 %v103
    %v6768 = vpop.f32.mrf.mxu0
    %v6769 = vadd.f32 %v6756, %v6768
    %v6770 = vpop.f32.mrf.mxu0
    %6771 = vdwg.mxu0
    %6772 = vmatpush.bf16.msra.mxu0 %v3752
    %6773 = vmatpush.bf16.msra.mxu0 %v3744
    %6774 = vmatpush.bf16.msra.mxu0 %v3736
    %6775 = vmatpush.bf16.msra.mxu0 %v3728
    %6776 = vmatpush.bf16.msra.mxu0 %v3720
    %6777 = vmatpush.bf16.msra.mxu0 %v3712
    %6778 = vmatpush.bf16.msra.mxu0 %v3704
    %6779 = vmatpush.bf16.msra.mxu0 %v3696
    %6780 = vmatmul.bf16.gmra.mxu0 %v90
    %v6781 = vpop.f32.mrf.mxu0
    %v6782 = vadd.f32 %v5489, %v6781
    %v6783 = vpop.f32.mrf.mxu0
    %6784 = vdwg.mxu0
    %6785 = vmatpush.bf16.msra.mxu0 %v3816
    %6786 = vmatpush.bf16.msra.mxu0 %v3808
    %6787 = vmatpush.bf16.msra.mxu0 %v3800
    %6788 = vmatpush.bf16.msra.mxu0 %v3792
    %6789 = vmatpush.bf16.msra.mxu0 %v3784
    %6790 = vmatpush.bf16.msra.mxu0 %v3776
    %6791 = vmatpush.bf16.msra.mxu0 %v3768
    %6792 = vmatpush.bf16.msra.mxu0 %v3760
    %6793 = vmatmul.bf16.gmra.mxu0 %v91
    %v6794 = vpop.f32.mrf.mxu0
    %v6795 = vadd.f32 %v6782, %v6794
    %v6796 = vpop.f32.mrf.mxu0
    %6797 = vdwg.mxu0
    %6798 = vmatpush.bf16.msra.mxu0 %v3880
    %6799 = vmatpush.bf16.msra.mxu0 %v3872
    %6800 = vmatpush.bf16.msra.mxu0 %v3864
    %6801 = vmatpush.bf16.msra.mxu0 %v3856
    %6802 = vmatpush.bf16.msra.mxu0 %v3848
    %6803 = vmatpush.bf16.msra.mxu0 %v3840
    %6804 = vmatpush.bf16.msra.mxu0 %v3832
    %6805 = vmatpush.bf16.msra.mxu0 %v3824
    %6806 = vmatmul.bf16.gmra.mxu0 %v92
    %v6807 = vpop.f32.mrf.mxu0
    %v6808 = vadd.f32 %v6795, %v6807
    %v6809 = vpop.f32.mrf.mxu0
    %6810 = vdwg.mxu0
    %6811 = vmatpush.bf16.msra.mxu0 %v3944
    %6812 = vmatpush.bf16.msra.mxu0 %v3936
    %6813 = vmatpush.bf16.msra.mxu0 %v3928
    %6814 = vmatpush.bf16.msra.mxu0 %v3920
    %6815 = vmatpush.bf16.msra.mxu0 %v3912
    %6816 = vmatpush.bf16.msra.mxu0 %v3904
    %6817 = vmatpush.bf16.msra.mxu0 %v3896
    %6818 = vmatpush.bf16.msra.mxu0 %v3888
    %6819 = vmatmul.bf16.gmra.mxu0 %v93
    %v6820 = vpop.f32.mrf.mxu0
    %v6821 = vadd.f32 %v6808, %v6820
    %v6822 = vpop.f32.mrf.mxu0
    %6823 = vdwg.mxu0
    %6824 = vmatpush.bf16.msra.mxu0 %v4008
    %6825 = vmatpush.bf16.msra.mxu0 %v4000
    %6826 = vmatpush.bf16.msra.mxu0 %v3992
    %6827 = vmatpush.bf16.msra.mxu0 %v3984
    %6828 = vmatpush.bf16.msra.mxu0 %v3976
    %6829 = vmatpush.bf16.msra.mxu0 %v3968
    %6830 = vmatpush.bf16.msra.mxu0 %v3960
    %6831 = vmatpush.bf16.msra.mxu0 %v3952
    %6832 = vmatmul.bf16.gmra.mxu0 %v94
    %v6833 = vpop.f32.mrf.mxu0
    %v6834 = vadd.f32 %v6821, %v6833
    %v6835 = vpop.f32.mrf.mxu0
    %6836 = vdwg.mxu0
    %6837 = vmatpush.bf16.msra.mxu0 %v4072
    %6838 = vmatpush.bf16.msra.mxu0 %v4064
    %6839 = vmatpush.bf16.msra.mxu0 %v4056
    %6840 = vmatpush.bf16.msra.mxu0 %v4048
    %6841 = vmatpush.bf16.msra.mxu0 %v4040
    %6842 = vmatpush.bf16.msra.mxu0 %v4032
    %6843 = vmatpush.bf16.msra.mxu0 %v4024
    %6844 = vmatpush.bf16.msra.mxu0 %v4016
    %6845 = vmatmul.bf16.gmra.mxu0 %v95
    %v6846 = vpop.f32.mrf.mxu0
    %v6847 = vadd.f32 %v6834, %v6846
    %v6848 = vpop.f32.mrf.mxu0
    %6849 = vdwg.mxu0
    %6850 = vmatpush.bf16.msra.mxu0 %v4136
    %6851 = vmatpush.bf16.msra.mxu0 %v4128
    %6852 = vmatpush.bf16.msra.mxu0 %v4120
    %6853 = vmatpush.bf16.msra.mxu0 %v4112
    %6854 = vmatpush.bf16.msra.mxu0 %v4104
    %6855 = vmatpush.bf16.msra.mxu0 %v4096
    %6856 = vmatpush.bf16.msra.mxu0 %v4088
    %6857 = vmatpush.bf16.msra.mxu0 %v4080
    %6858 = vmatmul.bf16.gmra.mxu0 %v96
    %v6859 = vpop.f32.mrf.mxu0
    %v6860 = vadd.f32 %v6847, %v6859
    %v6861 = vpop.f32.mrf.mxu0
    %6862 = vdwg.mxu0
    %6863 = vmatpush.bf16.msra.mxu0 %v4200
    %6864 = vmatpush.bf16.msra.mxu0 %v4192
    %6865 = vmatpush.bf16.msra.mxu0 %v4184
    %6866 = vmatpush.bf16.msra.mxu0 %v4176
    %6867 = vmatpush.bf16.msra.mxu0 %v4168
    %6868 = vmatpush.bf16.msra.mxu0 %v4160
    %6869 = vmatpush.bf16.msra.mxu0 %v4152
    %6870 = vmatpush.bf16.msra.mxu0 %v4144
    %6871 = vmatmul.bf16.gmra.mxu0 %v97
    %v6872 = vpop.f32.mrf.mxu0
    %v6873 = vadd.f32 %v6860, %v6872
    %v6874 = vpop.f32.mrf.mxu0
    %6875 = vdwg.mxu0
    %6876 = vmatpush.bf16.msra.mxu0 %v4264
    %6877 = vmatpush.bf16.msra.mxu0 %v4256
    %6878 = vmatpush.bf16.msra.mxu0 %v4248
    %6879 = vmatpush.bf16.msra.mxu0 %v4240
    %6880 = vmatpush.bf16.msra.mxu0 %v4232
    %6881 = vmatpush.bf16.msra.mxu0 %v4224
    %6882 = vmatpush.bf16.msra.mxu0 %v4216
    %6883 = vmatpush.bf16.msra.mxu0 %v4208
    %6884 = vmatmul.bf16.gmra.mxu0 %v98
    %v6885 = vpop.f32.mrf.mxu0
    %v6886 = vadd.f32 %v6873, %v6885
    %v6887 = vpop.f32.mrf.mxu0
    %6888 = vdwg.mxu0
    %6889 = vmatpush.bf16.msra.mxu0 %v4328
    %6890 = vmatpush.bf16.msra.mxu0 %v4320
    %6891 = vmatpush.bf16.msra.mxu0 %v4312
    %6892 = vmatpush.bf16.msra.mxu0 %v4304
    %6893 = vmatpush.bf16.msra.mxu0 %v4296
    %6894 = vmatpush.bf16.msra.mxu0 %v4288
    %6895 = vmatpush.bf16.msra.mxu0 %v4280
    %6896 = vmatpush.bf16.msra.mxu0 %v4272
    %6897 = vmatmul.bf16.gmra.mxu0 %v99
    %v6898 = vpop.f32.mrf.mxu0
    %v6899 = vadd.f32 %v6886, %v6898
    %v6900 = vpop.f32.mrf.mxu0
    %6901 = vdwg.mxu0
    %6902 = vmatpush.bf16.msra.mxu0 %v4392
    %6903 = vmatpush.bf16.msra.mxu0 %v4384
    %6904 = vmatpush.bf16.msra.mxu0 %v4376
    %6905 = vmatpush.bf16.msra.mxu0 %v4368
    %6906 = vmatpush.bf16.msra.mxu0 %v4360
    %6907 = vmatpush.bf16.msra.mxu0 %v4352
    %6908 = vmatpush.bf16.msra.mxu0 %v4344
    %6909 = vmatpush.bf16.msra.mxu0 %v4336
    %6910 = vmatmul.bf16.gmra.mxu0 %v100
    %v6911 = vpop.f32.mrf.mxu0
    %v6912 = vadd.f32 %v6899, %v6911
    %v6913 = vpop.f32.mrf.mxu0
    %6914 = vdwg.mxu0
    %6915 = vmatpush.bf16.msra.mxu0 %v4456
    %6916 = vmatpush.bf16.msra.mxu0 %v4448
    %6917 = vmatpush.bf16.msra.mxu0 %v4440
    %6918 = vmatpush.bf16.msra.mxu0 %v4432
    %6919 = vmatpush.bf16.msra.mxu0 %v4424
    %6920 = vmatpush.bf16.msra.mxu0 %v4416
    %6921 = vmatpush.bf16.msra.mxu0 %v4408
    %6922 = vmatpush.bf16.msra.mxu0 %v4400
    %6923 = vmatmul.bf16.gmra.mxu0 %v101
    %v6924 = vpop.f32.mrf.mxu0
    %v6925 = vadd.f32 %v6912, %v6924
    %v6926 = vpop.f32.mrf.mxu0
    %6927 = vdwg.mxu0
    %6928 = vmatpush.bf16.msra.mxu0 %v4520
    %6929 = vmatpush.bf16.msra.mxu0 %v4512
    %6930 = vmatpush.bf16.msra.mxu0 %v4504
    %6931 = vmatpush.bf16.msra.mxu0 %v4496
    %6932 = vmatpush.bf16.msra.mxu0 %v4488
    %6933 = vmatpush.bf16.msra.mxu0 %v4480
    %6934 = vmatpush.bf16.msra.mxu0 %v4472
    %6935 = vmatpush.bf16.msra.mxu0 %v4464
    %6936 = vmatmul.bf16.gmra.mxu0 %v102
    %v6937 = vpop.f32.mrf.mxu0
    %v6938 = vadd.f32 %v6925, %v6937
    %v6939 = vpop.f32.mrf.mxu0
    %6940 = vdwg.mxu0
    %6941 = vmatpush.bf16.msra.mxu0 %v4584
    %6942 = vmatpush.bf16.msra.mxu0 %v4576
    %6943 = vmatpush.bf16.msra.mxu0 %v4568
    %6944 = vmatpush.bf16.msra.mxu0 %v4560
    %6945 = vmatpush.bf16.msra.mxu0 %v4552
    %6946 = vmatpush.bf16.msra.mxu0 %v4544
    %6947 = vmatpush.bf16.msra.mxu0 %v4536
    %6948 = vmatpush.bf16.msra.mxu0 %v4528
    %6949 = vmatmul.bf16.gmra.mxu0 %v103
    %v6950 = vpop.f32.mrf.mxu0
    %v6951 = vadd.f32 %v6938, %v6950
    %v6952 = vpop.f32.mrf.mxu0
    %6953 = vdwg.mxu0
    %v6962 = vrot.slane %v5859, 7
    %v6963 = vrot.slane %v6041, 6
    %v6964 = vrot.slane %v6223, 5
    %v6965 = vrot.slane %v6405, 4
    %v6966 = vrot.slane %v6587, 3
    %v6967 = vrot.slane %v6769, 2
    %v6968 = vrot.slane %v6951, 1
    %vm6969 = vcmask 1040384
    %v6970 = vsel %vm6969, %v5677, %v6962
    %vm6971 = vcmask 1042434
    %v6972 = vsel %vm6971, %v6963, %v6964
    %vm6973 = vcmask 1041408
    %v6974 = vsel %vm6973, %v6970, %v6972
    %vm6975 = vcmask 1044484
    %v6976 = vsel %vm6975, %v6965, %v6966
    %vm6977 = vcmask 1046534
    %v6978 = vsel %vm6977, %v6967, %v6968
    %vm6979 = vcmask 1045508
    %v6980 = vsel %vm6979, %v6976, %v6978
    %vm6981 = vcmask 1043456
    %v6982 = vsel %vm6981, %v6974, %v6980
    %6984 = vst [vmem:[#allocation8] sm:$0xff] %v6982
    // Predicated region
    $region26: #{_forward.1} parent=1 // pred_check
      _
    $region27: #{_forward.1} parent=1 // pred_check_branch
      %6986 = sbr.rel (0) target = $region29
    $region28: #{_forward.1} parent=1 // pred_region
      %6988 = vsyncadd [#allocation4], 0
      %s6990 = sshll.u32 [#allocation8], 4
      %s6991 = int_to_ptr.vmem [resolvable:$true] %s6990
      %s6992 = sshll.u32 %s3, 4
      %s6993 = int_to_ptr.hbm [resolvable:$true] %s6992
      %6995 = dma.vmem_to_hbm [thread:$0]  %s6991, 128, %s6993, [#allocation4]
    $region29: #{_forward.1} parent=1 // pred_fallthru
      _
    // Predicated region
    $region30: #{_forward.1} parent=1 // pred_check
      _
    $region31: #{_forward.1} parent=1 // pred_check_branch
      %6997 = sbr.rel (0) target = $region33
    $region32: #{_forward.1} parent=1 // pred_region
      %6999 = dma.done [#allocation4], 128
    $region33: #{_forward.1} parent=1 // pred_fallthru
      _
    %7000 = vsyncpa [#allocation3], 1
    %7001 = vsyncpa [#allocation6], 1
    %7002 = vsyncpa [#allocation4], 1

</llo_original>
